<compile_context>
chip_gen: v7x
topology: tpu7x:2x2x1
jax: 0.10.0
libtpu: 0.0.40
codegen_flags: <defaults>
</compile_context>

<pallas_src>
import functools

import numpy as np
import jax
import jax.numpy as jnp
from jax import lax
from jax.experimental import pallas as pl
from jax.experimental.pallas import tpu as pltpu

LATENT = 8
N_STEPS = 1000
N_CLASSES = 10

_REF_PREC = lax.Precision.HIGHEST  # used ONLY in the host-side reference

# (f_out, f_in) of the 14 dense matmuls, in execution order.  The two
# skip-connection concats are realised as sublane stacks of two aligned 8-row
# blocks, so d2 / d3 are single [16,16] matmuls (no split halves).
LAYER_DIMS = (
    (8, 8), (8, 8),              # 0  e1,  1  e1b
    (8, 8), (8, 8),              # 2  e2,  3  e2b
    (8, 8), (8, 8),              # 4  e3,  5  e3b
    (8, 8), (8, 8),              # 6  d1,  7  d1b
    (16, 16), (8, 16), (8, 8),   # 8  d2 (on cat(h,x2)), 9  d2b, 10 d2c
    (16, 16), (8, 16), (8, 8),   # 11 d3 (on cat(h,x1)), 12 d3b, 13 d3c
)
NUM_LAYERS = len(LAYER_DIMS)


# ----------------------------------------------------------------------------
# Parameter init (deterministic, PyTorch-like fan-in uniform / N(0,1) embeddings)
# ----------------------------------------------------------------------------
def _uniform(key, shape, fan_in):
    k = 1.0 / np.sqrt(fan_in)
    return jax.random.uniform(key, shape, jnp.float32, -k, k)


def init_params(key):
    keys = iter(jax.random.split(key, 64))
    p = {}
    p["time_embed"] = jax.random.normal(next(keys), (N_STEPS, LATENT), jnp.float32)
    p["cond_embed"] = jax.random.normal(next(keys), (N_CLASSES, LATENT), jnp.float32)

    def linear(out_f, in_f):
        return (_uniform(next(keys), (out_f, in_f), in_f),
                _uniform(next(keys), (out_f,), in_f))

    def conv(c_out, c_in, k):
        fan = c_in * k
        return (_uniform(next(keys), (c_out, c_in, k), fan),
                _uniform(next(keys), (c_out,), fan))

    def convT(c_in, c_out, k):
        fan = c_out * k
        return (_uniform(next(keys), (c_in, c_out, k), fan),
                _uniform(next(keys), (c_out,), fan))

    p["te1"] = linear(LATENT, 2 * LATENT)
    p["te2"] = linear(4, 2 * LATENT)
    p["te3"] = linear(2, 2 * LATENT)
    p["td1"] = linear(1, 2 * LATENT)
    p["td2"] = linear(2, 2 * LATENT)
    p["td3"] = linear(4, 2 * LATENT)
    p["e1"], p["e1b"] = conv(2, 1, 3), conv(2, 2, 3)
    p["e2"], p["e2b"] = conv(4, 2, 3), conv(4, 4, 3)
    p["e3"], p["e3b"] = conv(8, 4, 3), conv(8, 8, 3)
    p["d1"], p["d1b"] = convT(8, 4, 2), convT(4, 4, 3)
    p["d2"], p["d2b"], p["d2c"] = convT(8, 4, 2), convT(4, 2, 3), convT(2, 2, 3)
    p["d3"], p["d3b"], p["d3c"] = convT(4, 2, 2), convT(2, 1, 3), convT(1, 1, 3)
    return p


# ----------------------------------------------------------------------------
# Host-side lowering (run ONCE): convs -> dense matrices over the flat [C*L] layout
# ----------------------------------------------------------------------------
def conv1d_to_matrix(w, b, l_in, stride, pad):
    """Conv1d weight [Cout,Cin,K], bias [Cout] -> M [Cin*Lin, Cout*Lout], b [Cout*Lout]."""
    w = np.asarray(w); b = np.asarray(b)
    c_out, c_in, k = w.shape
    l_out = (l_in + 2 * pad - k) // stride + 1
    m = np.zeros((c_in * l_in, c_out * l_out), np.float32)
    for co in range(c_out):
        for lo in range(l_out):
            for ci in range(c_in):
                for j in range(k):
                    li = lo * stride - pad + j
                    if 0 <= li < l_in:
                        m[ci * l_in + li, co * l_out + lo] = w[co, ci, j]
    return m, np.repeat(b, l_out).astype(np.float32)


def convT1d_to_matrix(w, b, l_in, stride, pad):
    """ConvTranspose1d weight [Cin,Cout,K], bias [Cout] -> dense matrix form."""
    w = np.asarray(w); b = np.asarray(b)
    c_in, c_out, k = w.shape
    l_out = (l_in - 1) * stride - 2 * pad + k
    m = np.zeros((c_in * l_in, c_out * l_out), np.float32)
    for ci in range(c_in):
        for li in range(l_in):
            for co in range(c_out):
                for lo in range(l_out):
                    j = lo - li * stride + pad
                    if 0 <= j < k:
                        m[ci * l_in + li, co * l_out + lo] = w[ci, co, j]
    return m, np.repeat(b, l_out).astype(np.float32)


def pack_params(p, compute_dtype=jnp.float32):
    """Lower all convs, transpose to batch-on-lanes form, pack into a few slabs."""
    # --- fused time/condition-embedding projections: six [8,16] blocks -------
    def temb_block(wb, c_tile):
        w, b = (np.asarray(a) for a in wb)
        return np.tile(w, (c_tile, 1)), np.tile(b, c_tile)  # broadcast over channels

    blocks = [temb_block(p["te1"], 1), temb_block(p["te2"], 2),
              temb_block(p["te3"], 4), temb_block(p["td1"], 8),
              temb_block(p["td2"], 4), temb_block(p["td3"], 2)]
    w_temb = np.concatenate([w for w, _ in blocks], 0).astype(np.float32)           # [48,16]
    b_temb = np.concatenate([b for _, b in blocks], 0).astype(np.float32)[:, None]  # [48,1]

    # --- conv / convT dense matrices, transposed to [f_out, f_in] ------------
    mats = []

    def add(mb):
        m, b = mb
        mats.append((m.T.copy(), b))

    add(conv1d_to_matrix(*p["e1"], l_in=8, stride=2, pad=1))       # 0   (1,8)->(2,4)
    add(conv1d_to_matrix(*p["e1b"], l_in=4, stride=1, pad=1))      # 1
    add(conv1d_to_matrix(*p["e2"], l_in=4, stride=2, pad=1))       # 2   (2,4)->(4,2)
    add(conv1d_to_matrix(*p["e2b"], l_in=2, stride=1, pad=1))      # 3
    add(conv1d_to_matrix(*p["e3"], l_in=2, stride=2, pad=1))       # 4   (4,2)->(8,1)
    add(conv1d_to_matrix(*p["e3b"], l_in=1, stride=1, pad=1))      # 5
    add(convT1d_to_matrix(*p["d1"], l_in=1, stride=2, pad=0))      # 6   (8,1)->(4,2)
    add(convT1d_to_matrix(*p["d1b"], l_in=2, stride=1, pad=1))     # 7
    # d2 acts on cat(h, x2): kept as ONE [16,16] matrix; the kernel builds the
    # 16-row input by sublane-stacking (h+e, x2+e) -> single matmul.
    add(convT1d_to_matrix(*p["d2"], l_in=2, stride=2, pad=0))      # 8   (8,2)->(4,4)
    add(convT1d_to_matrix(*p["d2b"], l_in=4, stride=1, pad=1))     # 9   (4,4)->(2,4)
    add(convT1d_to_matrix(*p["d2c"], l_in=4, stride=1, pad=1))     # 10
    # d3 acts on cat(h, x1): same single-matrix form.
    add(convT1d_to_matrix(*p["d3"], l_in=4, stride=2, pad=0))      # 11  (4,4)->(2,8)
    add(convT1d_to_matrix(*p["d3b"], l_in=8, stride=1, pad=1))     # 12  (2,8)->(1,8)
    add(convT1d_to_matrix(*p["d3c"], l_in=8, stride=1, pad=1))     # 13

    dims = tuple((w.shape[0], w.shape[1]) for w, _ in mats)
    assert dims == LAYER_DIMS, dims

    w_all = np.zeros((NUM_LAYERS, 16, 16), np.float32)
    b_all = np.zeros((NUM_LAYERS, 16, 1), np.float32)
    for k, (w, b) in enumerate(mats):
        fo, fi = w.shape
        w_all[k, :fo, :fi] = w
        b_all[k, :fo, 0] = b

    return {
        # embedding tables pre-transposed so the wrapper's gather already lands
        # in the batch-on-lanes layout (one fewer transpose in the XLA glue)
        "time_embed_t": jnp.asarray(np.asarray(p["time_embed"]).T, compute_dtype),
        "cond_embed_t": jnp.asarray(np.asarray(p["cond_embed"]).T, compute_dtype),
        "w_temb": jnp.asarray(w_temb, compute_dtype),
        "b_temb": jnp.asarray(b_temb, jnp.float32),
        "w_all": jnp.asarray(w_all, compute_dtype),
        "b_all": jnp.asarray(b_all, jnp.float32),
    }


# ----------------------------------------------------------------------------
# The Pallas kernel: whole UNet forward for one batch tile (batch on lanes)
# ----------------------------------------------------------------------------
def unet1d_kernel(x_ref, t_ref, wte_ref, bte_ref, w_ref, b_ref, o_ref):
    f32 = jnp.float32
    cdt = w_ref.dtype                              # compute dtype (f32 or bf16)
    x = x_ref[...]                                 # [8,  TN]
    t = t_ref[...]                                 # [16, TN]

    # all six time/condition-embedding projections in one matmul -> [48, TN]
    emb = (jnp.dot(wte_ref[...], t, preferred_element_type=f32)
           + bte_ref[...]).astype(cdt)

    def layer(k, h, act=True, out_dtype=None):
        fo, fi = LAYER_DIMS[k]
        y = jnp.dot(w_ref[k, 0:fo, 0:fi], h, preferred_element_type=f32)
        y = y + b_ref[k, 0:fo, :]                  # bias broadcasts over lanes
        if act:
            y = jnp.maximum(y, 0.0)
        return y.astype(cdt if out_dtype is None else out_dtype)

    h = layer(0, x + emb[0:8])                                 # e1  (+ te1)
    h = x1 = layer(1, h)                                       # e1b
    h = layer(2, h + emb[8:16])                                # e2  (+ te2)
    h = x2 = layer(3, h)                                       # e2b
    h = layer(4, h + emb[16:24])                               # e3  (+ te3)
    h = layer(5, h)                                            # e3b
    h = layer(6, h + emb[24:32])                               # d1  (+ td1)
    h = layer(7, h)                                            # d1b
    e = emb[32:40]                                             # td2
    h = layer(8, jnp.concatenate([h + e, x2 + e], axis=0))     # d2 on cat(h, x2)
    h = layer(9, h)                                            # d2b
    h = layer(10, h)                                           # d2c
    e = emb[40:48]                                             # td3
    h = layer(11, jnp.concatenate([h + e, x1 + e], axis=0))    # d3 on cat(h, x1)
    h = layer(12, h)                                           # d3b
    h = layer(13, h, act=False, out_dtype=f32)                 # d3c (no final relu)
    o_ref[...] = h                                             # lane-dense [8, TN] store


# ----------------------------------------------------------------------------
# Wrapper (jit this; weight packing is done once, outside)
# ----------------------------------------------------------------------------
def net_forward(x, t, c, packed, *, tile_n=512):
    """x: [N,8] f32, t: [N,1] int32 timestep, c: [N,1] int32 class -> [N,8] f32."""
    assert tile_n % 128 == 0, "tile_n must be a multiple of 128 (lane width)"
    n = x.shape[0]
    n_pad = ((n + tile_n - 1) // tile_n) * tile_n
    cdt = packed["w_all"].dtype

    # embedding lookups (gathers) stay in plain JAX glue, already transposed
    t_t = jnp.concatenate([packed["time_embed_t"][:, t[:, 0]],
                           packed["cond_embed_t"][:, c[:, 0]]], axis=0)   # [16, N]
    t_t = jnp.pad(t_t, ((0, 0), (0, n_pad - n)))                          # [16, n_pad]
    x_t = jnp.pad(x.astype(cdt).T, ((0, 0), (0, n_pad - n)))              # [8,  n_pad]

    out_t = pl.pallas_call(
        unet1d_kernel,
        out_shape=jax.ShapeDtypeStruct((LATENT, n_pad), jnp.float32),
        grid_spec=pltpu.PrefetchScalarGridSpec(
            num_scalar_prefetch=0,
            grid=(n_pad // tile_n,),
            in_specs=[
                pl.BlockSpec((LATENT, tile_n), lambda i: (0, i)),        # x tile
                pl.BlockSpec((2 * LATENT, tile_n), lambda i: (0, i)),    # t16 tile
                pl.BlockSpec(packed["w_temb"].shape, lambda i: (0, 0)),  # fused temb W
                pl.BlockSpec(packed["b_temb"].shape, lambda i: (0, 0)),  # fused temb b
                pl.BlockSpec(packed["w_all"].shape, lambda i: (0, 0, 0)),  # conv W slab
                pl.BlockSpec(packed["b_all"].shape, lambda i: (0, 0, 0)),  # conv b slab
            ],
            out_specs=pl.BlockSpec((LATENT, tile_n), lambda i: (0, i)),
        ),
        compiler_params=pltpu.CompilerParams(
            dimension_semantics=("parallel",),
            vmem_limit_bytes=32 * 1024 * 1024,
        ),
    )(x_t, t_t, packed["w_temb"], packed["b_temb"],
      packed["w_all"], packed["b_all"])

    return out_t[:, :n].T


# ----------------------------------------------------------------------------
# Device-aware defaults (compute dtype + batch-tile size)
# ----------------------------------------------------------------------------
def _device_kind():
    try:
        return jax.devices()[0].device_kind.lower()
    except Exception:
        return ""


def default_compute_dtype(kind=None):
    kind = _device_kind() if kind is None else kind
    # bf16 weights/activations (f32 accumulation) on v6e / v7x; f32 elsewhere
    # (v5e has no native bf16 VPU elementwise -> keep f32 there).
    if any(s in kind for s in ("v6", "v7", "7x")):
        return jnp.bfloat16
    return jnp.float32


def pick_tile_n(n, kind=None):
    kind = _device_kind() if kind is None else kind
    n128 = max(128, -(-n // 128) * 128)
    if any(s in kind for s in ("v7", "7x")):
        # 2 TensorCores per chip: keep the "parallel" grid >= 2 steps.
        half = -(-n128 // 2)
        return max(128, min(2048, -(-half // 128) * 128))
    # v5e / v6e (1 TC): fewer, bigger tiles amortize per-grid-step overhead.
    return min(4096, n128)


# ----------------------------------------------------------------------------
# Op-for-op reference (real Conv1d / ConvTranspose1d semantics via lax.conv),
# used to validate both the host-side lowering and the Pallas kernel.
# ----------------------------------------------------------------------------
def reference_forward(x, t16, p):
    relu = lambda v: jnp.maximum(v, 0.0)

    def lin(v, wb):
        w, b = wb
        return jnp.dot(v, w.T, precision=_REF_PREC) + b

    def conv(h, wb, stride, pad):
        w, b = wb                                        # [Cout, Cin, K]
        y = lax.conv_general_dilated(
            h, w, window_strides=(stride,), padding=[(pad, pad)],
            dimension_numbers=("NCH", "OIH", "NCH"), precision=_REF_PREC)
        return y + b[None, :, None]

    def convT(h, wb, stride, pad):
        w, b = wb                                        # [Cin, Cout, K]
        k = w.shape[2]
        wf = jnp.flip(w, axis=2).transpose(1, 0, 2)      # -> [Cout, Cin, K]
        y = lax.conv_general_dilated(
            h, wf, window_strides=(1,), padding=[(k - 1 - pad, k - 1 - pad)],
            lhs_dilation=(stride,), dimension_numbers=("NCH", "OIH", "NCH"),
            precision=_REF_PREC)
        return y + b[None, :, None]

    h = x[:, None, :]                                                    # [N,1,8]
    h = relu(conv(h + lin(t16, p["te1"])[:, None, :], p["e1"], 2, 1))
    h = x1 = relu(conv(h, p["e1b"], 1, 1))
    h = relu(conv(h + lin(t16, p["te2"])[:, None, :], p["e2"], 2, 1))
    h = x2 = relu(conv(h, p["e2b"], 1, 1))
    h = relu(conv(h + lin(t16, p["te3"])[:, None, :], p["e3"], 2, 1))
    h = relu(conv(h, p["e3b"], 1, 1))
    h = relu(convT(h + lin(t16, p["td1"])[:, None, :], p["d1"], 2, 0))
    h = relu(convT(h, p["d1b"], 1, 1))
    h = jnp.concatenate([h, x2], axis=1)
    h = relu(convT(h + lin(t16, p["td2"])[:, None, :], p["d2"], 2, 0))
    h = relu(convT(h, p["d2b"], 1, 1))
    h = relu(convT(h, p["d2c"], 1, 1))
    h = jnp.concatenate([h, x1], axis=1)
    h = relu(convT(h + lin(t16, p["td3"])[:, None, :], p["d3"], 2, 0))
    h = relu(convT(h, p["d3b"], 1, 1))
    h = convT(h, p["d3c"], 1, 1)
    return h[:, 0, :]


# ----------------------------------------------------------------------------
if __name__ == "__main__":
    kind = _device_kind()
    cdt = default_compute_dtype(kind)

    key = jax.random.PRNGKey(0)
    kp, kx, kt, kc = jax.random.split(key, 4)
    params = init_params(kp)
    packed = pack_params(params, compute_dtype=cdt)   # host-side lowering, done ONCE

    N = 1000                                          # batch of noised latents
    x = jax.random.normal(kx, (N, LATENT), jnp.float32)          # noised latent
    t = jax.random.randint(kt, (N, 1), 0, N_STEPS, jnp.int32)    # timestep indices
    c = jax.random.randint(kc, (N, 1), 0, N_CLASSES, jnp.int32)  # class condition

    tile_n = pick_tile_n(N, kind)
    fwd = jax.jit(functools.partial(net_forward, tile_n=tile_n))
    out = jax.block_until_ready(fwd(x, t, c, packed))
    assert out.shape == (N, LATENT)

    # validate against the op-for-op Conv1d / ConvTranspose1d reference
    # (kernel uses DEFAULT-precision MXU matmuls / optionally bf16, so 5e-2)
    t16 = jnp.concatenate([params["time_embed"][t[:, 0]],
                           params["cond_embed"][c[:, 0]]], axis=1)
    ref = jax.jit(reference_forward)(x, t16, params)
    np.testing.assert_allclose(np.asarray(out, np.float32),
                               np.asarray(ref, np.float32),
                               rtol=5e-2, atol=5e-2)

    print("KERNEL_OK")
</pallas_src>

<mosaic_0001>
module attributes {stable_mosaic.version = 11 : i64} {
  func.func @unet1d_kernel(%arg0: i32, %arg1: memref<8x1024xf32, #tpu.memory_space<vmem>>, %arg2: memref<16x1024xf32, #tpu.memory_space<vmem>>, %arg3: memref<48x16xf32, #tpu.memory_space<vmem>>, %arg4: memref<48x1xf32, #tpu.memory_space<vmem>>, %arg5: memref<14x16x16xf32, #tpu.memory_space<vmem>>, %arg6: memref<14x16x1xf32, #tpu.memory_space<vmem>>, %arg7: memref<8x1024xf32, #tpu.memory_space<vmem>>) attributes {dimension_semantics = [#tpu.dimension_semantics<parallel>], iteration_bounds = array<i64: 1>, scalar_prefetch = 0 : i64, scratch_operands = 0 : i64, tpu.core_type = #tpu.core_type<tc>, window_params = [{transform_indices = @transform_0, window_bounds = array<i64: 8, 1024>}, {transform_indices = @transform_1, window_bounds = array<i64: 16, 1024>}, {pipeline_mode = #tpu.pipeline_mode<synchronous>, transform_indices = @transform_2, window_bounds = array<i64: 48, 16>}, {pipeline_mode = #tpu.pipeline_mode<synchronous>, transform_indices = @transform_3, window_bounds = array<i64: 48, 1>}, {pipeline_mode = #tpu.pipeline_mode<synchronous>, transform_indices = @transform_4, window_bounds = array<i64: 14, 16, 16>}, {pipeline_mode = #tpu.pipeline_mode<synchronous>, transform_indices = @transform_5, window_bounds = array<i64: 14, 16, 1>}, {transform_indices = @transform_6, window_bounds = array<i64: 8, 1024>}]} {
    %c0 = arith.constant 0 : index
    %c0_0 = arith.constant 0 : index
    %0 = vector.load %arg1[%c0, %c0_0] : memref<8x1024xf32, #tpu.memory_space<vmem>>, vector<8x1024xf32>
    %c0_1 = arith.constant 0 : index
    %c0_2 = arith.constant 0 : index
    %1 = vector.load %arg2[%c0_1, %c0_2] : memref<16x1024xf32, #tpu.memory_space<vmem>>, vector<16x1024xf32>
    %c0_3 = arith.constant 0 : index
    %c0_4 = arith.constant 0 : index
    %2 = vector.load %arg3[%c0_3, %c0_4] : memref<48x16xf32, #tpu.memory_space<vmem>>, vector<48x16xf32>
    %cst = arith.constant dense<0.000000e+00> : vector<48x1024xf32>
    %3 = tpu.matmul %2, %1, %cst {dimension_numbers = #tpu.dot_dimension_numbers<[1], [0], [0], [1], [0, 0, 1, 1], [], []>} : vector<48x16xf32>, vector<16x1024xf32>, vector<48x1024xf32> -> vector<48x1024xf32>
    %c0_5 = arith.constant 0 : index
    %c0_6 = arith.constant 0 : index
    %4 = vector.load %arg4[%c0_5, %c0_6] : memref<48x1xf32, #tpu.memory_space<vmem>>, vector<48x1xf32>
    %5 = vector.broadcast %4 : vector<48x1xf32> to vector<48x1024xf32>
    %6 = arith.addf %3, %5 : vector<48x1024xf32>
    %7 = vector.extract_strided_slice %6 {offsets = [0, 0], sizes = [8, 1024], strides = [1, 1]} : vector<48x1024xf32> to vector<8x1024xf32>
    %8 = arith.addf %0, %7 : vector<8x1024xf32>
    %c0_7 = arith.constant 0 : index
    %c0_8 = arith.constant 0 : index
    %c0_9 = arith.constant 0 : index
    %9 = vector.load %arg5[%c0_7, %c0_8, %c0_9] : memref<14x16x16xf32, #tpu.memory_space<vmem>>, vector<1x8x8xf32>
    %10 = vector.shape_cast %9 : vector<1x8x8xf32> to vector<8x8xf32>
    %cst_10 = arith.constant dense<0.000000e+00> : vector<8x1024xf32>
    %11 = tpu.matmul %10, %8, %cst_10 {dimension_numbers = #tpu.dot_dimension_numbers<[1], [0], [0], [1], [0, 0, 1, 1], [], []>} : vector<8x8xf32>, vector<8x1024xf32>, vector<8x1024xf32> -> vector<8x1024xf32>
    %c0_11 = arith.constant 0 : index
    %c0_12 = arith.constant 0 : index
    %c0_13 = arith.constant 0 : index
    %12 = vector.load %arg6[%c0_11, %c0_12, %c0_13] : memref<14x16x1xf32, #tpu.memory_space<vmem>>, vector<1x8x1xf32>
    %13 = vector.shape_cast %12 : vector<1x8x1xf32> to vector<8x1xf32>
    %14 = vector.broadcast %13 : vector<8x1xf32> to vector<8x1024xf32>
    %15 = arith.addf %11, %14 : vector<8x1024xf32>
    %cst_14 = arith.constant 0.000000e+00 : f32
    %16 = vector.broadcast %cst_14 : f32 to vector<8x1024xf32>
    %17 = arith.maximumf %15, %16 : vector<8x1024xf32>
    %c1 = arith.constant 1 : index
    %c0_15 = arith.constant 0 : index
    %c0_16 = arith.constant 0 : index
    %18 = vector.load %arg5[%c1, %c0_15, %c0_16] : memref<14x16x16xf32, #tpu.memory_space<vmem>>, vector<1x8x8xf32>
    %19 = vector.shape_cast %18 : vector<1x8x8xf32> to vector<8x8xf32>
    %cst_17 = arith.constant dense<0.000000e+00> : vector<8x1024xf32>
    %20 = tpu.matmul %19, %17, %cst_17 {dimension_numbers = #tpu.dot_dimension_numbers<[1], [0], [0], [1], [0, 0, 1, 1], [], []>} : vector<8x8xf32>, vector<8x1024xf32>, vector<8x1024xf32> -> vector<8x1024xf32>
    %c1_18 = arith.constant 1 : index
    %c0_19 = arith.constant 0 : index
    %c0_20 = arith.constant 0 : index
    %21 = vector.load %arg6[%c1_18, %c0_19, %c0_20] : memref<14x16x1xf32, #tpu.memory_space<vmem>>, vector<1x8x1xf32>
    %22 = vector.shape_cast %21 : vector<1x8x1xf32> to vector<8x1xf32>
    %23 = vector.broadcast %22 : vector<8x1xf32> to vector<8x1024xf32>
    %24 = arith.addf %20, %23 : vector<8x1024xf32>
    %cst_21 = arith.constant 0.000000e+00 : f32
    %25 = vector.broadcast %cst_21 : f32 to vector<8x1024xf32>
    %26 = arith.maximumf %24, %25 : vector<8x1024xf32>
    %27 = vector.extract_strided_slice %6 {offsets = [8, 0], sizes = [8, 1024], strides = [1, 1]} : vector<48x1024xf32> to vector<8x1024xf32>
    %28 = arith.addf %26, %27 : vector<8x1024xf32>
    %c2 = arith.constant 2 : index
    %c0_22 = arith.constant 0 : index
    %c0_23 = arith.constant 0 : index
    %29 = vector.load %arg5[%c2, %c0_22, %c0_23] : memref<14x16x16xf32, #tpu.memory_space<vmem>>, vector<1x8x8xf32>
    %30 = vector.shape_cast %29 : vector<1x8x8xf32> to vector<8x8xf32>
    %cst_24 = arith.constant dense<0.000000e+00> : vector<8x1024xf32>
    %31 = tpu.matmul %30, %28, %cst_24 {dimension_numbers = #tpu.dot_dimension_numbers<[1], [0], [0], [1], [0, 0, 1, 1], [], []>} : vector<8x8xf32>, vector<8x1024xf32>, vector<8x1024xf32> -> vector<8x1024xf32>
    %c2_25 = arith.constant 2 : index
    %c0_26 = arith.constant 0 : index
    %c0_27 = arith.constant 0 : index
    %32 = vector.load %arg6[%c2_25, %c0_26, %c0_27] : memref<14x16x1xf32, #tpu.memory_space<vmem>>, vector<1x8x1xf32>
    %33 = vector.shape_cast %32 : vector<1x8x1xf32> to vector<8x1xf32>
    %34 = vector.broadcast %33 : vector<8x1xf32> to vector<8x1024xf32>
    %35 = arith.addf %31, %34 : vector<8x1024xf32>
    %cst_28 = arith.constant 0.000000e+00 : f32
    %36 = vector.broadcast %cst_28 : f32 to vector<8x1024xf32>
    %37 = arith.maximumf %35, %36 : vector<8x1024xf32>
    %c3 = arith.constant 3 : index
    %c0_29 = arith.constant 0 : index
    %c0_30 = arith.constant 0 : index
    %38 = vector.load %arg5[%c3, %c0_29, %c0_30] : memref<14x16x16xf32, #tpu.memory_space<vmem>>, vector<1x8x8xf32>
    %39 = vector.shape_cast %38 : vector<1x8x8xf32> to vector<8x8xf32>
    %cst_31 = arith.constant dense<0.000000e+00> : vector<8x1024xf32>
    %40 = tpu.matmul %39, %37, %cst_31 {dimension_numbers = #tpu.dot_dimension_numbers<[1], [0], [0], [1], [0, 0, 1, 1], [], []>} : vector<8x8xf32>, vector<8x1024xf32>, vector<8x1024xf32> -> vector<8x1024xf32>
    %c3_32 = arith.constant 3 : index
    %c0_33 = arith.constant 0 : index
    %c0_34 = arith.constant 0 : index
    %41 = vector.load %arg6[%c3_32, %c0_33, %c0_34] : memref<14x16x1xf32, #tpu.memory_space<vmem>>, vector<1x8x1xf32>
    %42 = vector.shape_cast %41 : vector<1x8x1xf32> to vector<8x1xf32>
    %43 = vector.broadcast %42 : vector<8x1xf32> to vector<8x1024xf32>
    %44 = arith.addf %40, %43 : vector<8x1024xf32>
    %cst_35 = arith.constant 0.000000e+00 : f32
    %45 = vector.broadcast %cst_35 : f32 to vector<8x1024xf32>
    %46 = arith.maximumf %44, %45 : vector<8x1024xf32>
    %47 = vector.extract_strided_slice %6 {offsets = [16, 0], sizes = [8, 1024], strides = [1, 1]} : vector<48x1024xf32> to vector<8x1024xf32>
    %48 = arith.addf %46, %47 : vector<8x1024xf32>
    %c4 = arith.constant 4 : index
    %c0_36 = arith.constant 0 : index
    %c0_37 = arith.constant 0 : index
    %49 = vector.load %arg5[%c4, %c0_36, %c0_37] : memref<14x16x16xf32, #tpu.memory_space<vmem>>, vector<1x8x8xf32>
    %50 = vector.shape_cast %49 : vector<1x8x8xf32> to vector<8x8xf32>
    %cst_38 = arith.constant dense<0.000000e+00> : vector<8x1024xf32>
    %51 = tpu.matmul %50, %48, %cst_38 {dimension_numbers = #tpu.dot_dimension_numbers<[1], [0], [0], [1], [0, 0, 1, 1], [], []>} : vector<8x8xf32>, vector<8x1024xf32>, vector<8x1024xf32> -> vector<8x1024xf32>
    %c4_39 = arith.constant 4 : index
    %c0_40 = arith.constant 0 : index
    %c0_41 = arith.constant 0 : index
    %52 = vector.load %arg6[%c4_39, %c0_40, %c0_41] : memref<14x16x1xf32, #tpu.memory_space<vmem>>, vector<1x8x1xf32>
    %53 = vector.shape_cast %52 : vector<1x8x1xf32> to vector<8x1xf32>
    %54 = vector.broadcast %53 : vector<8x1xf32> to vector<8x1024xf32>
    %55 = arith.addf %51, %54 : vector<8x1024xf32>
    %cst_42 = arith.constant 0.000000e+00 : f32
    %56 = vector.broadcast %cst_42 : f32 to vector<8x1024xf32>
    %57 = arith.maximumf %55, %56 : vector<8x1024xf32>
    %c5 = arith.constant 5 : index
    %c0_43 = arith.constant 0 : index
    %c0_44 = arith.constant 0 : index
    %58 = vector.load %arg5[%c5, %c0_43, %c0_44] : memref<14x16x16xf32, #tpu.memory_space<vmem>>, vector<1x8x8xf32>
    %59 = vector.shape_cast %58 : vector<1x8x8xf32> to vector<8x8xf32>
    %cst_45 = arith.constant dense<0.000000e+00> : vector<8x1024xf32>
    %60 = tpu.matmul %59, %57, %cst_45 {dimension_numbers = #tpu.dot_dimension_numbers<[1], [0], [0], [1], [0, 0, 1, 1], [], []>} : vector<8x8xf32>, vector<8x1024xf32>, vector<8x1024xf32> -> vector<8x1024xf32>
    %c5_46 = arith.constant 5 : index
    %c0_47 = arith.constant 0 : index
    %c0_48 = arith.constant 0 : index
    %61 = vector.load %arg6[%c5_46, %c0_47, %c0_48] : memref<14x16x1xf32, #tpu.memory_space<vmem>>, vector<1x8x1xf32>
    %62 = vector.shape_cast %61 : vector<1x8x1xf32> to vector<8x1xf32>
    %63 = vector.broadcast %62 : vector<8x1xf32> to vector<8x1024xf32>
    %64 = arith.addf %60, %63 : vector<8x1024xf32>
    %cst_49 = arith.constant 0.000000e+00 : f32
    %65 = vector.broadcast %cst_49 : f32 to vector<8x1024xf32>
    %66 = arith.maximumf %64, %65 : vector<8x1024xf32>
    %67 = vector.extract_strided_slice %6 {offsets = [24, 0], sizes = [8, 1024], strides = [1, 1]} : vector<48x1024xf32> to vector<8x1024xf32>
    %68 = arith.addf %66, %67 : vector<8x1024xf32>
    %c6 = arith.constant 6 : index
    %c0_50 = arith.constant 0 : index
    %c0_51 = arith.constant 0 : index
    %69 = vector.load %arg5[%c6, %c0_50, %c0_51] : memref<14x16x16xf32, #tpu.memory_space<vmem>>, vector<1x8x8xf32>
    %70 = vector.shape_cast %69 : vector<1x8x8xf32> to vector<8x8xf32>
    %cst_52 = arith.constant dense<0.000000e+00> : vector<8x1024xf32>
    %71 = tpu.matmul %70, %68, %cst_52 {dimension_numbers = #tpu.dot_dimension_numbers<[1], [0], [0], [1], [0, 0, 1, 1], [], []>} : vector<8x8xf32>, vector<8x1024xf32>, vector<8x1024xf32> -> vector<8x1024xf32>
    %c6_53 = arith.constant 6 : index
    %c0_54 = arith.constant 0 : index
    %c0_55 = arith.constant 0 : index
    %72 = vector.load %arg6[%c6_53, %c0_54, %c0_55] : memref<14x16x1xf32, #tpu.memory_space<vmem>>, vector<1x8x1xf32>
    %73 = vector.shape_cast %72 : vector<1x8x1xf32> to vector<8x1xf32>
    %74 = vector.broadcast %73 : vector<8x1xf32> to vector<8x1024xf32>
    %75 = arith.addf %71, %74 : vector<8x1024xf32>
    %cst_56 = arith.constant 0.000000e+00 : f32
    %76 = vector.broadcast %cst_56 : f32 to vector<8x1024xf32>
    %77 = arith.maximumf %75, %76 : vector<8x1024xf32>
    %c7 = arith.constant 7 : index
    %c0_57 = arith.constant 0 : index
    %c0_58 = arith.constant 0 : index
    %78 = vector.load %arg5[%c7, %c0_57, %c0_58] : memref<14x16x16xf32, #tpu.memory_space<vmem>>, vector<1x8x8xf32>
    %79 = vector.shape_cast %78 : vector<1x8x8xf32> to vector<8x8xf32>
    %cst_59 = arith.constant dense<0.000000e+00> : vector<8x1024xf32>
    %80 = tpu.matmul %79, %77, %cst_59 {dimension_numbers = #tpu.dot_dimension_numbers<[1], [0], [0], [1], [0, 0, 1, 1], [], []>} : vector<8x8xf32>, vector<8x1024xf32>, vector<8x1024xf32> -> vector<8x1024xf32>
    %c7_60 = arith.constant 7 : index
    %c0_61 = arith.constant 0 : index
    %c0_62 = arith.constant 0 : index
    %81 = vector.load %arg6[%c7_60, %c0_61, %c0_62] : memref<14x16x1xf32, #tpu.memory_space<vmem>>, vector<1x8x1xf32>
    %82 = vector.shape_cast %81 : vector<1x8x1xf32> to vector<8x1xf32>
    %83 = vector.broadcast %82 : vector<8x1xf32> to vector<8x1024xf32>
    %84 = arith.addf %80, %83 : vector<8x1024xf32>
    %cst_63 = arith.constant 0.000000e+00 : f32
    %85 = vector.broadcast %cst_63 : f32 to vector<8x1024xf32>
    %86 = arith.maximumf %84, %85 : vector<8x1024xf32>
    %87 = vector.extract_strided_slice %6 {offsets = [32, 0], sizes = [8, 1024], strides = [1, 1]} : vector<48x1024xf32> to vector<8x1024xf32>
    %88 = arith.addf %86, %87 : vector<8x1024xf32>
    %89 = arith.addf %46, %87 : vector<8x1024xf32>
    %90 = tpu.concatenate %88, %89 in 0 : vector<8x1024xf32>, vector<8x1024xf32> -> vector<16x1024xf32>
    %c8 = arith.constant 8 : index
    %c0_64 = arith.constant 0 : index
    %c0_65 = arith.constant 0 : index
    %91 = vector.load %arg5[%c8, %c0_64, %c0_65] : memref<14x16x16xf32, #tpu.memory_space<vmem>>, vector<1x16x16xf32>
    %92 = vector.shape_cast %91 : vector<1x16x16xf32> to vector<16x16xf32>
    %cst_66 = arith.constant dense<0.000000e+00> : vector<16x1024xf32>
    %93 = tpu.matmul %92, %90, %cst_66 {dimension_numbers = #tpu.dot_dimension_numbers<[1], [0], [0], [1], [0, 0, 1, 1], [], []>} : vector<16x16xf32>, vector<16x1024xf32>, vector<16x1024xf32> -> vector<16x1024xf32>
    %c8_67 = arith.constant 8 : index
    %c0_68 = arith.constant 0 : index
    %c0_69 = arith.constant 0 : index
    %94 = vector.load %arg6[%c8_67, %c0_68, %c0_69] : memref<14x16x1xf32, #tpu.memory_space<vmem>>, vector<1x16x1xf32>
    %95 = vector.shape_cast %94 : vector<1x16x1xf32> to vector<16x1xf32>
    %96 = vector.broadcast %95 : vector<16x1xf32> to vector<16x1024xf32>
    %97 = arith.addf %93, %96 : vector<16x1024xf32>
    %cst_70 = arith.constant 0.000000e+00 : f32
    %98 = vector.broadcast %cst_70 : f32 to vector<16x1024xf32>
    %99 = arith.maximumf %97, %98 : vector<16x1024xf32>
    %c9 = arith.constant 9 : index
    %c0_71 = arith.constant 0 : index
    %c0_72 = arith.constant 0 : index
    %100 = vector.load %arg5[%c9, %c0_71, %c0_72] : memref<14x16x16xf32, #tpu.memory_space<vmem>>, vector<1x8x16xf32>
    %101 = vector.shape_cast %100 : vector<1x8x16xf32> to vector<8x16xf32>
    %cst_73 = arith.constant dense<0.000000e+00> : vector<8x1024xf32>
    %102 = tpu.matmul %101, %99, %cst_73 {dimension_numbers = #tpu.dot_dimension_numbers<[1], [0], [0], [1], [0, 0, 1, 1], [], []>} : vector<8x16xf32>, vector<16x1024xf32>, vector<8x1024xf32> -> vector<8x1024xf32>
    %c9_74 = arith.constant 9 : index
    %c0_75 = arith.constant 0 : index
    %c0_76 = arith.constant 0 : index
    %103 = vector.load %arg6[%c9_74, %c0_75, %c0_76] : memref<14x16x1xf32, #tpu.memory_space<vmem>>, vector<1x8x1xf32>
    %104 = vector.shape_cast %103 : vector<1x8x1xf32> to vector<8x1xf32>
    %105 = vector.broadcast %104 : vector<8x1xf32> to vector<8x1024xf32>
    %106 = arith.addf %102, %105 : vector<8x1024xf32>
    %cst_77 = arith.constant 0.000000e+00 : f32
    %107 = vector.broadcast %cst_77 : f32 to vector<8x1024xf32>
    %108 = arith.maximumf %106, %107 : vector<8x1024xf32>
    %c10 = arith.constant 10 : index
    %c0_78 = arith.constant 0 : index
    %c0_79 = arith.constant 0 : index
    %109 = vector.load %arg5[%c10, %c0_78, %c0_79] : memref<14x16x16xf32, #tpu.memory_space<vmem>>, vector<1x8x8xf32>
    %110 = vector.shape_cast %109 : vector<1x8x8xf32> to vector<8x8xf32>
    %cst_80 = arith.constant dense<0.000000e+00> : vector<8x1024xf32>
    %111 = tpu.matmul %110, %108, %cst_80 {dimension_numbers = #tpu.dot_dimension_numbers<[1], [0], [0], [1], [0, 0, 1, 1], [], []>} : vector<8x8xf32>, vector<8x1024xf32>, vector<8x1024xf32> -> vector<8x1024xf32>
    %c10_81 = arith.constant 10 : index
    %c0_82 = arith.constant 0 : index
    %c0_83 = arith.constant 0 : index
    %112 = vector.load %arg6[%c10_81, %c0_82, %c0_83] : memref<14x16x1xf32, #tpu.memory_space<vmem>>, vector<1x8x1xf32>
    %113 = vector.shape_cast %112 : vector<1x8x1xf32> to vector<8x1xf32>
    %114 = vector.broadcast %113 : vector<8x1xf32> to vector<8x1024xf32>
    %115 = arith.addf %111, %114 : vector<8x1024xf32>
    %cst_84 = arith.constant 0.000000e+00 : f32
    %116 = vector.broadcast %cst_84 : f32 to vector<8x1024xf32>
    %117 = arith.maximumf %115, %116 : vector<8x1024xf32>
    %118 = vector.extract_strided_slice %6 {offsets = [40, 0], sizes = [8, 1024], strides = [1, 1]} : vector<48x1024xf32> to vector<8x1024xf32>
    %119 = arith.addf %117, %118 : vector<8x1024xf32>
    %120 = arith.addf %26, %118 : vector<8x1024xf32>
    %121 = tpu.concatenate %119, %120 in 0 : vector<8x1024xf32>, vector<8x1024xf32> -> vector<16x1024xf32>
    %c11 = arith.constant 11 : index
    %c0_85 = arith.constant 0 : index
    %c0_86 = arith.constant 0 : index
    %122 = vector.load %arg5[%c11, %c0_85, %c0_86] : memref<14x16x16xf32, #tpu.memory_space<vmem>>, vector<1x16x16xf32>
    %123 = vector.shape_cast %122 : vector<1x16x16xf32> to vector<16x16xf32>
    %cst_87 = arith.constant dense<0.000000e+00> : vector<16x1024xf32>
    %124 = tpu.matmul %123, %121, %cst_87 {dimension_numbers = #tpu.dot_dimension_numbers<[1], [0], [0], [1], [0, 0, 1, 1], [], []>} : vector<16x16xf32>, vector<16x1024xf32>, vector<16x1024xf32> -> vector<16x1024xf32>
    %c11_88 = arith.constant 11 : index
    %c0_89 = arith.constant 0 : index
    %c0_90 = arith.constant 0 : index
    %125 = vector.load %arg6[%c11_88, %c0_89, %c0_90] : memref<14x16x1xf32, #tpu.memory_space<vmem>>, vector<1x16x1xf32>
    %126 = vector.shape_cast %125 : vector<1x16x1xf32> to vector<16x1xf32>
    %127 = vector.broadcast %126 : vector<16x1xf32> to vector<16x1024xf32>
    %128 = arith.addf %124, %127 : vector<16x1024xf32>
    %cst_91 = arith.constant 0.000000e+00 : f32
    %129 = vector.broadcast %cst_91 : f32 to vector<16x1024xf32>
    %130 = arith.maximumf %128, %129 : vector<16x1024xf32>
    %c12 = arith.constant 12 : index
    %c0_92 = arith.constant 0 : index
    %c0_93 = arith.constant 0 : index
    %131 = vector.load %arg5[%c12, %c0_92, %c0_93] : memref<14x16x16xf32, #tpu.memory_space<vmem>>, vector<1x8x16xf32>
    %132 = vector.shape_cast %131 : vector<1x8x16xf32> to vector<8x16xf32>
    %cst_94 = arith.constant dense<0.000000e+00> : vector<8x1024xf32>
    %133 = tpu.matmul %132, %130, %cst_94 {dimension_numbers = #tpu.dot_dimension_numbers<[1], [0], [0], [1], [0, 0, 1, 1], [], []>} : vector<8x16xf32>, vector<16x1024xf32>, vector<8x1024xf32> -> vector<8x1024xf32>
    %c12_95 = arith.constant 12 : index
    %c0_96 = arith.constant 0 : index
    %c0_97 = arith.constant 0 : index
    %134 = vector.load %arg6[%c12_95, %c0_96, %c0_97] : memref<14x16x1xf32, #tpu.memory_space<vmem>>, vector<1x8x1xf32>
    %135 = vector.shape_cast %134 : vector<1x8x1xf32> to vector<8x1xf32>
    %136 = vector.broadcast %135 : vector<8x1xf32> to vector<8x1024xf32>
    %137 = arith.addf %133, %136 : vector<8x1024xf32>
    %cst_98 = arith.constant 0.000000e+00 : f32
    %138 = vector.broadcast %cst_98 : f32 to vector<8x1024xf32>
    %139 = arith.maximumf %137, %138 : vector<8x1024xf32>
    %c13 = arith.constant 13 : index
    %c0_99 = arith.constant 0 : index
    %c0_100 = arith.constant 0 : index
    %140 = vector.load %arg5[%c13, %c0_99, %c0_100] : memref<14x16x16xf32, #tpu.memory_space<vmem>>, vector<1x8x8xf32>
    %141 = vector.shape_cast %140 : vector<1x8x8xf32> to vector<8x8xf32>
    %cst_101 = arith.constant dense<0.000000e+00> : vector<8x1024xf32>
    %142 = tpu.matmul %141, %139, %cst_101 {dimension_numbers = #tpu.dot_dimension_numbers<[1], [0], [0], [1], [0, 0, 1, 1], [], []>} : vector<8x8xf32>, vector<8x1024xf32>, vector<8x1024xf32> -> vector<8x1024xf32>
    %c13_102 = arith.constant 13 : index
    %c0_103 = arith.constant 0 : index
    %c0_104 = arith.constant 0 : index
    %143 = vector.load %arg6[%c13_102, %c0_103, %c0_104] : memref<14x16x1xf32, #tpu.memory_space<vmem>>, vector<1x8x1xf32>
    %144 = vector.shape_cast %143 : vector<1x8x1xf32> to vector<8x1xf32>
    %145 = vector.broadcast %144 : vector<8x1xf32> to vector<8x1024xf32>
    %146 = arith.addf %142, %145 : vector<8x1024xf32>
    %c0_105 = arith.constant 0 : index
    %c0_106 = arith.constant 0 : index
    %147 = vector.load %arg7[%c0_105, %c0_106] : memref<8x1024xf32, #tpu.memory_space<vmem>>, vector<8x1024xf32>
    tpu.vector_store %arg7[%c0_105, %c0_106], %146 {strides = array<i32>} : memref<8x1024xf32, #tpu.memory_space<vmem>>, vector<8x1024xf32>,
    return
  }
  func.func @transform_0(%arg0: i32) -> (i32, i32) {
    %c0_i32 = arith.constant 0 : i32
    %c0_i32_0 = arith.constant 0 : i32
    return %c0_i32, %arg0 : i32, i32
  }
  func.func @transform_1(%arg0: i32) -> (i32, i32) {
    %c0_i32 = arith.constant 0 : i32
    %c0_i32_0 = arith.constant 0 : i32
    return %c0_i32, %arg0 : i32, i32
  }
  func.func @transform_2(%arg0: i32) -> (i32, i32) {
    %c0_i32 = arith.constant 0 : i32
    %c0_i32_0 = arith.constant 0 : i32
    %c0_i32_1 = arith.constant 0 : i32
    return %c0_i32, %c0_i32_0 : i32, i32
  }
  func.func @transform_3(%arg0: i32) -> (i32, i32) {
    %c0_i32 = arith.constant 0 : i32
    %c0_i32_0 = arith.constant 0 : i32
    %c0_i32_1 = arith.constant 0 : i32
    return %c0_i32, %c0_i32_0 : i32, i32
  }
  func.func @transform_4(%arg0: i32) -> (i32, i32, i32) {
    %c0_i32 = arith.constant 0 : i32
    %c0_i32_0 = arith.constant 0 : i32
    %c0_i32_1 = arith.constant 0 : i32
    %c0_i32_2 = arith.constant 0 : i32
    return %c0_i32, %c0_i32_0, %c0_i32_1 : i32, i32, i32
  }
  func.func @transform_5(%arg0: i32) -> (i32, i32, i32) {
    %c0_i32 = arith.constant 0 : i32
    %c0_i32_0 = arith.constant 0 : i32
    %c0_i32_1 = arith.constant 0 : i32
    %c0_i32_2 = arith.constant 0 : i32
    return %c0_i32, %c0_i32_0, %c0_i32_1 : i32, i32, i32
  }
  func.func @transform_6(%arg0: i32) -> (i32, i32) {
    %c0_i32 = arith.constant 0 : i32
    %c0_i32_0 = arith.constant 0 : i32
    return %c0_i32, %arg0 : i32, i32
  }
}

</mosaic_0001>

<llo_original>
// kernel: net_forward.1
$region0: #{net_forward.1}
  #allocation0 [shape = 'u32[]', space=smem, size = 0x4, offset = 0x4, fixed_abs, tag = 'smem constant byte address 0x4 - core index']
  #allocation1 [shape = 'u32[144,128]{1,0:T(1,128)}', space=vmem, size = 0x12000, scoped, tag = 'internal scratch']
  %s0 = inlined_call_operand.vmem [shape: f32[8,1024], index: 0, kind: input, shape index: {}]
  %s1 = inlined_call_operand.vmem [shape: f32[16,1024], index: 1, kind: input, shape index: {}]
  %s2 = inlined_call_operand.vmem [shape: f32[48,16], index: 2, kind: input, shape index: {}]
  %s3 = inlined_call_operand.vmem [shape: f32[48,1], index: 3, kind: input, shape index: {}]
  %s4 = inlined_call_operand.vmem [shape: f32[14,16,16], index: 4, kind: input, shape index: {}]
  %s5 = inlined_call_operand.vmem [shape: f32[14,16,1], index: 5, kind: input, shape index: {}]
  %s6 = inlined_call_operand.vmem [shape: f32[8,1024], index: 6, kind: output, shape index: {}]
  %s7 = sld [smem:[#allocation0]]
  $region34: #{net_forward.1} parent=0
    _
  %s9 = ssub.s32 1, %s7
  %s10 = scalar_select 0, %s9, %s7
  // Predicated region
  $region2: #{net_forward.1} parent=0 // pred_check
    _
  $region3: #{net_forward.1} parent=0 // pred_check_branch
    %12 = sbr.rel (0) target = $region5
  $region4: #{net_forward.1} parent=0 // pred_region
    _
  $region5: #{net_forward.1} parent=0 // pred_fallthru
    _
  // Predicated region
  $region6: #{net_forward.1} parent=0 // pred_check
    _
  $region7: #{net_forward.1} parent=0 // pred_check_branch
    %14 = sbr.rel (0) target = $region9
  $region8: #{net_forward.1} parent=0 // pred_region
    _
  $region9: #{net_forward.1} parent=0 // pred_fallthru
    _
  // Predicated region
  $region10: #{net_forward.1} parent=0 // pred_check
    _
  $region11: #{net_forward.1} parent=0 // pred_check_branch
    %16 = sbr.rel (0) target = $region13
  $region12: #{net_forward.1} parent=0 // pred_region
    _
  $region13: #{net_forward.1} parent=0 // pred_fallthru
    _
  // Predicated region
  $region14: #{net_forward.1} parent=0 // pred_check
    _
  $region15: #{net_forward.1} parent=0 // pred_check_branch
    %18 = sbr.rel (0) target = $region17
  $region16: #{net_forward.1} parent=0 // pred_region
    _
  $region17: #{net_forward.1} parent=0 // pred_fallthru
    _
  // Predicated region
  $region18: #{net_forward.1} parent=0 // pred_check
    _
  $region19: #{net_forward.1} parent=0 // pred_check_branch
    %20 = sbr.rel (0) target = $region21
  $region20: #{net_forward.1} parent=0 // pred_region
    _
  $region21: #{net_forward.1} parent=0 // pred_fallthru
    _
  // Predicated region
  $region22: #{net_forward.1} parent=0 // pred_check
    _
  $region23: #{net_forward.1} parent=0 // pred_check_branch
    %22 = sbr.rel (0) target = $region25
  $region24: #{net_forward.1} parent=0 // pred_region
    _
  $region25: #{net_forward.1} parent=0 // pred_fallthru
    _
  %v23 = vld [vmem:[%s0] sm:$0xff]
  %v24 = vld [vmem:[%s0 + $0x8] sm:$0xff]
  %v25 = vld [vmem:[%s0 + $0x10] sm:$0xff]
  %v26 = vld [vmem:[%s0 + $0x18] sm:$0xff]
  %v27 = vld [vmem:[%s0 + $0x20] sm:$0xff]
  %v28 = vld [vmem:[%s0 + $0x28] sm:$0xff]
  %v29 = vld [vmem:[%s0 + $0x30] sm:$0xff]
  %v30 = vld [vmem:[%s0 + $0x38] sm:$0xff]
  %v31 = vld [vmem:[%s1] sm:$0xff]
  %v32 = vld [vmem:[%s1 + $0x8] sm:$0xff]
  %v33 = vld [vmem:[%s1 + $0x10] sm:$0xff]
  %v34 = vld [vmem:[%s1 + $0x18] sm:$0xff]
  %v35 = vld [vmem:[%s1 + $0x20] sm:$0xff]
  %v36 = vld [vmem:[%s1 + $0x28] sm:$0xff]
  %v37 = vld [vmem:[%s1 + $0x30] sm:$0xff]
  %v38 = vld [vmem:[%s1 + $0x38] sm:$0xff]
  %v39 = vld [vmem:[%s1 + $0x40] sm:$0xff]
  %v40 = vld [vmem:[%s1 + $0x48] sm:$0xff]
  %v41 = vld [vmem:[%s1 + $0x50] sm:$0xff]
  %v42 = vld [vmem:[%s1 + $0x58] sm:$0xff]
  %v43 = vld [vmem:[%s1 + $0x60] sm:$0xff]
  %v44 = vld [vmem:[%s1 + $0x68] sm:$0xff]
  %v45 = vld [vmem:[%s1 + $0x70] sm:$0xff]
  %v46 = vld [vmem:[%s1 + $0x78] sm:$0xff]
  %v47 = vld [vmem:[%s2] sm:$0xff]
  %v48 = vld [vmem:[%s2 + $0x8] sm:$0xff]
  %v49 = vld [vmem:[%s2 + $0x10] sm:$0xff]
  %v50 = vld [vmem:[%s2 + $0x18] sm:$0xff]
  %v51 = vld [vmem:[%s2 + $0x20] sm:$0xff]
  %v52 = vld [vmem:[%s2 + $0x28] sm:$0xff]
  %v53 = vld [vmem:[%s3] sm:$0xff]
  %v54 = vld [vmem:[%s3 + $0x8] sm:$0xff]
  %v55 = vld [vmem:[%s3 + $0x10] sm:$0xff]
  %v56 = vld [vmem:[%s3 + $0x18] sm:$0xff]
  %v57 = vld [vmem:[%s3 + $0x20] sm:$0xff]
  %v58 = vld [vmem:[%s3 + $0x28] sm:$0xff]
  %60 = vset.pattern.permute.xlu0 0
  %61 = vperm.xlu0 %60, %v53
  %v62 = vpop.permute.xlu0 %61
  %65 = vset.pattern.permute.xlu0 0
  %66 = vperm.xlu0 %65, %v54
  %v67 = vpop.permute.xlu0 %66
  %70 = vset.pattern.permute.xlu0 0
  %71 = vperm.xlu0 %70, %v55
  %v72 = vpop.permute.xlu0 %71
  %75 = vset.pattern.permute.xlu0 0
  %76 = vperm.xlu0 %75, %v56
  %v77 = vpop.permute.xlu0 %76
  %80 = vset.pattern.permute.xlu0 0
  %81 = vperm.xlu0 %80, %v57
  %v82 = vpop.permute.xlu0 %81
  %85 = vset.pattern.permute.xlu0 0
  %86 = vperm.xlu0 %85, %v58
  %v87 = vpop.permute.xlu0 %86
  %vm89 = vcmask 130048
  %v91 = vsel %vm89, %v47, 0
  %v94 = vsel %vm89, %v48, 0
  %v97 = vsel %vm89, %v49, 0
  %v100 = vsel %vm89, %v50, 0
  %v103 = vsel %vm89, %v51, 0
  %v106 = vsel %vm89, %v52, 0
  %108 = vmatprep.subr.mxu0 %v32
  %109 = vmatpush1.msra.mxu0 %v31
  %110 = vmatprep.subr.mxu0 %v40
  %111 = vmatpush1.msra.mxu0 %v39
  %112 = vmatprep.subr.mxu0 0.0
  %113 = vmatpush1.msra.mxu0 0.0
  %114 = vmatprep.subr.mxu0 0.0
  %115 = vmatpush1.msra.mxu0 0.0
  %116 = vmatprep.subr.mxu0 0.0
  %117 = vmatpush1.msra.mxu0 0.0
  %118 = vmatprep.subr.mxu0 0.0
  %119 = vmatpush1.msra.mxu0 0.0
  %120 = vmatprep.subr.mxu0 0.0
  %121 = vmatpush1.msra.mxu0 0.0
  %122 = vmatprep.subr.mxu0 0.0
  %123 = vmatpush1.msra.mxu0 0.0
  %124 = vmatprep.subr.mxu0 0.0
  %125 = vmatpush1.msra.mxu0 0.0
  %126 = vmatprep.subr.mxu0 0.0
  %127 = vmatpush1.msra.mxu0 0.0
  %128 = vmatprep.subr.mxu0 0.0
  %129 = vmatpush1.msra.mxu0 0.0
  %130 = vmatprep.subr.mxu0 0.0
  %131 = vmatpush1.msra.mxu0 0.0
  %132 = vmatprep.subr.mxu0 0.0
  %133 = vmatpush1.msra.mxu0 0.0
  %134 = vmatprep.subr.mxu0 0.0
  %135 = vmatpush1.msra.mxu0 0.0
  %136 = vmatprep.subr.mxu0 0.0
  %137 = vmatpush1.msra.mxu0 0.0
  %138 = vmatprep.subr.mxu0 0.0
  %139 = vmatpush1.msra.mxu0 0.0
  %140 = vmatprep.subr.mxu0 0.0
  %141 = vmatpush1.msra.mxu0 0.0
  %142 = vmatprep.subr.mxu0 0.0
  %143 = vmatpush1.msra.mxu0 0.0
  %144 = vmatprep.subr.mxu0 0.0
  %145 = vmatpush1.msra.mxu0 0.0
  %146 = vmatprep.subr.mxu0 0.0
  %147 = vmatpush1.msra.mxu0 0.0
  %148 = vmatprep.subr.mxu0 0.0
  %149 = vmatpush1.msra.mxu0 0.0
  %150 = vmatprep.subr.mxu0 0.0
  %151 = vmatpush1.msra.mxu0 0.0
  %152 = vmatprep.subr.mxu0 0.0
  %153 = vmatpush1.msra.mxu0 0.0
  %154 = vmatprep.subr.mxu0 0.0
  %155 = vmatpush1.msra.mxu0 0.0
  %156 = vmatprep.subr.mxu0 0.0
  %157 = vmatpush1.msra.mxu0 0.0
  %158 = vmatprep.subr.mxu0 0.0
  %159 = vmatpush1.msra.mxu0 0.0
  %160 = vmatprep.subr.mxu0 0.0
  %161 = vmatpush1.msra.mxu0 0.0
  %162 = vmatprep.subr.mxu0 0.0
  %163 = vmatpush1.msra.mxu0 0.0
  %164 = vmatprep.subr.mxu0 0.0
  %165 = vmatpush1.msra.mxu0 0.0
  %166 = vmatprep.subr.mxu0 0.0
  %167 = vmatpush1.msra.mxu0 0.0
  %168 = vmatprep.subr.mxu0 0.0
  %169 = vmatpush1.msra.mxu0 0.0
  %170 = vmatprep.subr.mxu0 0.0
  %171 = vmatpush1.msra.mxu0 0.0
  %172 = vmatprep.mubr.f32.mxu0 0.0
  %173 = vmatmul.mubr.f32.gmra.mrb[0].mxu0 %v91
  %v174 = vpop.f32.mrb[0].mxu0
  %v175 = vadd.f32 %v62, %v174
  %v176 = vpop.f32.mrb[0].mxu0
  %v177 = vadd.f32 %v62, %v176
  %178 = vmatprep.mubr.f32.mxu0 0.0
  %179 = vmatmul.mubr.f32.gmra.mrb[0].mxu0 %v94
  %v180 = vpop.f32.mrb[0].mxu0
  %v181 = vadd.f32 %v67, %v180
  %v182 = vpop.f32.mrb[0].mxu0
  %v183 = vadd.f32 %v67, %v182
  %184 = vmatprep.mubr.f32.mxu0 0.0
  %185 = vmatmul.mubr.f32.gmra.mrb[0].mxu0 %v97
  %v186 = vpop.f32.mrb[0].mxu0
  %v187 = vadd.f32 %v72, %v186
  %v188 = vpop.f32.mrb[0].mxu0
  %v189 = vadd.f32 %v72, %v188
  %190 = vmatprep.mubr.f32.mxu0 0.0
  %191 = vmatmul.mubr.f32.gmra.mrb[0].mxu0 %v100
  %v192 = vpop.f32.mrb[0].mxu0
  %v193 = vadd.f32 %v77, %v192
  %v194 = vpop.f32.mrb[0].mxu0
  %v195 = vadd.f32 %v77, %v194
  %196 = vmatprep.mubr.f32.mxu0 0.0
  %197 = vmatmul.mubr.f32.gmra.mrb[0].mxu0 %v103
  %v198 = vpop.f32.mrb[0].mxu0
  %v199 = vadd.f32 %v82, %v198
  %v200 = vpop.f32.mrb[0].mxu0
  %v201 = vadd.f32 %v82, %v200
  %202 = vmatprep.mubr.f32.mxu0 0.0
  %203 = vmatmul.mubr.f32.gmra.mrb[0].mxu0 %v106
  %v204 = vpop.f32.mrb[0].mxu0
  %v205 = vadd.f32 %v87, %v204
  %v206 = vpop.f32.mrb[0].mxu0
  %v207 = vadd.f32 %v87, %v206
  %208 = vdwg.mxu0
  %209 = vmatprep.subr.mxu0 %v34
  %210 = vmatpush1.msra.mxu0 %v33
  %211 = vmatprep.subr.mxu0 %v42
  %212 = vmatpush1.msra.mxu0 %v41
  %213 = vmatprep.subr.mxu0 0.0
  %214 = vmatpush1.msra.mxu0 0.0
  %215 = vmatprep.subr.mxu0 0.0
  %216 = vmatpush1.msra.mxu0 0.0
  %217 = vmatprep.subr.mxu0 0.0
  %218 = vmatpush1.msra.mxu0 0.0
  %219 = vmatprep.subr.mxu0 0.0
  %220 = vmatpush1.msra.mxu0 0.0
  %221 = vmatprep.subr.mxu0 0.0
  %222 = vmatpush1.msra.mxu0 0.0
  %223 = vmatprep.subr.mxu0 0.0
  %224 = vmatpush1.msra.mxu0 0.0
  %225 = vmatprep.subr.mxu0 0.0
  %226 = vmatpush1.msra.mxu0 0.0
  %227 = vmatprep.subr.mxu0 0.0
  %228 = vmatpush1.msra.mxu0 0.0
  %229 = vmatprep.subr.mxu0 0.0
  %230 = vmatpush1.msra.mxu0 0.0
  %231 = vmatprep.subr.mxu0 0.0
  %232 = vmatpush1.msra.mxu0 0.0
  %233 = vmatprep.subr.mxu0 0.0
  %234 = vmatpush1.msra.mxu0 0.0
  %235 = vmatprep.subr.mxu0 0.0
  %236 = vmatpush1.msra.mxu0 0.0
  %237 = vmatprep.subr.mxu0 0.0
  %238 = vmatpush1.msra.mxu0 0.0
  %239 = vmatprep.subr.mxu0 0.0
  %240 = vmatpush1.msra.mxu0 0.0
  %241 = vmatprep.subr.mxu0 0.0
  %242 = vmatpush1.msra.mxu0 0.0
  %243 = vmatprep.subr.mxu0 0.0
  %244 = vmatpush1.msra.mxu0 0.0
  %245 = vmatprep.subr.mxu0 0.0
  %246 = vmatpush1.msra.mxu0 0.0
  %247 = vmatprep.subr.mxu0 0.0
  %248 = vmatpush1.msra.mxu0 0.0
  %249 = vmatprep.subr.mxu0 0.0
  %250 = vmatpush1.msra.mxu0 0.0
  %251 = vmatprep.subr.mxu0 0.0
  %252 = vmatpush1.msra.mxu0 0.0
  %253 = vmatprep.subr.mxu0 0.0
  %254 = vmatpush1.msra.mxu0 0.0
  %255 = vmatprep.subr.mxu0 0.0
  %256 = vmatpush1.msra.mxu0 0.0
  %257 = vmatprep.subr.mxu0 0.0
  %258 = vmatpush1.msra.mxu0 0.0
  %259 = vmatprep.subr.mxu0 0.0
  %260 = vmatpush1.msra.mxu0 0.0
  %261 = vmatprep.subr.mxu0 0.0
  %262 = vmatpush1.msra.mxu0 0.0
  %263 = vmatprep.subr.mxu0 0.0
  %264 = vmatpush1.msra.mxu0 0.0
  %265 = vmatprep.subr.mxu0 0.0
  %266 = vmatpush1.msra.mxu0 0.0
  %267 = vmatprep.subr.mxu0 0.0
  %268 = vmatpush1.msra.mxu0 0.0
  %269 = vmatprep.subr.mxu0 0.0
  %270 = vmatpush1.msra.mxu0 0.0
  %271 = vmatprep.subr.mxu0 0.0
  %272 = vmatpush1.msra.mxu0 0.0
  %273 = vmatprep.mubr.f32.mxu0 0.0
  %274 = vmatmul.mubr.f32.gmra.mrb[0].mxu0 %v91
  %v275 = vpop.f32.mrb[0].mxu0
  %v276 = vadd.f32 %v62, %v275
  %v277 = vpop.f32.mrb[0].mxu0
  %v278 = vadd.f32 %v62, %v277
  %279 = vmatprep.mubr.f32.mxu0 0.0
  %280 = vmatmul.mubr.f32.gmra.mrb[0].mxu0 %v94
  %v281 = vpop.f32.mrb[0].mxu0
  %v282 = vadd.f32 %v67, %v281
  %v283 = vpop.f32.mrb[0].mxu0
  %v284 = vadd.f32 %v67, %v283
  %285 = vmatprep.mubr.f32.mxu0 0.0
  %286 = vmatmul.mubr.f32.gmra.mrb[0].mxu0 %v97
  %v287 = vpop.f32.mrb[0].mxu0
  %v288 = vadd.f32 %v72, %v287
  %v289 = vpop.f32.mrb[0].mxu0
  %v290 = vadd.f32 %v72, %v289
  %291 = vmatprep.mubr.f32.mxu0 0.0
  %292 = vmatmul.mubr.f32.gmra.mrb[0].mxu0 %v100
  %v293 = vpop.f32.mrb[0].mxu0
  %v294 = vadd.f32 %v77, %v293
  %v295 = vpop.f32.mrb[0].mxu0
  %v296 = vadd.f32 %v77, %v295
  %297 = vmatprep.mubr.f32.mxu0 0.0
  %298 = vmatmul.mubr.f32.gmra.mrb[0].mxu0 %v103
  %v299 = vpop.f32.mrb[0].mxu0
  %v300 = vadd.f32 %v82, %v299
  %v301 = vpop.f32.mrb[0].mxu0
  %v302 = vadd.f32 %v82, %v301
  %303 = vmatprep.mubr.f32.mxu0 0.0
  %304 = vmatmul.mubr.f32.gmra.mrb[0].mxu0 %v106
  %v305 = vpop.f32.mrb[0].mxu0
  %v306 = vadd.f32 %v87, %v305
  %v307 = vpop.f32.mrb[0].mxu0
  %v308 = vadd.f32 %v87, %v307
  %309 = vdwg.mxu0
  %310 = vmatprep.subr.mxu0 %v36
  %311 = vmatpush1.msra.mxu0 %v35
  %312 = vmatprep.subr.mxu0 %v44
  %313 = vmatpush1.msra.mxu0 %v43
  %314 = vmatprep.subr.mxu0 0.0
  %315 = vmatpush1.msra.mxu0 0.0
  %316 = vmatprep.subr.mxu0 0.0
  %317 = vmatpush1.msra.mxu0 0.0
  %318 = vmatprep.subr.mxu0 0.0
  %319 = vmatpush1.msra.mxu0 0.0
  %320 = vmatprep.subr.mxu0 0.0
  %321 = vmatpush1.msra.mxu0 0.0
  %322 = vmatprep.subr.mxu0 0.0
  %323 = vmatpush1.msra.mxu0 0.0
  %324 = vmatprep.subr.mxu0 0.0
  %325 = vmatpush1.msra.mxu0 0.0
  %326 = vmatprep.subr.mxu0 0.0
  %327 = vmatpush1.msra.mxu0 0.0
  %328 = vmatprep.subr.mxu0 0.0
  %329 = vmatpush1.msra.mxu0 0.0
  %330 = vmatprep.subr.mxu0 0.0
  %331 = vmatpush1.msra.mxu0 0.0
  %332 = vmatprep.subr.mxu0 0.0
  %333 = vmatpush1.msra.mxu0 0.0
  %334 = vmatprep.subr.mxu0 0.0
  %335 = vmatpush1.msra.mxu0 0.0
  %336 = vmatprep.subr.mxu0 0.0
  %337 = vmatpush1.msra.mxu0 0.0
  %338 = vmatprep.subr.mxu0 0.0
  %339 = vmatpush1.msra.mxu0 0.0
  %340 = vmatprep.subr.mxu0 0.0
  %341 = vmatpush1.msra.mxu0 0.0
  %342 = vmatprep.subr.mxu0 0.0
  %343 = vmatpush1.msra.mxu0 0.0
  %344 = vmatprep.subr.mxu0 0.0
  %345 = vmatpush1.msra.mxu0 0.0
  %346 = vmatprep.subr.mxu0 0.0
  %347 = vmatpush1.msra.mxu0 0.0
  %348 = vmatprep.subr.mxu0 0.0
  %349 = vmatpush1.msra.mxu0 0.0
  %350 = vmatprep.subr.mxu0 0.0
  %351 = vmatpush1.msra.mxu0 0.0
  %352 = vmatprep.subr.mxu0 0.0
  %353 = vmatpush1.msra.mxu0 0.0
  %354 = vmatprep.subr.mxu0 0.0
  %355 = vmatpush1.msra.mxu0 0.0
  %356 = vmatprep.subr.mxu0 0.0
  %357 = vmatpush1.msra.mxu0 0.0
  %358 = vmatprep.subr.mxu0 0.0
  %359 = vmatpush1.msra.mxu0 0.0
  %360 = vmatprep.subr.mxu0 0.0
  %361 = vmatpush1.msra.mxu0 0.0
  %362 = vmatprep.subr.mxu0 0.0
  %363 = vmatpush1.msra.mxu0 0.0
  %364 = vmatprep.subr.mxu0 0.0
  %365 = vmatpush1.msra.mxu0 0.0
  %366 = vmatprep.subr.mxu0 0.0
  %367 = vmatpush1.msra.mxu0 0.0
  %368 = vmatprep.subr.mxu0 0.0
  %369 = vmatpush1.msra.mxu0 0.0
  %370 = vmatprep.subr.mxu0 0.0
  %371 = vmatpush1.msra.mxu0 0.0
  %372 = vmatprep.subr.mxu0 0.0
  %373 = vmatpush1.msra.mxu0 0.0
  %374 = vmatprep.mubr.f32.mxu0 0.0
  %375 = vmatmul.mubr.f32.gmra.mrb[0].mxu0 %v91
  %v376 = vpop.f32.mrb[0].mxu0
  %v377 = vadd.f32 %v62, %v376
  %v378 = vpop.f32.mrb[0].mxu0
  %v379 = vadd.f32 %v62, %v378
  %380 = vmatprep.mubr.f32.mxu0 0.0
  %381 = vmatmul.mubr.f32.gmra.mrb[0].mxu0 %v94
  %v382 = vpop.f32.mrb[0].mxu0
  %v383 = vadd.f32 %v67, %v382
  %v384 = vpop.f32.mrb[0].mxu0
  %v385 = vadd.f32 %v67, %v384
  %386 = vmatprep.mubr.f32.mxu0 0.0
  %387 = vmatmul.mubr.f32.gmra.mrb[0].mxu0 %v97
  %v388 = vpop.f32.mrb[0].mxu0
  %v389 = vadd.f32 %v72, %v388
  %v390 = vpop.f32.mrb[0].mxu0
  %v391 = vadd.f32 %v72, %v390
  %392 = vmatprep.mubr.f32.mxu0 0.0
  %393 = vmatmul.mubr.f32.gmra.mrb[0].mxu0 %v100
  %v394 = vpop.f32.mrb[0].mxu0
  %v395 = vadd.f32 %v77, %v394
  %v396 = vpop.f32.mrb[0].mxu0
  %v397 = vadd.f32 %v77, %v396
  %398 = vmatprep.mubr.f32.mxu0 0.0
  %399 = vmatmul.mubr.f32.gmra.mrb[0].mxu0 %v103
  %v400 = vpop.f32.mrb[0].mxu0
  %v401 = vadd.f32 %v82, %v400
  %v402 = vpop.f32.mrb[0].mxu0
  %v403 = vadd.f32 %v82, %v402
  %404 = vmatprep.mubr.f32.mxu0 0.0
  %405 = vmatmul.mubr.f32.gmra.mrb[0].mxu0 %v106
  %v406 = vpop.f32.mrb[0].mxu0
  %v407 = vadd.f32 %v87, %v406
  %v408 = vpop.f32.mrb[0].mxu0
  %v409 = vadd.f32 %v87, %v408
  %410 = vdwg.mxu0
  %411 = vmatprep.subr.mxu0 %v38
  %412 = vmatpush1.msra.mxu0 %v37
  %413 = vmatprep.subr.mxu0 %v46
  %414 = vmatpush1.msra.mxu0 %v45
  %415 = vmatprep.subr.mxu0 0.0
  %416 = vmatpush1.msra.mxu0 0.0
  %417 = vmatprep.subr.mxu0 0.0
  %418 = vmatpush1.msra.mxu0 0.0
  %419 = vmatprep.subr.mxu0 0.0
  %420 = vmatpush1.msra.mxu0 0.0
  %421 = vmatprep.subr.mxu0 0.0
  %422 = vmatpush1.msra.mxu0 0.0
  %423 = vmatprep.subr.mxu0 0.0
  %424 = vmatpush1.msra.mxu0 0.0
  %425 = vmatprep.subr.mxu0 0.0
  %426 = vmatpush1.msra.mxu0 0.0
  %427 = vmatprep.subr.mxu0 0.0
  %428 = vmatpush1.msra.mxu0 0.0
  %429 = vmatprep.subr.mxu0 0.0
  %430 = vmatpush1.msra.mxu0 0.0
  %431 = vmatprep.subr.mxu0 0.0
  %432 = vmatpush1.msra.mxu0 0.0
  %433 = vmatprep.subr.mxu0 0.0
  %434 = vmatpush1.msra.mxu0 0.0
  %435 = vmatprep.subr.mxu0 0.0
  %436 = vmatpush1.msra.mxu0 0.0
  %437 = vmatprep.subr.mxu0 0.0
  %438 = vmatpush1.msra.mxu0 0.0
  %439 = vmatprep.subr.mxu0 0.0
  %440 = vmatpush1.msra.mxu0 0.0
  %441 = vmatprep.subr.mxu0 0.0
  %442 = vmatpush1.msra.mxu0 0.0
  %443 = vmatprep.subr.mxu0 0.0
  %444 = vmatpush1.msra.mxu0 0.0
  %445 = vmatprep.subr.mxu0 0.0
  %446 = vmatpush1.msra.mxu0 0.0
  %447 = vmatprep.subr.mxu0 0.0
  %448 = vmatpush1.msra.mxu0 0.0
  %449 = vmatprep.subr.mxu0 0.0
  %450 = vmatpush1.msra.mxu0 0.0
  %451 = vmatprep.subr.mxu0 0.0
  %452 = vmatpush1.msra.mxu0 0.0
  %453 = vmatprep.subr.mxu0 0.0
  %454 = vmatpush1.msra.mxu0 0.0
  %455 = vmatprep.subr.mxu0 0.0
  %456 = vmatpush1.msra.mxu0 0.0
  %457 = vmatprep.subr.mxu0 0.0
  %458 = vmatpush1.msra.mxu0 0.0
  %459 = vmatprep.subr.mxu0 0.0
  %460 = vmatpush1.msra.mxu0 0.0
  %461 = vmatprep.subr.mxu0 0.0
  %462 = vmatpush1.msra.mxu0 0.0
  %463 = vmatprep.subr.mxu0 0.0
  %464 = vmatpush1.msra.mxu0 0.0
  %465 = vmatprep.subr.mxu0 0.0
  %466 = vmatpush1.msra.mxu0 0.0
  %467 = vmatprep.subr.mxu0 0.0
  %468 = vmatpush1.msra.mxu0 0.0
  %469 = vmatprep.subr.mxu0 0.0
  %470 = vmatpush1.msra.mxu0 0.0
  %471 = vmatprep.subr.mxu0 0.0
  %472 = vmatpush1.msra.mxu0 0.0
  %473 = vmatprep.subr.mxu0 0.0
  %474 = vmatpush1.msra.mxu0 0.0
  %475 = vmatprep.mubr.f32.mxu0 0.0
  %476 = vmatmul.mubr.f32.gmra.mrb[0].mxu0 %v91
  %v477 = vpop.f32.mrb[0].mxu0
  %v478 = vadd.f32 %v62, %v477
  %v479 = vpop.f32.mrb[0].mxu0
  %v480 = vadd.f32 %v62, %v479
  %481 = vmatprep.mubr.f32.mxu0 0.0
  %482 = vmatmul.mubr.f32.gmra.mrb[0].mxu0 %v94
  %v483 = vpop.f32.mrb[0].mxu0
  %v484 = vadd.f32 %v67, %v483
  %v485 = vpop.f32.mrb[0].mxu0
  %v486 = vadd.f32 %v67, %v485
  %487 = vmatprep.mubr.f32.mxu0 0.0
  %488 = vmatmul.mubr.f32.gmra.mrb[0].mxu0 %v97
  %v489 = vpop.f32.mrb[0].mxu0
  %v490 = vadd.f32 %v72, %v489
  %v491 = vpop.f32.mrb[0].mxu0
  %v492 = vadd.f32 %v72, %v491
  %493 = vmatprep.mubr.f32.mxu0 0.0
  %494 = vmatmul.mubr.f32.gmra.mrb[0].mxu0 %v100
  %v495 = vpop.f32.mrb[0].mxu0
  %v496 = vadd.f32 %v77, %v495
  %v497 = vpop.f32.mrb[0].mxu0
  %v498 = vadd.f32 %v77, %v497
  %499 = vmatprep.mubr.f32.mxu0 0.0
  %500 = vmatmul.mubr.f32.gmra.mrb[0].mxu0 %v103
  %v501 = vpop.f32.mrb[0].mxu0
  %v502 = vadd.f32 %v82, %v501
  %v503 = vpop.f32.mrb[0].mxu0
  %v504 = vadd.f32 %v82, %v503
  %505 = vmatprep.mubr.f32.mxu0 0.0
  %506 = vmatmul.mubr.f32.gmra.mrb[0].mxu0 %v106
  %v507 = vpop.f32.mrb[0].mxu0
  %v508 = vadd.f32 %v87, %v507
  %v509 = vpop.f32.mrb[0].mxu0
  %v510 = vadd.f32 %v87, %v509
  %511 = vdwg.mxu0
  %v512 = vadd.f32 %v23, %v175
  %v513 = vadd.f32 %v24, %v177
  %v514 = vadd.f32 %v25, %v276
  %v515 = vadd.f32 %v26, %v278
  %v516 = vadd.f32 %v27, %v377
  %v517 = vadd.f32 %v28, %v379
  %v518 = vadd.f32 %v29, %v478
  %v519 = vadd.f32 %v30, %v480
  %v520 = vld [vmem:[%s4] sm:$0xff]
  %v521 = vld [vmem:[%s5] sm:$0xff]
  %523 = vset.pattern.permute.xlu0 0
  %524 = vperm.xlu0 %523, %v521
  %v525 = vpop.permute.xlu0 %524
  %vm527 = vcmask 64512
  %v529 = vsel %vm527, %v520, 0
  %531 = vmatprep.subr.mxu0 %v513
  %532 = vmatpush1.msra.mxu0 %v512
  %533 = vmatprep.subr.mxu0 0.0
  %534 = vmatpush1.msra.mxu0 0.0
  %535 = vmatprep.subr.mxu0 0.0
  %536 = vmatpush1.msra.mxu0 0.0
  %537 = vmatprep.subr.mxu0 0.0
  %538 = vmatpush1.msra.mxu0 0.0
  %539 = vmatprep.subr.mxu0 0.0
  %540 = vmatpush1.msra.mxu0 0.0
  %541 = vmatprep.subr.mxu0 0.0
  %542 = vmatpush1.msra.mxu0 0.0
  %543 = vmatprep.subr.mxu0 0.0
  %544 = vmatpush1.msra.mxu0 0.0
  %545 = vmatprep.subr.mxu0 0.0
  %546 = vmatpush1.msra.mxu0 0.0
  %547 = vmatprep.subr.mxu0 0.0
  %548 = vmatpush1.msra.mxu0 0.0
  %549 = vmatprep.subr.mxu0 0.0
  %550 = vmatpush1.msra.mxu0 0.0
  %551 = vmatprep.subr.mxu0 0.0
  %552 = vmatpush1.msra.mxu0 0.0
  %553 = vmatprep.subr.mxu0 0.0
  %554 = vmatpush1.msra.mxu0 0.0
  %555 = vmatprep.subr.mxu0 0.0
  %556 = vmatpush1.msra.mxu0 0.0
  %557 = vmatprep.subr.mxu0 0.0
  %558 = vmatpush1.msra.mxu0 0.0
  %559 = vmatprep.subr.mxu0 0.0
  %560 = vmatpush1.msra.mxu0 0.0
  %561 = vmatprep.subr.mxu0 0.0
  %562 = vmatpush1.msra.mxu0 0.0
  %563 = vmatprep.subr.mxu0 0.0
  %564 = vmatpush1.msra.mxu0 0.0
  %565 = vmatprep.subr.mxu0 0.0
  %566 = vmatpush1.msra.mxu0 0.0
  %567 = vmatprep.subr.mxu0 0.0
  %568 = vmatpush1.msra.mxu0 0.0
  %569 = vmatprep.subr.mxu0 0.0
  %570 = vmatpush1.msra.mxu0 0.0
  %571 = vmatprep.subr.mxu0 0.0
  %572 = vmatpush1.msra.mxu0 0.0
  %573 = vmatprep.subr.mxu0 0.0
  %574 = vmatpush1.msra.mxu0 0.0
  %575 = vmatprep.subr.mxu0 0.0
  %576 = vmatpush1.msra.mxu0 0.0
  %577 = vmatprep.subr.mxu0 0.0
  %578 = vmatpush1.msra.mxu0 0.0
  %579 = vmatprep.subr.mxu0 0.0
  %580 = vmatpush1.msra.mxu0 0.0
  %581 = vmatprep.subr.mxu0 0.0
  %582 = vmatpush1.msra.mxu0 0.0
  %583 = vmatprep.subr.mxu0 0.0
  %584 = vmatpush1.msra.mxu0 0.0
  %585 = vmatprep.subr.mxu0 0.0
  %586 = vmatpush1.msra.mxu0 0.0
  %587 = vmatprep.subr.mxu0 0.0
  %588 = vmatpush1.msra.mxu0 0.0
  %589 = vmatprep.subr.mxu0 0.0
  %590 = vmatpush1.msra.mxu0 0.0
  %591 = vmatprep.subr.mxu0 0.0
  %592 = vmatpush1.msra.mxu0 0.0
  %593 = vmatprep.subr.mxu0 0.0
  %594 = vmatpush1.msra.mxu0 0.0
  %595 = vmatprep.mubr.f32.mxu0 0.0
  %596 = vmatmul.mubr.f32.gmra.mrb[0].mxu0 %v529
  %v597 = vpop.f32.mrb[0].mxu0
  %v598 = vadd.f32 %v525, %v597
  %v599 = vpop.f32.mrb[0].mxu0
  %v600 = vadd.f32 %v525, %v599
  %601 = vdwg.mxu0
  %602 = vmatprep.subr.mxu0 %v515
  %603 = vmatpush1.msra.mxu0 %v514
  %604 = vmatprep.subr.mxu0 0.0
  %605 = vmatpush1.msra.mxu0 0.0
  %606 = vmatprep.subr.mxu0 0.0
  %607 = vmatpush1.msra.mxu0 0.0
  %608 = vmatprep.subr.mxu0 0.0
  %609 = vmatpush1.msra.mxu0 0.0
  %610 = vmatprep.subr.mxu0 0.0
  %611 = vmatpush1.msra.mxu0 0.0
  %612 = vmatprep.subr.mxu0 0.0
  %613 = vmatpush1.msra.mxu0 0.0
  %614 = vmatprep.subr.mxu0 0.0
  %615 = vmatpush1.msra.mxu0 0.0
  %616 = vmatprep.subr.mxu0 0.0
  %617 = vmatpush1.msra.mxu0 0.0
  %618 = vmatprep.subr.mxu0 0.0
  %619 = vmatpush1.msra.mxu0 0.0
  %620 = vmatprep.subr.mxu0 0.0
  %621 = vmatpush1.msra.mxu0 0.0
  %622 = vmatprep.subr.mxu0 0.0
  %623 = vmatpush1.msra.mxu0 0.0
  %624 = vmatprep.subr.mxu0 0.0
  %625 = vmatpush1.msra.mxu0 0.0
  %626 = vmatprep.subr.mxu0 0.0
  %627 = vmatpush1.msra.mxu0 0.0
  %628 = vmatprep.subr.mxu0 0.0
  %629 = vmatpush1.msra.mxu0 0.0
  %630 = vmatprep.subr.mxu0 0.0
  %631 = vmatpush1.msra.mxu0 0.0
  %632 = vmatprep.subr.mxu0 0.0
  %633 = vmatpush1.msra.mxu0 0.0
  %634 = vmatprep.subr.mxu0 0.0
  %635 = vmatpush1.msra.mxu0 0.0
  %636 = vmatprep.subr.mxu0 0.0
  %637 = vmatpush1.msra.mxu0 0.0
  %638 = vmatprep.subr.mxu0 0.0
  %639 = vmatpush1.msra.mxu0 0.0
  %640 = vmatprep.subr.mxu0 0.0
  %641 = vmatpush1.msra.mxu0 0.0
  %642 = vmatprep.subr.mxu0 0.0
  %643 = vmatpush1.msra.mxu0 0.0
  %644 = vmatprep.subr.mxu0 0.0
  %645 = vmatpush1.msra.mxu0 0.0
  %646 = vmatprep.subr.mxu0 0.0
  %647 = vmatpush1.msra.mxu0 0.0
  %648 = vmatprep.subr.mxu0 0.0
  %649 = vmatpush1.msra.mxu0 0.0
  %650 = vmatprep.subr.mxu0 0.0
  %651 = vmatpush1.msra.mxu0 0.0
  %652 = vmatprep.subr.mxu0 0.0
  %653 = vmatpush1.msra.mxu0 0.0
  %654 = vmatprep.subr.mxu0 0.0
  %655 = vmatpush1.msra.mxu0 0.0
  %656 = vmatprep.subr.mxu0 0.0
  %657 = vmatpush1.msra.mxu0 0.0
  %658 = vmatprep.subr.mxu0 0.0
  %659 = vmatpush1.msra.mxu0 0.0
  %660 = vmatprep.subr.mxu0 0.0
  %661 = vmatpush1.msra.mxu0 0.0
  %662 = vmatprep.subr.mxu0 0.0
  %663 = vmatpush1.msra.mxu0 0.0
  %664 = vmatprep.subr.mxu0 0.0
  %665 = vmatpush1.msra.mxu0 0.0
  %666 = vmatprep.mubr.f32.mxu0 0.0
  %667 = vmatmul.mubr.f32.gmra.mrb[0].mxu0 %v529
  %v668 = vpop.f32.mrb[0].mxu0
  %v669 = vadd.f32 %v525, %v668
  %v670 = vpop.f32.mrb[0].mxu0
  %v671 = vadd.f32 %v525, %v670
  %672 = vdwg.mxu0
  %673 = vmatprep.subr.mxu0 %v517
  %674 = vmatpush1.msra.mxu0 %v516
  %675 = vmatprep.subr.mxu0 0.0
  %676 = vmatpush1.msra.mxu0 0.0
  %677 = vmatprep.subr.mxu0 0.0
  %678 = vmatpush1.msra.mxu0 0.0
  %679 = vmatprep.subr.mxu0 0.0
  %680 = vmatpush1.msra.mxu0 0.0
  %681 = vmatprep.subr.mxu0 0.0
  %682 = vmatpush1.msra.mxu0 0.0
  %683 = vmatprep.subr.mxu0 0.0
  %684 = vmatpush1.msra.mxu0 0.0
  %685 = vmatprep.subr.mxu0 0.0
  %686 = vmatpush1.msra.mxu0 0.0
  %687 = vmatprep.subr.mxu0 0.0
  %688 = vmatpush1.msra.mxu0 0.0
  %689 = vmatprep.subr.mxu0 0.0
  %690 = vmatpush1.msra.mxu0 0.0
  %691 = vmatprep.subr.mxu0 0.0
  %692 = vmatpush1.msra.mxu0 0.0
  %693 = vmatprep.subr.mxu0 0.0
  %694 = vmatpush1.msra.mxu0 0.0
  %695 = vmatprep.subr.mxu0 0.0
  %696 = vmatpush1.msra.mxu0 0.0
  %697 = vmatprep.subr.mxu0 0.0
  %698 = vmatpush1.msra.mxu0 0.0
  %699 = vmatprep.subr.mxu0 0.0
  %700 = vmatpush1.msra.mxu0 0.0
  %701 = vmatprep.subr.mxu0 0.0
  %702 = vmatpush1.msra.mxu0 0.0
  %703 = vmatprep.subr.mxu0 0.0
  %704 = vmatpush1.msra.mxu0 0.0
  %705 = vmatprep.subr.mxu0 0.0
  %706 = vmatpush1.msra.mxu0 0.0
  %707 = vmatprep.subr.mxu0 0.0
  %708 = vmatpush1.msra.mxu0 0.0
  %709 = vmatprep.subr.mxu0 0.0
  %710 = vmatpush1.msra.mxu0 0.0
  %711 = vmatprep.subr.mxu0 0.0
  %712 = vmatpush1.msra.mxu0 0.0
  %713 = vmatprep.subr.mxu0 0.0
  %714 = vmatpush1.msra.mxu0 0.0
  %715 = vmatprep.subr.mxu0 0.0
  %716 = vmatpush1.msra.mxu0 0.0
  %717 = vmatprep.subr.mxu0 0.0
  %718 = vmatpush1.msra.mxu0 0.0
  %719 = vmatprep.subr.mxu0 0.0
  %720 = vmatpush1.msra.mxu0 0.0
  %721 = vmatprep.subr.mxu0 0.0
  %722 = vmatpush1.msra.mxu0 0.0
  %723 = vmatprep.subr.mxu0 0.0
  %724 = vmatpush1.msra.mxu0 0.0
  %725 = vmatprep.subr.mxu0 0.0
  %726 = vmatpush1.msra.mxu0 0.0
  %727 = vmatprep.subr.mxu0 0.0
  %728 = vmatpush1.msra.mxu0 0.0
  %729 = vmatprep.subr.mxu0 0.0
  %730 = vmatpush1.msra.mxu0 0.0
  %731 = vmatprep.subr.mxu0 0.0
  %732 = vmatpush1.msra.mxu0 0.0
  %733 = vmatprep.subr.mxu0 0.0
  %734 = vmatpush1.msra.mxu0 0.0
  %735 = vmatprep.subr.mxu0 0.0
  %736 = vmatpush1.msra.mxu0 0.0
  %737 = vmatprep.mubr.f32.mxu0 0.0
  %738 = vmatmul.mubr.f32.gmra.mrb[0].mxu0 %v529
  %v739 = vpop.f32.mrb[0].mxu0
  %v740 = vadd.f32 %v525, %v739
  %v741 = vpop.f32.mrb[0].mxu0
  %v742 = vadd.f32 %v525, %v741
  %743 = vdwg.mxu0
  %744 = vmatprep.subr.mxu0 %v519
  %745 = vmatpush1.msra.mxu0 %v518
  %746 = vmatprep.subr.mxu0 0.0
  %747 = vmatpush1.msra.mxu0 0.0
  %748 = vmatprep.subr.mxu0 0.0
  %749 = vmatpush1.msra.mxu0 0.0
  %750 = vmatprep.subr.mxu0 0.0
  %751 = vmatpush1.msra.mxu0 0.0
  %752 = vmatprep.subr.mxu0 0.0
  %753 = vmatpush1.msra.mxu0 0.0
  %754 = vmatprep.subr.mxu0 0.0
  %755 = vmatpush1.msra.mxu0 0.0
  %756 = vmatprep.subr.mxu0 0.0
  %757 = vmatpush1.msra.mxu0 0.0
  %758 = vmatprep.subr.mxu0 0.0
  %759 = vmatpush1.msra.mxu0 0.0
  %760 = vmatprep.subr.mxu0 0.0
  %761 = vmatpush1.msra.mxu0 0.0
  %762 = vmatprep.subr.mxu0 0.0
  %763 = vmatpush1.msra.mxu0 0.0
  %764 = vmatprep.subr.mxu0 0.0
  %765 = vmatpush1.msra.mxu0 0.0
  %766 = vmatprep.subr.mxu0 0.0
  %767 = vmatpush1.msra.mxu0 0.0
  %768 = vmatprep.subr.mxu0 0.0
  %769 = vmatpush1.msra.mxu0 0.0
  %770 = vmatprep.subr.mxu0 0.0
  %771 = vmatpush1.msra.mxu0 0.0
  %772 = vmatprep.subr.mxu0 0.0
  %773 = vmatpush1.msra.mxu0 0.0
  %774 = vmatprep.subr.mxu0 0.0
  %775 = vmatpush1.msra.mxu0 0.0
  %776 = vmatprep.subr.mxu0 0.0
  %777 = vmatpush1.msra.mxu0 0.0
  %778 = vmatprep.subr.mxu0 0.0
  %779 = vmatpush1.msra.mxu0 0.0
  %780 = vmatprep.subr.mxu0 0.0
  %781 = vmatpush1.msra.mxu0 0.0
  %782 = vmatprep.subr.mxu0 0.0
  %783 = vmatpush1.msra.mxu0 0.0
  %784 = vmatprep.subr.mxu0 0.0
  %785 = vmatpush1.msra.mxu0 0.0
  %786 = vmatprep.subr.mxu0 0.0
  %787 = vmatpush1.msra.mxu0 0.0
  %788 = vmatprep.subr.mxu0 0.0
  %789 = vmatpush1.msra.mxu0 0.0
  %790 = vmatprep.subr.mxu0 0.0
  %791 = vmatpush1.msra.mxu0 0.0
  %792 = vmatprep.subr.mxu0 0.0
  %793 = vmatpush1.msra.mxu0 0.0
  %794 = vmatprep.subr.mxu0 0.0
  %795 = vmatpush1.msra.mxu0 0.0
  %796 = vmatprep.subr.mxu0 0.0
  %797 = vmatpush1.msra.mxu0 0.0
  %798 = vmatprep.subr.mxu0 0.0
  %799 = vmatpush1.msra.mxu0 0.0
  %800 = vmatprep.subr.mxu0 0.0
  %801 = vmatpush1.msra.mxu0 0.0
  %802 = vmatprep.subr.mxu0 0.0
  %803 = vmatpush1.msra.mxu0 0.0
  %804 = vmatprep.subr.mxu0 0.0
  %805 = vmatpush1.msra.mxu0 0.0
  %806 = vmatprep.subr.mxu0 0.0
  %807 = vmatpush1.msra.mxu0 0.0
  %808 = vmatprep.mubr.f32.mxu0 0.0
  %809 = vmatmul.mubr.f32.gmra.mrb[0].mxu0 %v529
  %v810 = vpop.f32.mrb[0].mxu0
  %v811 = vadd.f32 %v525, %v810
  %v812 = vpop.f32.mrb[0].mxu0
  %v813 = vadd.f32 %v525, %v812
  %814 = vdwg.mxu0
  %v815 = vmax.f32 %v598, 0.0
  %v816 = vmax.f32 %v600, 0.0
  %v817 = vmax.f32 %v669, 0.0
  %v818 = vmax.f32 %v671, 0.0
  %v819 = vmax.f32 %v740, 0.0
  %v820 = vmax.f32 %v742, 0.0
  %v821 = vmax.f32 %v811, 0.0
  %v822 = vmax.f32 %v813, 0.0
  %s823 = scalar_lea.vmem %s4, 16
  %v824 = vld [vmem:[%s823] sm:$0xff]
  %s825 = scalar_lea.vmem %s5, 16
  %v826 = vld [vmem:[%s825] sm:$0xff]
  %828 = vset.pattern.permute.xlu0 0
  %829 = vperm.xlu0 %828, %v826
  %v830 = vpop.permute.xlu0 %829
  %v833 = vsel %vm527, %v824, 0
  %835 = vmatprep.subr.mxu0 %v816
  %836 = vmatpush1.msra.mxu0 %v815
  %837 = vmatprep.subr.mxu0 0.0
  %838 = vmatpush1.msra.mxu0 0.0
  %839 = vmatprep.subr.mxu0 0.0
  %840 = vmatpush1.msra.mxu0 0.0
  %841 = vmatprep.subr.mxu0 0.0
  %842 = vmatpush1.msra.mxu0 0.0
  %843 = vmatprep.subr.mxu0 0.0
  %844 = vmatpush1.msra.mxu0 0.0
  %845 = vmatprep.subr.mxu0 0.0
  %846 = vmatpush1.msra.mxu0 0.0
  %847 = vmatprep.subr.mxu0 0.0
  %848 = vmatpush1.msra.mxu0 0.0
  %849 = vmatprep.subr.mxu0 0.0
  %850 = vmatpush1.msra.mxu0 0.0
  %851 = vmatprep.subr.mxu0 0.0
  %852 = vmatpush1.msra.mxu0 0.0
  %853 = vmatprep.subr.mxu0 0.0
  %854 = vmatpush1.msra.mxu0 0.0
  %855 = vmatprep.subr.mxu0 0.0
  %856 = vmatpush1.msra.mxu0 0.0
  %857 = vmatprep.subr.mxu0 0.0
  %858 = vmatpush1.msra.mxu0 0.0
  %859 = vmatprep.subr.mxu0 0.0
  %860 = vmatpush1.msra.mxu0 0.0
  %861 = vmatprep.subr.mxu0 0.0
  %862 = vmatpush1.msra.mxu0 0.0
  %863 = vmatprep.subr.mxu0 0.0
  %864 = vmatpush1.msra.mxu0 0.0
  %865 = vmatprep.subr.mxu0 0.0
  %866 = vmatpush1.msra.mxu0 0.0
  %867 = vmatprep.subr.mxu0 0.0
  %868 = vmatpush1.msra.mxu0 0.0
  %869 = vmatprep.subr.mxu0 0.0
  %870 = vmatpush1.msra.mxu0 0.0
  %871 = vmatprep.subr.mxu0 0.0
  %872 = vmatpush1.msra.mxu0 0.0
  %873 = vmatprep.subr.mxu0 0.0
  %874 = vmatpush1.msra.mxu0 0.0
  %875 = vmatprep.subr.mxu0 0.0
  %876 = vmatpush1.msra.mxu0 0.0
  %877 = vmatprep.subr.mxu0 0.0
  %878 = vmatpush1.msra.mxu0 0.0
  %879 = vmatprep.subr.mxu0 0.0
  %880 = vmatpush1.msra.mxu0 0.0
  %881 = vmatprep.subr.mxu0 0.0
  %882 = vmatpush1.msra.mxu0 0.0
  %883 = vmatprep.subr.mxu0 0.0
  %884 = vmatpush1.msra.mxu0 0.0
  %885 = vmatprep.subr.mxu0 0.0
  %886 = vmatpush1.msra.mxu0 0.0
  %887 = vmatprep.subr.mxu0 0.0
  %888 = vmatpush1.msra.mxu0 0.0
  %889 = vmatprep.subr.mxu0 0.0
  %890 = vmatpush1.msra.mxu0 0.0
  %891 = vmatprep.subr.mxu0 0.0
  %892 = vmatpush1.msra.mxu0 0.0
  %893 = vmatprep.subr.mxu0 0.0
  %894 = vmatpush1.msra.mxu0 0.0
  %895 = vmatprep.subr.mxu0 0.0
  %896 = vmatpush1.msra.mxu0 0.0
  %897 = vmatprep.subr.mxu0 0.0
  %898 = vmatpush1.msra.mxu0 0.0
  %899 = vmatprep.mubr.f32.mxu0 0.0
  %900 = vmatmul.mubr.f32.gmra.mrb[0].mxu0 %v833
  %v901 = vpop.f32.mrb[0].mxu0
  %v902 = vadd.f32 %v830, %v901
  %v903 = vpop.f32.mrb[0].mxu0
  %v904 = vadd.f32 %v830, %v903
  %905 = vdwg.mxu0
  %906 = vmatprep.subr.mxu0 %v818
  %907 = vmatpush1.msra.mxu0 %v817
  %908 = vmatprep.subr.mxu0 0.0
  %909 = vmatpush1.msra.mxu0 0.0
  %910 = vmatprep.subr.mxu0 0.0
  %911 = vmatpush1.msra.mxu0 0.0
  %912 = vmatprep.subr.mxu0 0.0
  %913 = vmatpush1.msra.mxu0 0.0
  %914 = vmatprep.subr.mxu0 0.0
  %915 = vmatpush1.msra.mxu0 0.0
  %916 = vmatprep.subr.mxu0 0.0
  %917 = vmatpush1.msra.mxu0 0.0
  %918 = vmatprep.subr.mxu0 0.0
  %919 = vmatpush1.msra.mxu0 0.0
  %920 = vmatprep.subr.mxu0 0.0
  %921 = vmatpush1.msra.mxu0 0.0
  %922 = vmatprep.subr.mxu0 0.0
  %923 = vmatpush1.msra.mxu0 0.0
  %924 = vmatprep.subr.mxu0 0.0
  %925 = vmatpush1.msra.mxu0 0.0
  %926 = vmatprep.subr.mxu0 0.0
  %927 = vmatpush1.msra.mxu0 0.0
  %928 = vmatprep.subr.mxu0 0.0
  %929 = vmatpush1.msra.mxu0 0.0
  %930 = vmatprep.subr.mxu0 0.0
  %931 = vmatpush1.msra.mxu0 0.0
  %932 = vmatprep.subr.mxu0 0.0
  %933 = vmatpush1.msra.mxu0 0.0
  %934 = vmatprep.subr.mxu0 0.0
  %935 = vmatpush1.msra.mxu0 0.0
  %936 = vmatprep.subr.mxu0 0.0
  %937 = vmatpush1.msra.mxu0 0.0
  %938 = vmatprep.subr.mxu0 0.0
  %939 = vmatpush1.msra.mxu0 0.0
  %940 = vmatprep.subr.mxu0 0.0
  %941 = vmatpush1.msra.mxu0 0.0
  %942 = vmatprep.subr.mxu0 0.0
  %943 = vmatpush1.msra.mxu0 0.0
  %944 = vmatprep.subr.mxu0 0.0
  %945 = vmatpush1.msra.mxu0 0.0
  %946 = vmatprep.subr.mxu0 0.0
  %947 = vmatpush1.msra.mxu0 0.0
  %948 = vmatprep.subr.mxu0 0.0
  %949 = vmatpush1.msra.mxu0 0.0
  %950 = vmatprep.subr.mxu0 0.0
  %951 = vmatpush1.msra.mxu0 0.0
  %952 = vmatprep.subr.mxu0 0.0
  %953 = vmatpush1.msra.mxu0 0.0
  %954 = vmatprep.subr.mxu0 0.0
  %955 = vmatpush1.msra.mxu0 0.0
  %956 = vmatprep.subr.mxu0 0.0
  %957 = vmatpush1.msra.mxu0 0.0
  %958 = vmatprep.subr.mxu0 0.0
  %959 = vmatpush1.msra.mxu0 0.0
  %960 = vmatprep.subr.mxu0 0.0
  %961 = vmatpush1.msra.mxu0 0.0
  %962 = vmatprep.subr.mxu0 0.0
  %963 = vmatpush1.msra.mxu0 0.0
  %964 = vmatprep.subr.mxu0 0.0
  %965 = vmatpush1.msra.mxu0 0.0
  %966 = vmatprep.subr.mxu0 0.0
  %967 = vmatpush1.msra.mxu0 0.0
  %968 = vmatprep.subr.mxu0 0.0
  %969 = vmatpush1.msra.mxu0 0.0
  %970 = vmatprep.mubr.f32.mxu0 0.0
  %971 = vmatmul.mubr.f32.gmra.mrb[0].mxu0 %v833
  %v972 = vpop.f32.mrb[0].mxu0
  %v973 = vadd.f32 %v830, %v972
  %v974 = vpop.f32.mrb[0].mxu0
  %v975 = vadd.f32 %v830, %v974
  %976 = vdwg.mxu0
  %977 = vmatprep.subr.mxu0 %v820
  %978 = vmatpush1.msra.mxu0 %v819
  %979 = vmatprep.subr.mxu0 0.0
  %980 = vmatpush1.msra.mxu0 0.0
  %981 = vmatprep.subr.mxu0 0.0
  %982 = vmatpush1.msra.mxu0 0.0
  %983 = vmatprep.subr.mxu0 0.0
  %984 = vmatpush1.msra.mxu0 0.0
  %985 = vmatprep.subr.mxu0 0.0
  %986 = vmatpush1.msra.mxu0 0.0
  %987 = vmatprep.subr.mxu0 0.0
  %988 = vmatpush1.msra.mxu0 0.0
  %989 = vmatprep.subr.mxu0 0.0
  %990 = vmatpush1.msra.mxu0 0.0
  %991 = vmatprep.subr.mxu0 0.0
  %992 = vmatpush1.msra.mxu0 0.0
  %993 = vmatprep.subr.mxu0 0.0
  %994 = vmatpush1.msra.mxu0 0.0
  %995 = vmatprep.subr.mxu0 0.0
  %996 = vmatpush1.msra.mxu0 0.0
  %997 = vmatprep.subr.mxu0 0.0
  %998 = vmatpush1.msra.mxu0 0.0
  %999 = vmatprep.subr.mxu0 0.0
  %1000 = vmatpush1.msra.mxu0 0.0
  %1001 = vmatprep.subr.mxu0 0.0
  %1002 = vmatpush1.msra.mxu0 0.0
  %1003 = vmatprep.subr.mxu0 0.0
  %1004 = vmatpush1.msra.mxu0 0.0
  %1005 = vmatprep.subr.mxu0 0.0
  %1006 = vmatpush1.msra.mxu0 0.0
  %1007 = vmatprep.subr.mxu0 0.0
  %1008 = vmatpush1.msra.mxu0 0.0
  %1009 = vmatprep.subr.mxu0 0.0
  %1010 = vmatpush1.msra.mxu0 0.0
  %1011 = vmatprep.subr.mxu0 0.0
  %1012 = vmatpush1.msra.mxu0 0.0
  %1013 = vmatprep.subr.mxu0 0.0
  %1014 = vmatpush1.msra.mxu0 0.0
  %1015 = vmatprep.subr.mxu0 0.0
  %1016 = vmatpush1.msra.mxu0 0.0
  %1017 = vmatprep.subr.mxu0 0.0
  %1018 = vmatpush1.msra.mxu0 0.0
  %1019 = vmatprep.subr.mxu0 0.0
  %1020 = vmatpush1.msra.mxu0 0.0
  %1021 = vmatprep.subr.mxu0 0.0
  %1022 = vmatpush1.msra.mxu0 0.0
  %1023 = vmatprep.subr.mxu0 0.0
  %1024 = vmatpush1.msra.mxu0 0.0
  %1025 = vmatprep.subr.mxu0 0.0
  %1026 = vmatpush1.msra.mxu0 0.0
  %1027 = vmatprep.subr.mxu0 0.0
  %1028 = vmatpush1.msra.mxu0 0.0
  %1029 = vmatprep.subr.mxu0 0.0
  %1030 = vmatpush1.msra.mxu0 0.0
  %1031 = vmatprep.subr.mxu0 0.0
  %1032 = vmatpush1.msra.mxu0 0.0
  %1033 = vmatprep.subr.mxu0 0.0
  %1034 = vmatpush1.msra.mxu0 0.0
  %1035 = vmatprep.subr.mxu0 0.0
  %1036 = vmatpush1.msra.mxu0 0.0
  %1037 = vmatprep.subr.mxu0 0.0
  %1038 = vmatpush1.msra.mxu0 0.0
  %1039 = vmatprep.subr.mxu0 0.0
  %1040 = vmatpush1.msra.mxu0 0.0
  %1041 = vmatprep.mubr.f32.mxu0 0.0
  %1042 = vmatmul.mubr.f32.gmra.mrb[0].mxu0 %v833
  %v1043 = vpop.f32.mrb[0].mxu0
  %v1044 = vadd.f32 %v830, %v1043
  %v1045 = vpop.f32.mrb[0].mxu0
  %v1046 = vadd.f32 %v830, %v1045
  %1047 = vdwg.mxu0
  %1048 = vmatprep.subr.mxu0 %v822
  %1049 = vmatpush1.msra.mxu0 %v821
  %1050 = vmatprep.subr.mxu0 0.0
  %1051 = vmatpush1.msra.mxu0 0.0
  %1052 = vmatprep.subr.mxu0 0.0
  %1053 = vmatpush1.msra.mxu0 0.0
  %1054 = vmatprep.subr.mxu0 0.0
  %1055 = vmatpush1.msra.mxu0 0.0
  %1056 = vmatprep.subr.mxu0 0.0
  %1057 = vmatpush1.msra.mxu0 0.0
  %1058 = vmatprep.subr.mxu0 0.0
  %1059 = vmatpush1.msra.mxu0 0.0
  %1060 = vmatprep.subr.mxu0 0.0
  %1061 = vmatpush1.msra.mxu0 0.0
  %1062 = vmatprep.subr.mxu0 0.0
  %1063 = vmatpush1.msra.mxu0 0.0
  %1064 = vmatprep.subr.mxu0 0.0
  %1065 = vmatpush1.msra.mxu0 0.0
  %1066 = vmatprep.subr.mxu0 0.0
  %1067 = vmatpush1.msra.mxu0 0.0
  %1068 = vmatprep.subr.mxu0 0.0
  %1069 = vmatpush1.msra.mxu0 0.0
  %1070 = vmatprep.subr.mxu0 0.0
  %1071 = vmatpush1.msra.mxu0 0.0
  %1072 = vmatprep.subr.mxu0 0.0
  %1073 = vmatpush1.msra.mxu0 0.0
  %1074 = vmatprep.subr.mxu0 0.0
  %1075 = vmatpush1.msra.mxu0 0.0
  %1076 = vmatprep.subr.mxu0 0.0
  %1077 = vmatpush1.msra.mxu0 0.0
  %1078 = vmatprep.subr.mxu0 0.0
  %1079 = vmatpush1.msra.mxu0 0.0
  %1080 = vmatprep.subr.mxu0 0.0
  %1081 = vmatpush1.msra.mxu0 0.0
  %1082 = vmatprep.subr.mxu0 0.0
  %1083 = vmatpush1.msra.mxu0 0.0
  %1084 = vmatprep.subr.mxu0 0.0
  %1085 = vmatpush1.msra.mxu0 0.0
  %1086 = vmatprep.subr.mxu0 0.0
  %1087 = vmatpush1.msra.mxu0 0.0
  %1088 = vmatprep.subr.mxu0 0.0
  %1089 = vmatpush1.msra.mxu0 0.0
  %1090 = vmatprep.subr.mxu0 0.0
  %1091 = vmatpush1.msra.mxu0 0.0
  %1092 = vmatprep.subr.mxu0 0.0
  %1093 = vmatpush1.msra.mxu0 0.0
  %1094 = vmatprep.subr.mxu0 0.0
  %1095 = vmatpush1.msra.mxu0 0.0
  %1096 = vmatprep.subr.mxu0 0.0
  %1097 = vmatpush1.msra.mxu0 0.0
  %1098 = vmatprep.subr.mxu0 0.0
  %1099 = vmatpush1.msra.mxu0 0.0
  %1100 = vmatprep.subr.mxu0 0.0
  %1101 = vmatpush1.msra.mxu0 0.0
  %1102 = vmatprep.subr.mxu0 0.0
  %1103 = vmatpush1.msra.mxu0 0.0
  %1104 = vmatprep.subr.mxu0 0.0
  %1105 = vmatpush1.msra.mxu0 0.0
  %1106 = vmatprep.subr.mxu0 0.0
  %1107 = vmatpush1.msra.mxu0 0.0
  %1108 = vmatprep.subr.mxu0 0.0
  %1109 = vmatpush1.msra.mxu0 0.0
  %1110 = vmatprep.subr.mxu0 0.0
  %1111 = vmatpush1.msra.mxu0 0.0
  %1112 = vmatprep.mubr.f32.mxu0 0.0
  %1113 = vmatmul.mubr.f32.gmra.mrb[0].mxu0 %v833
  %v1114 = vpop.f32.mrb[0].mxu0
  %v1115 = vadd.f32 %v830, %v1114
  %v1116 = vpop.f32.mrb[0].mxu0
  %v1117 = vadd.f32 %v830, %v1116
  %1118 = vdwg.mxu0
  %v1119 = vmax.f32 %v902, 0.0
  %v1120 = vmax.f32 %v904, 0.0
  %v1121 = vmax.f32 %v973, 0.0
  %v1122 = vmax.f32 %v975, 0.0
  %v1123 = vmax.f32 %v1044, 0.0
  %v1124 = vmax.f32 %v1046, 0.0
  %v1125 = vmax.f32 %v1115, 0.0
  %v1126 = vmax.f32 %v1117, 0.0
  %v1127 = vadd.f32 %v1119, %v181
  %v1128 = vadd.f32 %v1120, %v183
  %v1129 = vadd.f32 %v1121, %v282
  %v1130 = vadd.f32 %v1122, %v284
  %v1131 = vadd.f32 %v1123, %v383
  %v1132 = vadd.f32 %v1124, %v385
  %v1133 = vadd.f32 %v1125, %v484
  %v1134 = vadd.f32 %v1126, %v486
  %s1135 = scalar_lea.vmem %s4, 32
  %v1136 = vld [vmem:[%s1135] sm:$0xff]
  %s1137 = scalar_lea.vmem %s5, 32
  %v1138 = vld [vmem:[%s1137] sm:$0xff]
  %1140 = vset.pattern.permute.xlu0 0
  %1141 = vperm.xlu0 %1140, %v1138
  %v1142 = vpop.permute.xlu0 %1141
  %v1145 = vsel %vm527, %v1136, 0
  %1147 = vmatprep.subr.mxu0 %v1128
  %1148 = vmatpush1.msra.mxu0 %v1127
  %1149 = vmatprep.subr.mxu0 0.0
  %1150 = vmatpush1.msra.mxu0 0.0
  %1151 = vmatprep.subr.mxu0 0.0
  %1152 = vmatpush1.msra.mxu0 0.0
  %1153 = vmatprep.subr.mxu0 0.0
  %1154 = vmatpush1.msra.mxu0 0.0
  %1155 = vmatprep.subr.mxu0 0.0
  %1156 = vmatpush1.msra.mxu0 0.0
  %1157 = vmatprep.subr.mxu0 0.0
  %1158 = vmatpush1.msra.mxu0 0.0
  %1159 = vmatprep.subr.mxu0 0.0
  %1160 = vmatpush1.msra.mxu0 0.0
  %1161 = vmatprep.subr.mxu0 0.0
  %1162 = vmatpush1.msra.mxu0 0.0
  %1163 = vmatprep.subr.mxu0 0.0
  %1164 = vmatpush1.msra.mxu0 0.0
  %1165 = vmatprep.subr.mxu0 0.0
  %1166 = vmatpush1.msra.mxu0 0.0
  %1167 = vmatprep.subr.mxu0 0.0
  %1168 = vmatpush1.msra.mxu0 0.0
  %1169 = vmatprep.subr.mxu0 0.0
  %1170 = vmatpush1.msra.mxu0 0.0
  %1171 = vmatprep.subr.mxu0 0.0
  %1172 = vmatpush1.msra.mxu0 0.0
  %1173 = vmatprep.subr.mxu0 0.0
  %1174 = vmatpush1.msra.mxu0 0.0
  %1175 = vmatprep.subr.mxu0 0.0
  %1176 = vmatpush1.msra.mxu0 0.0
  %1177 = vmatprep.subr.mxu0 0.0
  %1178 = vmatpush1.msra.mxu0 0.0
  %1179 = vmatprep.subr.mxu0 0.0
  %1180 = vmatpush1.msra.mxu0 0.0
  %1181 = vmatprep.subr.mxu0 0.0
  %1182 = vmatpush1.msra.mxu0 0.0
  %1183 = vmatprep.subr.mxu0 0.0
  %1184 = vmatpush1.msra.mxu0 0.0
  %1185 = vmatprep.subr.mxu0 0.0
  %1186 = vmatpush1.msra.mxu0 0.0
  %1187 = vmatprep.subr.mxu0 0.0
  %1188 = vmatpush1.msra.mxu0 0.0
  %1189 = vmatprep.subr.mxu0 0.0
  %1190 = vmatpush1.msra.mxu0 0.0
  %1191 = vmatprep.subr.mxu0 0.0
  %1192 = vmatpush1.msra.mxu0 0.0
  %1193 = vmatprep.subr.mxu0 0.0
  %1194 = vmatpush1.msra.mxu0 0.0
  %1195 = vmatprep.subr.mxu0 0.0
  %1196 = vmatpush1.msra.mxu0 0.0
  %1197 = vmatprep.subr.mxu0 0.0
  %1198 = vmatpush1.msra.mxu0 0.0
  %1199 = vmatprep.subr.mxu0 0.0
  %1200 = vmatpush1.msra.mxu0 0.0
  %1201 = vmatprep.subr.mxu0 0.0
  %1202 = vmatpush1.msra.mxu0 0.0
  %1203 = vmatprep.subr.mxu0 0.0
  %1204 = vmatpush1.msra.mxu0 0.0
  %1205 = vmatprep.subr.mxu0 0.0
  %1206 = vmatpush1.msra.mxu0 0.0
  %1207 = vmatprep.subr.mxu0 0.0
  %1208 = vmatpush1.msra.mxu0 0.0
  %1209 = vmatprep.subr.mxu0 0.0
  %1210 = vmatpush1.msra.mxu0 0.0
  %1211 = vmatprep.mubr.f32.mxu0 0.0
  %1212 = vmatmul.mubr.f32.gmra.mrb[0].mxu0 %v1145
  %v1213 = vpop.f32.mrb[0].mxu0
  %v1214 = vadd.f32 %v1142, %v1213
  %v1215 = vpop.f32.mrb[0].mxu0
  %v1216 = vadd.f32 %v1142, %v1215
  %1217 = vdwg.mxu0
  %1218 = vmatprep.subr.mxu0 %v1130
  %1219 = vmatpush1.msra.mxu0 %v1129
  %1220 = vmatprep.subr.mxu0 0.0
  %1221 = vmatpush1.msra.mxu0 0.0
  %1222 = vmatprep.subr.mxu0 0.0
  %1223 = vmatpush1.msra.mxu0 0.0
  %1224 = vmatprep.subr.mxu0 0.0
  %1225 = vmatpush1.msra.mxu0 0.0
  %1226 = vmatprep.subr.mxu0 0.0
  %1227 = vmatpush1.msra.mxu0 0.0
  %1228 = vmatprep.subr.mxu0 0.0
  %1229 = vmatpush1.msra.mxu0 0.0
  %1230 = vmatprep.subr.mxu0 0.0
  %1231 = vmatpush1.msra.mxu0 0.0
  %1232 = vmatprep.subr.mxu0 0.0
  %1233 = vmatpush1.msra.mxu0 0.0
  %1234 = vmatprep.subr.mxu0 0.0
  %1235 = vmatpush1.msra.mxu0 0.0
  %1236 = vmatprep.subr.mxu0 0.0
  %1237 = vmatpush1.msra.mxu0 0.0
  %1238 = vmatprep.subr.mxu0 0.0
  %1239 = vmatpush1.msra.mxu0 0.0
  %1240 = vmatprep.subr.mxu0 0.0
  %1241 = vmatpush1.msra.mxu0 0.0
  %1242 = vmatprep.subr.mxu0 0.0
  %1243 = vmatpush1.msra.mxu0 0.0
  %1244 = vmatprep.subr.mxu0 0.0
  %1245 = vmatpush1.msra.mxu0 0.0
  %1246 = vmatprep.subr.mxu0 0.0
  %1247 = vmatpush1.msra.mxu0 0.0
  %1248 = vmatprep.subr.mxu0 0.0
  %1249 = vmatpush1.msra.mxu0 0.0
  %1250 = vmatprep.subr.mxu0 0.0
  %1251 = vmatpush1.msra.mxu0 0.0
  %1252 = vmatprep.subr.mxu0 0.0
  %1253 = vmatpush1.msra.mxu0 0.0
  %1254 = vmatprep.subr.mxu0 0.0
  %1255 = vmatpush1.msra.mxu0 0.0
  %1256 = vmatprep.subr.mxu0 0.0
  %1257 = vmatpush1.msra.mxu0 0.0
  %1258 = vmatprep.subr.mxu0 0.0
  %1259 = vmatpush1.msra.mxu0 0.0
  %1260 = vmatprep.subr.mxu0 0.0
  %1261 = vmatpush1.msra.mxu0 0.0
  %1262 = vmatprep.subr.mxu0 0.0
  %1263 = vmatpush1.msra.mxu0 0.0
  %1264 = vmatprep.subr.mxu0 0.0
  %1265 = vmatpush1.msra.mxu0 0.0
  %1266 = vmatprep.subr.mxu0 0.0
  %1267 = vmatpush1.msra.mxu0 0.0
  %1268 = vmatprep.subr.mxu0 0.0
  %1269 = vmatpush1.msra.mxu0 0.0
  %1270 = vmatprep.subr.mxu0 0.0
  %1271 = vmatpush1.msra.mxu0 0.0
  %1272 = vmatprep.subr.mxu0 0.0
  %1273 = vmatpush1.msra.mxu0 0.0
  %1274 = vmatprep.subr.mxu0 0.0
  %1275 = vmatpush1.msra.mxu0 0.0
  %1276 = vmatprep.subr.mxu0 0.0
  %1277 = vmatpush1.msra.mxu0 0.0
  %1278 = vmatprep.subr.mxu0 0.0
  %1279 = vmatpush1.msra.mxu0 0.0
  %1280 = vmatprep.subr.mxu0 0.0
  %1281 = vmatpush1.msra.mxu0 0.0
  %1282 = vmatprep.mubr.f32.mxu0 0.0
  %1283 = vmatmul.mubr.f32.gmra.mrb[0].mxu0 %v1145
  %v1284 = vpop.f32.mrb[0].mxu0
  %v1285 = vadd.f32 %v1142, %v1284
  %v1286 = vpop.f32.mrb[0].mxu0
  %v1287 = vadd.f32 %v1142, %v1286
  %1288 = vdwg.mxu0
  %1289 = vmatprep.subr.mxu0 %v1132
  %1290 = vmatpush1.msra.mxu0 %v1131
  %1291 = vmatprep.subr.mxu0 0.0
  %1292 = vmatpush1.msra.mxu0 0.0
  %1293 = vmatprep.subr.mxu0 0.0
  %1294 = vmatpush1.msra.mxu0 0.0
  %1295 = vmatprep.subr.mxu0 0.0
  %1296 = vmatpush1.msra.mxu0 0.0
  %1297 = vmatprep.subr.mxu0 0.0
  %1298 = vmatpush1.msra.mxu0 0.0
  %1299 = vmatprep.subr.mxu0 0.0
  %1300 = vmatpush1.msra.mxu0 0.0
  %1301 = vmatprep.subr.mxu0 0.0
  %1302 = vmatpush1.msra.mxu0 0.0
  %1303 = vmatprep.subr.mxu0 0.0
  %1304 = vmatpush1.msra.mxu0 0.0
  %1305 = vmatprep.subr.mxu0 0.0
  %1306 = vmatpush1.msra.mxu0 0.0
  %1307 = vmatprep.subr.mxu0 0.0
  %1308 = vmatpush1.msra.mxu0 0.0
  %1309 = vmatprep.subr.mxu0 0.0
  %1310 = vmatpush1.msra.mxu0 0.0
  %1311 = vmatprep.subr.mxu0 0.0
  %1312 = vmatpush1.msra.mxu0 0.0
  %1313 = vmatprep.subr.mxu0 0.0
  %1314 = vmatpush1.msra.mxu0 0.0
  %1315 = vmatprep.subr.mxu0 0.0
  %1316 = vmatpush1.msra.mxu0 0.0
  %1317 = vmatprep.subr.mxu0 0.0
  %1318 = vmatpush1.msra.mxu0 0.0
  %1319 = vmatprep.subr.mxu0 0.0
  %1320 = vmatpush1.msra.mxu0 0.0
  %1321 = vmatprep.subr.mxu0 0.0
  %1322 = vmatpush1.msra.mxu0 0.0
  %1323 = vmatprep.subr.mxu0 0.0
  %1324 = vmatpush1.msra.mxu0 0.0
  %1325 = vmatprep.subr.mxu0 0.0
  %1326 = vmatpush1.msra.mxu0 0.0
  %1327 = vmatprep.subr.mxu0 0.0
  %1328 = vmatpush1.msra.mxu0 0.0
  %1329 = vmatprep.subr.mxu0 0.0
  %1330 = vmatpush1.msra.mxu0 0.0
  %1331 = vmatprep.subr.mxu0 0.0
  %1332 = vmatpush1.msra.mxu0 0.0
  %1333 = vmatprep.subr.mxu0 0.0
  %1334 = vmatpush1.msra.mxu0 0.0
  %1335 = vmatprep.subr.mxu0 0.0
  %1336 = vmatpush1.msra.mxu0 0.0
  %1337 = vmatprep.subr.mxu0 0.0
  %1338 = vmatpush1.msra.mxu0 0.0
  %1339 = vmatprep.subr.mxu0 0.0
  %1340 = vmatpush1.msra.mxu0 0.0
  %1341 = vmatprep.subr.mxu0 0.0
  %1342 = vmatpush1.msra.mxu0 0.0
  %1343 = vmatprep.subr.mxu0 0.0
  %1344 = vmatpush1.msra.mxu0 0.0
  %1345 = vmatprep.subr.mxu0 0.0
  %1346 = vmatpush1.msra.mxu0 0.0
  %1347 = vmatprep.subr.mxu0 0.0
  %1348 = vmatpush1.msra.mxu0 0.0
  %1349 = vmatprep.subr.mxu0 0.0
  %1350 = vmatpush1.msra.mxu0 0.0
  %1351 = vmatprep.subr.mxu0 0.0
  %1352 = vmatpush1.msra.mxu0 0.0
  %1353 = vmatprep.mubr.f32.mxu0 0.0
  %1354 = vmatmul.mubr.f32.gmra.mrb[0].mxu0 %v1145
  %v1355 = vpop.f32.mrb[0].mxu0
  %v1356 = vadd.f32 %v1142, %v1355
  %v1357 = vpop.f32.mrb[0].mxu0
  %v1358 = vadd.f32 %v1142, %v1357
  %1359 = vdwg.mxu0
  %1360 = vmatprep.subr.mxu0 %v1134
  %1361 = vmatpush1.msra.mxu0 %v1133
  %1362 = vmatprep.subr.mxu0 0.0
  %1363 = vmatpush1.msra.mxu0 0.0
  %1364 = vmatprep.subr.mxu0 0.0
  %1365 = vmatpush1.msra.mxu0 0.0
  %1366 = vmatprep.subr.mxu0 0.0
  %1367 = vmatpush1.msra.mxu0 0.0
  %1368 = vmatprep.subr.mxu0 0.0
  %1369 = vmatpush1.msra.mxu0 0.0
  %1370 = vmatprep.subr.mxu0 0.0
  %1371 = vmatpush1.msra.mxu0 0.0
  %1372 = vmatprep.subr.mxu0 0.0
  %1373 = vmatpush1.msra.mxu0 0.0
  %1374 = vmatprep.subr.mxu0 0.0
  %1375 = vmatpush1.msra.mxu0 0.0
  %1376 = vmatprep.subr.mxu0 0.0
  %1377 = vmatpush1.msra.mxu0 0.0
  %1378 = vmatprep.subr.mxu0 0.0
  %1379 = vmatpush1.msra.mxu0 0.0
  %1380 = vmatprep.subr.mxu0 0.0
  %1381 = vmatpush1.msra.mxu0 0.0
  %1382 = vmatprep.subr.mxu0 0.0
  %1383 = vmatpush1.msra.mxu0 0.0
  %1384 = vmatprep.subr.mxu0 0.0
  %1385 = vmatpush1.msra.mxu0 0.0
  %1386 = vmatprep.subr.mxu0 0.0
  %1387 = vmatpush1.msra.mxu0 0.0
  %1388 = vmatprep.subr.mxu0 0.0
  %1389 = vmatpush1.msra.mxu0 0.0
  %1390 = vmatprep.subr.mxu0 0.0
  %1391 = vmatpush1.msra.mxu0 0.0
  %1392 = vmatprep.subr.mxu0 0.0
  %1393 = vmatpush1.msra.mxu0 0.0
  %1394 = vmatprep.subr.mxu0 0.0
  %1395 = vmatpush1.msra.mxu0 0.0
  %1396 = vmatprep.subr.mxu0 0.0
  %1397 = vmatpush1.msra.mxu0 0.0
  %1398 = vmatprep.subr.mxu0 0.0
  %1399 = vmatpush1.msra.mxu0 0.0
  %1400 = vmatprep.subr.mxu0 0.0
  %1401 = vmatpush1.msra.mxu0 0.0
  %1402 = vmatprep.subr.mxu0 0.0
  %1403 = vmatpush1.msra.mxu0 0.0
  %1404 = vmatprep.subr.mxu0 0.0
  %1405 = vmatpush1.msra.mxu0 0.0
  %1406 = vmatprep.subr.mxu0 0.0
  %1407 = vmatpush1.msra.mxu0 0.0
  %1408 = vmatprep.subr.mxu0 0.0
  %1409 = vmatpush1.msra.mxu0 0.0
  %1410 = vmatprep.subr.mxu0 0.0
  %1411 = vmatpush1.msra.mxu0 0.0
  %1412 = vmatprep.subr.mxu0 0.0
  %1413 = vmatpush1.msra.mxu0 0.0
  %1414 = vmatprep.subr.mxu0 0.0
  %1415 = vmatpush1.msra.mxu0 0.0
  %1416 = vmatprep.subr.mxu0 0.0
  %1417 = vmatpush1.msra.mxu0 0.0
  %1418 = vmatprep.subr.mxu0 0.0
  %1419 = vmatpush1.msra.mxu0 0.0
  %1420 = vmatprep.subr.mxu0 0.0
  %1421 = vmatpush1.msra.mxu0 0.0
  %1422 = vmatprep.subr.mxu0 0.0
  %1423 = vmatpush1.msra.mxu0 0.0
  %1424 = vmatprep.mubr.f32.mxu0 0.0
  %1425 = vmatmul.mubr.f32.gmra.mrb[0].mxu0 %v1145
  %v1426 = vpop.f32.mrb[0].mxu0
  %v1427 = vadd.f32 %v1142, %v1426
  %v1428 = vpop.f32.mrb[0].mxu0
  %v1429 = vadd.f32 %v1142, %v1428
  %1430 = vdwg.mxu0
  %v1431 = vmax.f32 %v1214, 0.0
  %v1432 = vmax.f32 %v1216, 0.0
  %v1433 = vmax.f32 %v1285, 0.0
  %v1434 = vmax.f32 %v1287, 0.0
  %v1435 = vmax.f32 %v1356, 0.0
  %v1436 = vmax.f32 %v1358, 0.0
  %v1437 = vmax.f32 %v1427, 0.0
  %v1438 = vmax.f32 %v1429, 0.0
  %s1439 = scalar_lea.vmem %s4, 48
  %v1440 = vld [vmem:[%s1439] sm:$0xff]
  %s1441 = scalar_lea.vmem %s5, 48
  %v1442 = vld [vmem:[%s1441] sm:$0xff]
  %1444 = vset.pattern.permute.xlu0 0
  %1445 = vperm.xlu0 %1444, %v1442
  %v1446 = vpop.permute.xlu0 %1445
  %v1449 = vsel %vm527, %v1440, 0
  %1451 = vmatprep.subr.mxu0 %v1432
  %1452 = vmatpush1.msra.mxu0 %v1431
  %1453 = vmatprep.subr.mxu0 0.0
  %1454 = vmatpush1.msra.mxu0 0.0
  %1455 = vmatprep.subr.mxu0 0.0
  %1456 = vmatpush1.msra.mxu0 0.0
  %1457 = vmatprep.subr.mxu0 0.0
  %1458 = vmatpush1.msra.mxu0 0.0
  %1459 = vmatprep.subr.mxu0 0.0
  %1460 = vmatpush1.msra.mxu0 0.0
  %1461 = vmatprep.subr.mxu0 0.0
  %1462 = vmatpush1.msra.mxu0 0.0
  %1463 = vmatprep.subr.mxu0 0.0
  %1464 = vmatpush1.msra.mxu0 0.0
  %1465 = vmatprep.subr.mxu0 0.0
  %1466 = vmatpush1.msra.mxu0 0.0
  %1467 = vmatprep.subr.mxu0 0.0
  %1468 = vmatpush1.msra.mxu0 0.0
  %1469 = vmatprep.subr.mxu0 0.0
  %1470 = vmatpush1.msra.mxu0 0.0
  %1471 = vmatprep.subr.mxu0 0.0
  %1472 = vmatpush1.msra.mxu0 0.0
  %1473 = vmatprep.subr.mxu0 0.0
  %1474 = vmatpush1.msra.mxu0 0.0
  %1475 = vmatprep.subr.mxu0 0.0
  %1476 = vmatpush1.msra.mxu0 0.0
  %1477 = vmatprep.subr.mxu0 0.0
  %1478 = vmatpush1.msra.mxu0 0.0
  %1479 = vmatprep.subr.mxu0 0.0
  %1480 = vmatpush1.msra.mxu0 0.0
  %1481 = vmatprep.subr.mxu0 0.0
  %1482 = vmatpush1.msra.mxu0 0.0
  %1483 = vmatprep.subr.mxu0 0.0
  %1484 = vmatpush1.msra.mxu0 0.0
  %1485 = vmatprep.subr.mxu0 0.0
  %1486 = vmatpush1.msra.mxu0 0.0
  %1487 = vmatprep.subr.mxu0 0.0
  %1488 = vmatpush1.msra.mxu0 0.0
  %1489 = vmatprep.subr.mxu0 0.0
  %1490 = vmatpush1.msra.mxu0 0.0
  %1491 = vmatprep.subr.mxu0 0.0
  %1492 = vmatpush1.msra.mxu0 0.0
  %1493 = vmatprep.subr.mxu0 0.0
  %1494 = vmatpush1.msra.mxu0 0.0
  %1495 = vmatprep.subr.mxu0 0.0
  %1496 = vmatpush1.msra.mxu0 0.0
  %1497 = vmatprep.subr.mxu0 0.0
  %1498 = vmatpush1.msra.mxu0 0.0
  %1499 = vmatprep.subr.mxu0 0.0
  %1500 = vmatpush1.msra.mxu0 0.0
  %1501 = vmatprep.subr.mxu0 0.0
  %1502 = vmatpush1.msra.mxu0 0.0
  %1503 = vmatprep.subr.mxu0 0.0
  %1504 = vmatpush1.msra.mxu0 0.0
  %1505 = vmatprep.subr.mxu0 0.0
  %1506 = vmatpush1.msra.mxu0 0.0
  %1507 = vmatprep.subr.mxu0 0.0
  %1508 = vmatpush1.msra.mxu0 0.0
  %1509 = vmatprep.subr.mxu0 0.0
  %1510 = vmatpush1.msra.mxu0 0.0
  %1511 = vmatprep.subr.mxu0 0.0
  %1512 = vmatpush1.msra.mxu0 0.0
  %1513 = vmatprep.subr.mxu0 0.0
  %1514 = vmatpush1.msra.mxu0 0.0
  %1515 = vmatprep.mubr.f32.mxu0 0.0
  %1516 = vmatmul.mubr.f32.gmra.mrb[0].mxu0 %v1449
  %v1517 = vpop.f32.mrb[0].mxu0
  %v1518 = vadd.f32 %v1446, %v1517
  %v1519 = vpop.f32.mrb[0].mxu0
  %v1520 = vadd.f32 %v1446, %v1519
  %1521 = vdwg.mxu0
  %1522 = vmatprep.subr.mxu0 %v1434
  %1523 = vmatpush1.msra.mxu0 %v1433
  %1524 = vmatprep.subr.mxu0 0.0
  %1525 = vmatpush1.msra.mxu0 0.0
  %1526 = vmatprep.subr.mxu0 0.0
  %1527 = vmatpush1.msra.mxu0 0.0
  %1528 = vmatprep.subr.mxu0 0.0
  %1529 = vmatpush1.msra.mxu0 0.0
  %1530 = vmatprep.subr.mxu0 0.0
  %1531 = vmatpush1.msra.mxu0 0.0
  %1532 = vmatprep.subr.mxu0 0.0
  %1533 = vmatpush1.msra.mxu0 0.0
  %1534 = vmatprep.subr.mxu0 0.0
  %1535 = vmatpush1.msra.mxu0 0.0
  %1536 = vmatprep.subr.mxu0 0.0
  %1537 = vmatpush1.msra.mxu0 0.0
  %1538 = vmatprep.subr.mxu0 0.0
  %1539 = vmatpush1.msra.mxu0 0.0
  %1540 = vmatprep.subr.mxu0 0.0
  %1541 = vmatpush1.msra.mxu0 0.0
  %1542 = vmatprep.subr.mxu0 0.0
  %1543 = vmatpush1.msra.mxu0 0.0
  %1544 = vmatprep.subr.mxu0 0.0
  %1545 = vmatpush1.msra.mxu0 0.0
  %1546 = vmatprep.subr.mxu0 0.0
  %1547 = vmatpush1.msra.mxu0 0.0
  %1548 = vmatprep.subr.mxu0 0.0
  %1549 = vmatpush1.msra.mxu0 0.0
  %1550 = vmatprep.subr.mxu0 0.0
  %1551 = vmatpush1.msra.mxu0 0.0
  %1552 = vmatprep.subr.mxu0 0.0
  %1553 = vmatpush1.msra.mxu0 0.0
  %1554 = vmatprep.subr.mxu0 0.0
  %1555 = vmatpush1.msra.mxu0 0.0
  %1556 = vmatprep.subr.mxu0 0.0
  %1557 = vmatpush1.msra.mxu0 0.0
  %1558 = vmatprep.subr.mxu0 0.0
  %1559 = vmatpush1.msra.mxu0 0.0
  %1560 = vmatprep.subr.mxu0 0.0
  %1561 = vmatpush1.msra.mxu0 0.0
  %1562 = vmatprep.subr.mxu0 0.0
  %1563 = vmatpush1.msra.mxu0 0.0
  %1564 = vmatprep.subr.mxu0 0.0
  %1565 = vmatpush1.msra.mxu0 0.0
  %1566 = vmatprep.subr.mxu0 0.0
  %1567 = vmatpush1.msra.mxu0 0.0
  %1568 = vmatprep.subr.mxu0 0.0
  %1569 = vmatpush1.msra.mxu0 0.0
  %1570 = vmatprep.subr.mxu0 0.0
  %1571 = vmatpush1.msra.mxu0 0.0
  %1572 = vmatprep.subr.mxu0 0.0
  %1573 = vmatpush1.msra.mxu0 0.0
  %1574 = vmatprep.subr.mxu0 0.0
  %1575 = vmatpush1.msra.mxu0 0.0
  %1576 = vmatprep.subr.mxu0 0.0
  %1577 = vmatpush1.msra.mxu0 0.0
  %1578 = vmatprep.subr.mxu0 0.0
  %1579 = vmatpush1.msra.mxu0 0.0
  %1580 = vmatprep.subr.mxu0 0.0
  %1581 = vmatpush1.msra.mxu0 0.0
  %1582 = vmatprep.subr.mxu0 0.0
  %1583 = vmatpush1.msra.mxu0 0.0
  %1584 = vmatprep.subr.mxu0 0.0
  %1585 = vmatpush1.msra.mxu0 0.0
  %1586 = vmatprep.mubr.f32.mxu0 0.0
  %1587 = vmatmul.mubr.f32.gmra.mrb[0].mxu0 %v1449
  %v1588 = vpop.f32.mrb[0].mxu0
  %v1589 = vadd.f32 %v1446, %v1588
  %v1590 = vpop.f32.mrb[0].mxu0
  %v1591 = vadd.f32 %v1446, %v1590
  %1592 = vdwg.mxu0
  %1593 = vmatprep.subr.mxu0 %v1436
  %1594 = vmatpush1.msra.mxu0 %v1435
  %1595 = vmatprep.subr.mxu0 0.0
  %1596 = vmatpush1.msra.mxu0 0.0
  %1597 = vmatprep.subr.mxu0 0.0
  %1598 = vmatpush1.msra.mxu0 0.0
  %1599 = vmatprep.subr.mxu0 0.0
  %1600 = vmatpush1.msra.mxu0 0.0
  %1601 = vmatprep.subr.mxu0 0.0
  %1602 = vmatpush1.msra.mxu0 0.0
  %1603 = vmatprep.subr.mxu0 0.0
  %1604 = vmatpush1.msra.mxu0 0.0
  %1605 = vmatprep.subr.mxu0 0.0
  %1606 = vmatpush1.msra.mxu0 0.0
  %1607 = vmatprep.subr.mxu0 0.0
  %1608 = vmatpush1.msra.mxu0 0.0
  %1609 = vmatprep.subr.mxu0 0.0
  %1610 = vmatpush1.msra.mxu0 0.0
  %1611 = vmatprep.subr.mxu0 0.0
  %1612 = vmatpush1.msra.mxu0 0.0
  %1613 = vmatprep.subr.mxu0 0.0
  %1614 = vmatpush1.msra.mxu0 0.0
  %1615 = vmatprep.subr.mxu0 0.0
  %1616 = vmatpush1.msra.mxu0 0.0
  %1617 = vmatprep.subr.mxu0 0.0
  %1618 = vmatpush1.msra.mxu0 0.0
  %1619 = vmatprep.subr.mxu0 0.0
  %1620 = vmatpush1.msra.mxu0 0.0
  %1621 = vmatprep.subr.mxu0 0.0
  %1622 = vmatpush1.msra.mxu0 0.0
  %1623 = vmatprep.subr.mxu0 0.0
  %1624 = vmatpush1.msra.mxu0 0.0
  %1625 = vmatprep.subr.mxu0 0.0
  %1626 = vmatpush1.msra.mxu0 0.0
  %1627 = vmatprep.subr.mxu0 0.0
  %1628 = vmatpush1.msra.mxu0 0.0
  %1629 = vmatprep.subr.mxu0 0.0
  %1630 = vmatpush1.msra.mxu0 0.0
  %1631 = vmatprep.subr.mxu0 0.0
  %1632 = vmatpush1.msra.mxu0 0.0
  %1633 = vmatprep.subr.mxu0 0.0
  %1634 = vmatpush1.msra.mxu0 0.0
  %1635 = vmatprep.subr.mxu0 0.0
  %1636 = vmatpush1.msra.mxu0 0.0
  %1637 = vmatprep.subr.mxu0 0.0
  %1638 = vmatpush1.msra.mxu0 0.0
  %1639 = vmatprep.subr.mxu0 0.0
  %1640 = vmatpush1.msra.mxu0 0.0
  %1641 = vmatprep.subr.mxu0 0.0
  %1642 = vmatpush1.msra.mxu0 0.0
  %1643 = vmatprep.subr.mxu0 0.0
  %1644 = vmatpush1.msra.mxu0 0.0
  %1645 = vmatprep.subr.mxu0 0.0
  %1646 = vmatpush1.msra.mxu0 0.0
  %1647 = vmatprep.subr.mxu0 0.0
  %1648 = vmatpush1.msra.mxu0 0.0
  %1649 = vmatprep.subr.mxu0 0.0
  %1650 = vmatpush1.msra.mxu0 0.0
  %1651 = vmatprep.subr.mxu0 0.0
  %1652 = vmatpush1.msra.mxu0 0.0
  %1653 = vmatprep.subr.mxu0 0.0
  %1654 = vmatpush1.msra.mxu0 0.0
  %1655 = vmatprep.subr.mxu0 0.0
  %1656 = vmatpush1.msra.mxu0 0.0
  %1657 = vmatprep.mubr.f32.mxu0 0.0
  %1658 = vmatmul.mubr.f32.gmra.mrb[0].mxu0 %v1449
  %v1659 = vpop.f32.mrb[0].mxu0
  %v1660 = vadd.f32 %v1446, %v1659
  %v1661 = vpop.f32.mrb[0].mxu0
  %v1662 = vadd.f32 %v1446, %v1661
  %1663 = vdwg.mxu0
  %1664 = vmatprep.subr.mxu0 %v1438
  %1665 = vmatpush1.msra.mxu0 %v1437
  %1666 = vmatprep.subr.mxu0 0.0
  %1667 = vmatpush1.msra.mxu0 0.0
  %1668 = vmatprep.subr.mxu0 0.0
  %1669 = vmatpush1.msra.mxu0 0.0
  %1670 = vmatprep.subr.mxu0 0.0
  %1671 = vmatpush1.msra.mxu0 0.0
  %1672 = vmatprep.subr.mxu0 0.0
  %1673 = vmatpush1.msra.mxu0 0.0
  %1674 = vmatprep.subr.mxu0 0.0
  %1675 = vmatpush1.msra.mxu0 0.0
  %1676 = vmatprep.subr.mxu0 0.0
  %1677 = vmatpush1.msra.mxu0 0.0
  %1678 = vmatprep.subr.mxu0 0.0
  %1679 = vmatpush1.msra.mxu0 0.0
  %1680 = vmatprep.subr.mxu0 0.0
  %1681 = vmatpush1.msra.mxu0 0.0
  %1682 = vmatprep.subr.mxu0 0.0
  %1683 = vmatpush1.msra.mxu0 0.0
  %1684 = vmatprep.subr.mxu0 0.0
  %1685 = vmatpush1.msra.mxu0 0.0
  %1686 = vmatprep.subr.mxu0 0.0
  %1687 = vmatpush1.msra.mxu0 0.0
  %1688 = vmatprep.subr.mxu0 0.0
  %1689 = vmatpush1.msra.mxu0 0.0
  %1690 = vmatprep.subr.mxu0 0.0
  %1691 = vmatpush1.msra.mxu0 0.0
  %1692 = vmatprep.subr.mxu0 0.0
  %1693 = vmatpush1.msra.mxu0 0.0
  %1694 = vmatprep.subr.mxu0 0.0
  %1695 = vmatpush1.msra.mxu0 0.0
  %1696 = vmatprep.subr.mxu0 0.0
  %1697 = vmatpush1.msra.mxu0 0.0
  %1698 = vmatprep.subr.mxu0 0.0
  %1699 = vmatpush1.msra.mxu0 0.0
  %1700 = vmatprep.subr.mxu0 0.0
  %1701 = vmatpush1.msra.mxu0 0.0
  %1702 = vmatprep.subr.mxu0 0.0
  %1703 = vmatpush1.msra.mxu0 0.0
  %1704 = vmatprep.subr.mxu0 0.0
  %1705 = vmatpush1.msra.mxu0 0.0
  %1706 = vmatprep.subr.mxu0 0.0
  %1707 = vmatpush1.msra.mxu0 0.0
  %1708 = vmatprep.subr.mxu0 0.0
  %1709 = vmatpush1.msra.mxu0 0.0
  %1710 = vmatprep.subr.mxu0 0.0
  %1711 = vmatpush1.msra.mxu0 0.0
  %1712 = vmatprep.subr.mxu0 0.0
  %1713 = vmatpush1.msra.mxu0 0.0
  %1714 = vmatprep.subr.mxu0 0.0
  %1715 = vmatpush1.msra.mxu0 0.0
  %1716 = vmatprep.subr.mxu0 0.0
  %1717 = vmatpush1.msra.mxu0 0.0
  %1718 = vmatprep.subr.mxu0 0.0
  %1719 = vmatpush1.msra.mxu0 0.0
  %1720 = vmatprep.subr.mxu0 0.0
  %1721 = vmatpush1.msra.mxu0 0.0
  %1722 = vmatprep.subr.mxu0 0.0
  %1723 = vmatpush1.msra.mxu0 0.0
  %1724 = vmatprep.subr.mxu0 0.0
  %1725 = vmatpush1.msra.mxu0 0.0
  %1726 = vmatprep.subr.mxu0 0.0
  %1727 = vmatpush1.msra.mxu0 0.0
  %1728 = vmatprep.mubr.f32.mxu0 0.0
  %1729 = vmatmul.mubr.f32.gmra.mrb[0].mxu0 %v1449
  %v1730 = vpop.f32.mrb[0].mxu0
  %v1731 = vadd.f32 %v1446, %v1730
  %v1732 = vpop.f32.mrb[0].mxu0
  %v1733 = vadd.f32 %v1446, %v1732
  %1734 = vdwg.mxu0
  %v1735 = vmax.f32 %v1518, 0.0
  %v1736 = vmax.f32 %v1520, 0.0
  %v1737 = vmax.f32 %v1589, 0.0
  %v1738 = vmax.f32 %v1591, 0.0
  %v1739 = vmax.f32 %v1660, 0.0
  %v1740 = vmax.f32 %v1662, 0.0
  %v1741 = vmax.f32 %v1731, 0.0
  %v1742 = vmax.f32 %v1733, 0.0
  %v1743 = vadd.f32 %v1735, %v187
  %v1744 = vadd.f32 %v1736, %v189
  %v1745 = vadd.f32 %v1737, %v288
  %v1746 = vadd.f32 %v1738, %v290
  %v1747 = vadd.f32 %v1739, %v389
  %v1748 = vadd.f32 %v1740, %v391
  %v1749 = vadd.f32 %v1741, %v490
  %v1750 = vadd.f32 %v1742, %v492
  %s1751 = scalar_lea.vmem %s4, 64
  %v1752 = vld [vmem:[%s1751] sm:$0xff]
  %s1753 = scalar_lea.vmem %s5, 64
  %v1754 = vld [vmem:[%s1753] sm:$0xff]
  %1756 = vset.pattern.permute.xlu0 0
  %1757 = vperm.xlu0 %1756, %v1754
  %v1758 = vpop.permute.xlu0 %1757
  %v1761 = vsel %vm527, %v1752, 0
  %1763 = vmatprep.subr.mxu0 %v1744
  %1764 = vmatpush1.msra.mxu0 %v1743
  %1765 = vmatprep.subr.mxu0 0.0
  %1766 = vmatpush1.msra.mxu0 0.0
  %1767 = vmatprep.subr.mxu0 0.0
  %1768 = vmatpush1.msra.mxu0 0.0
  %1769 = vmatprep.subr.mxu0 0.0
  %1770 = vmatpush1.msra.mxu0 0.0
  %1771 = vmatprep.subr.mxu0 0.0
  %1772 = vmatpush1.msra.mxu0 0.0
  %1773 = vmatprep.subr.mxu0 0.0
  %1774 = vmatpush1.msra.mxu0 0.0
  %1775 = vmatprep.subr.mxu0 0.0
  %1776 = vmatpush1.msra.mxu0 0.0
  %1777 = vmatprep.subr.mxu0 0.0
  %1778 = vmatpush1.msra.mxu0 0.0
  %1779 = vmatprep.subr.mxu0 0.0
  %1780 = vmatpush1.msra.mxu0 0.0
  %1781 = vmatprep.subr.mxu0 0.0
  %1782 = vmatpush1.msra.mxu0 0.0
  %1783 = vmatprep.subr.mxu0 0.0
  %1784 = vmatpush1.msra.mxu0 0.0
  %1785 = vmatprep.subr.mxu0 0.0
  %1786 = vmatpush1.msra.mxu0 0.0
  %1787 = vmatprep.subr.mxu0 0.0
  %1788 = vmatpush1.msra.mxu0 0.0
  %1789 = vmatprep.subr.mxu0 0.0
  %1790 = vmatpush1.msra.mxu0 0.0
  %1791 = vmatprep.subr.mxu0 0.0
  %1792 = vmatpush1.msra.mxu0 0.0
  %1793 = vmatprep.subr.mxu0 0.0
  %1794 = vmatpush1.msra.mxu0 0.0
  %1795 = vmatprep.subr.mxu0 0.0
  %1796 = vmatpush1.msra.mxu0 0.0
  %1797 = vmatprep.subr.mxu0 0.0
  %1798 = vmatpush1.msra.mxu0 0.0
  %1799 = vmatprep.subr.mxu0 0.0
  %1800 = vmatpush1.msra.mxu0 0.0
  %1801 = vmatprep.subr.mxu0 0.0
  %1802 = vmatpush1.msra.mxu0 0.0
  %1803 = vmatprep.subr.mxu0 0.0
  %1804 = vmatpush1.msra.mxu0 0.0
  %1805 = vmatprep.subr.mxu0 0.0
  %1806 = vmatpush1.msra.mxu0 0.0
  %1807 = vmatprep.subr.mxu0 0.0
  %1808 = vmatpush1.msra.mxu0 0.0
  %1809 = vmatprep.subr.mxu0 0.0
  %1810 = vmatpush1.msra.mxu0 0.0
  %1811 = vmatprep.subr.mxu0 0.0
  %1812 = vmatpush1.msra.mxu0 0.0
  %1813 = vmatprep.subr.mxu0 0.0
  %1814 = vmatpush1.msra.mxu0 0.0
  %1815 = vmatprep.subr.mxu0 0.0
  %1816 = vmatpush1.msra.mxu0 0.0
  %1817 = vmatprep.subr.mxu0 0.0
  %1818 = vmatpush1.msra.mxu0 0.0
  %1819 = vmatprep.subr.mxu0 0.0
  %1820 = vmatpush1.msra.mxu0 0.0
  %1821 = vmatprep.subr.mxu0 0.0
  %1822 = vmatpush1.msra.mxu0 0.0
  %1823 = vmatprep.subr.mxu0 0.0
  %1824 = vmatpush1.msra.mxu0 0.0
  %1825 = vmatprep.subr.mxu0 0.0
  %1826 = vmatpush1.msra.mxu0 0.0
  %1827 = vmatprep.mubr.f32.mxu0 0.0
  %1828 = vmatmul.mubr.f32.gmra.mrb[0].mxu0 %v1761
  %v1829 = vpop.f32.mrb[0].mxu0
  %v1830 = vadd.f32 %v1758, %v1829
  %v1831 = vpop.f32.mrb[0].mxu0
  %v1832 = vadd.f32 %v1758, %v1831
  %1833 = vdwg.mxu0
  %1834 = vmatprep.subr.mxu0 %v1746
  %1835 = vmatpush1.msra.mxu0 %v1745
  %1836 = vmatprep.subr.mxu0 0.0
  %1837 = vmatpush1.msra.mxu0 0.0
  %1838 = vmatprep.subr.mxu0 0.0
  %1839 = vmatpush1.msra.mxu0 0.0
  %1840 = vmatprep.subr.mxu0 0.0
  %1841 = vmatpush1.msra.mxu0 0.0
  %1842 = vmatprep.subr.mxu0 0.0
  %1843 = vmatpush1.msra.mxu0 0.0
  %1844 = vmatprep.subr.mxu0 0.0
  %1845 = vmatpush1.msra.mxu0 0.0
  %1846 = vmatprep.subr.mxu0 0.0
  %1847 = vmatpush1.msra.mxu0 0.0
  %1848 = vmatprep.subr.mxu0 0.0
  %1849 = vmatpush1.msra.mxu0 0.0
  %1850 = vmatprep.subr.mxu0 0.0
  %1851 = vmatpush1.msra.mxu0 0.0
  %1852 = vmatprep.subr.mxu0 0.0
  %1853 = vmatpush1.msra.mxu0 0.0
  %1854 = vmatprep.subr.mxu0 0.0
  %1855 = vmatpush1.msra.mxu0 0.0
  %1856 = vmatprep.subr.mxu0 0.0
  %1857 = vmatpush1.msra.mxu0 0.0
  %1858 = vmatprep.subr.mxu0 0.0
  %1859 = vmatpush1.msra.mxu0 0.0
  %1860 = vmatprep.subr.mxu0 0.0
  %1861 = vmatpush1.msra.mxu0 0.0
  %1862 = vmatprep.subr.mxu0 0.0
  %1863 = vmatpush1.msra.mxu0 0.0
  %1864 = vmatprep.subr.mxu0 0.0
  %1865 = vmatpush1.msra.mxu0 0.0
  %1866 = vmatprep.subr.mxu0 0.0
  %1867 = vmatpush1.msra.mxu0 0.0
  %1868 = vmatprep.subr.mxu0 0.0
  %1869 = vmatpush1.msra.mxu0 0.0
  %1870 = vmatprep.subr.mxu0 0.0
  %1871 = vmatpush1.msra.mxu0 0.0
  %1872 = vmatprep.subr.mxu0 0.0
  %1873 = vmatpush1.msra.mxu0 0.0
  %1874 = vmatprep.subr.mxu0 0.0
  %1875 = vmatpush1.msra.mxu0 0.0
  %1876 = vmatprep.subr.mxu0 0.0
  %1877 = vmatpush1.msra.mxu0 0.0
  %1878 = vmatprep.subr.mxu0 0.0
  %1879 = vmatpush1.msra.mxu0 0.0
  %1880 = vmatprep.subr.mxu0 0.0
  %1881 = vmatpush1.msra.mxu0 0.0
  %1882 = vmatprep.subr.mxu0 0.0
  %1883 = vmatpush1.msra.mxu0 0.0
  %1884 = vmatprep.subr.mxu0 0.0
  %1885 = vmatpush1.msra.mxu0 0.0
  %1886 = vmatprep.subr.mxu0 0.0
  %1887 = vmatpush1.msra.mxu0 0.0
  %1888 = vmatprep.subr.mxu0 0.0
  %1889 = vmatpush1.msra.mxu0 0.0
  %1890 = vmatprep.subr.mxu0 0.0
  %1891 = vmatpush1.msra.mxu0 0.0
  %1892 = vmatprep.subr.mxu0 0.0
  %1893 = vmatpush1.msra.mxu0 0.0
  %1894 = vmatprep.subr.mxu0 0.0
  %1895 = vmatpush1.msra.mxu0 0.0
  %1896 = vmatprep.subr.mxu0 0.0
  %1897 = vmatpush1.msra.mxu0 0.0
  %1898 = vmatprep.mubr.f32.mxu0 0.0
  %1899 = vmatmul.mubr.f32.gmra.mrb[0].mxu0 %v1761
  %v1900 = vpop.f32.mrb[0].mxu0
  %v1901 = vadd.f32 %v1758, %v1900
  %v1902 = vpop.f32.mrb[0].mxu0
  %v1903 = vadd.f32 %v1758, %v1902
  %1904 = vdwg.mxu0
  %1905 = vmatprep.subr.mxu0 %v1748
  %1906 = vmatpush1.msra.mxu0 %v1747
  %1907 = vmatprep.subr.mxu0 0.0
  %1908 = vmatpush1.msra.mxu0 0.0
  %1909 = vmatprep.subr.mxu0 0.0
  %1910 = vmatpush1.msra.mxu0 0.0
  %1911 = vmatprep.subr.mxu0 0.0
  %1912 = vmatpush1.msra.mxu0 0.0
  %1913 = vmatprep.subr.mxu0 0.0
  %1914 = vmatpush1.msra.mxu0 0.0
  %1915 = vmatprep.subr.mxu0 0.0
  %1916 = vmatpush1.msra.mxu0 0.0
  %1917 = vmatprep.subr.mxu0 0.0
  %1918 = vmatpush1.msra.mxu0 0.0
  %1919 = vmatprep.subr.mxu0 0.0
  %1920 = vmatpush1.msra.mxu0 0.0
  %1921 = vmatprep.subr.mxu0 0.0
  %1922 = vmatpush1.msra.mxu0 0.0
  %1923 = vmatprep.subr.mxu0 0.0
  %1924 = vmatpush1.msra.mxu0 0.0
  %1925 = vmatprep.subr.mxu0 0.0
  %1926 = vmatpush1.msra.mxu0 0.0
  %1927 = vmatprep.subr.mxu0 0.0
  %1928 = vmatpush1.msra.mxu0 0.0
  %1929 = vmatprep.subr.mxu0 0.0
  %1930 = vmatpush1.msra.mxu0 0.0
  %1931 = vmatprep.subr.mxu0 0.0
  %1932 = vmatpush1.msra.mxu0 0.0
  %1933 = vmatprep.subr.mxu0 0.0
  %1934 = vmatpush1.msra.mxu0 0.0
  %1935 = vmatprep.subr.mxu0 0.0
  %1936 = vmatpush1.msra.mxu0 0.0
  %1937 = vmatprep.subr.mxu0 0.0
  %1938 = vmatpush1.msra.mxu0 0.0
  %1939 = vmatprep.subr.mxu0 0.0
  %1940 = vmatpush1.msra.mxu0 0.0
  %1941 = vmatprep.subr.mxu0 0.0
  %1942 = vmatpush1.msra.mxu0 0.0
  %1943 = vmatprep.subr.mxu0 0.0
  %1944 = vmatpush1.msra.mxu0 0.0
  %1945 = vmatprep.subr.mxu0 0.0
  %1946 = vmatpush1.msra.mxu0 0.0
  %1947 = vmatprep.subr.mxu0 0.0
  %1948 = vmatpush1.msra.mxu0 0.0
  %1949 = vmatprep.subr.mxu0 0.0
  %1950 = vmatpush1.msra.mxu0 0.0
  %1951 = vmatprep.subr.mxu0 0.0
  %1952 = vmatpush1.msra.mxu0 0.0
  %1953 = vmatprep.subr.mxu0 0.0
  %1954 = vmatpush1.msra.mxu0 0.0
  %1955 = vmatprep.subr.mxu0 0.0
  %1956 = vmatpush1.msra.mxu0 0.0
  %1957 = vmatprep.subr.mxu0 0.0
  %1958 = vmatpush1.msra.mxu0 0.0
  %1959 = vmatprep.subr.mxu0 0.0
  %1960 = vmatpush1.msra.mxu0 0.0
  %1961 = vmatprep.subr.mxu0 0.0
  %1962 = vmatpush1.msra.mxu0 0.0
  %1963 = vmatprep.subr.mxu0 0.0
  %1964 = vmatpush1.msra.mxu0 0.0
  %1965 = vmatprep.subr.mxu0 0.0
  %1966 = vmatpush1.msra.mxu0 0.0
  %1967 = vmatprep.subr.mxu0 0.0
  %1968 = vmatpush1.msra.mxu0 0.0
  %1969 = vmatprep.mubr.f32.mxu0 0.0
  %1970 = vmatmul.mubr.f32.gmra.mrb[0].mxu0 %v1761
  %v1971 = vpop.f32.mrb[0].mxu0
  %v1972 = vadd.f32 %v1758, %v1971
  %v1973 = vpop.f32.mrb[0].mxu0
  %v1974 = vadd.f32 %v1758, %v1973
  %1975 = vdwg.mxu0
  %1976 = vmatprep.subr.mxu0 %v1750
  %1977 = vmatpush1.msra.mxu0 %v1749
  %1978 = vmatprep.subr.mxu0 0.0
  %1979 = vmatpush1.msra.mxu0 0.0
  %1980 = vmatprep.subr.mxu0 0.0
  %1981 = vmatpush1.msra.mxu0 0.0
  %1982 = vmatprep.subr.mxu0 0.0
  %1983 = vmatpush1.msra.mxu0 0.0
  %1984 = vmatprep.subr.mxu0 0.0
  %1985 = vmatpush1.msra.mxu0 0.0
  %1986 = vmatprep.subr.mxu0 0.0
  %1987 = vmatpush1.msra.mxu0 0.0
  %1988 = vmatprep.subr.mxu0 0.0
  %1989 = vmatpush1.msra.mxu0 0.0
  %1990 = vmatprep.subr.mxu0 0.0
  %1991 = vmatpush1.msra.mxu0 0.0
  %1992 = vmatprep.subr.mxu0 0.0
  %1993 = vmatpush1.msra.mxu0 0.0
  %1994 = vmatprep.subr.mxu0 0.0
  %1995 = vmatpush1.msra.mxu0 0.0
  %1996 = vmatprep.subr.mxu0 0.0
  %1997 = vmatpush1.msra.mxu0 0.0
  %1998 = vmatprep.subr.mxu0 0.0
  %1999 = vmatpush1.msra.mxu0 0.0
  %2000 = vmatprep.subr.mxu0 0.0
  %2001 = vmatpush1.msra.mxu0 0.0
  %2002 = vmatprep.subr.mxu0 0.0
  %2003 = vmatpush1.msra.mxu0 0.0
  %2004 = vmatprep.subr.mxu0 0.0
  %2005 = vmatpush1.msra.mxu0 0.0
  %2006 = vmatprep.subr.mxu0 0.0
  %2007 = vmatpush1.msra.mxu0 0.0
  %2008 = vmatprep.subr.mxu0 0.0
  %2009 = vmatpush1.msra.mxu0 0.0
  %2010 = vmatprep.subr.mxu0 0.0
  %2011 = vmatpush1.msra.mxu0 0.0
  %2012 = vmatprep.subr.mxu0 0.0
  %2013 = vmatpush1.msra.mxu0 0.0
  %2014 = vmatprep.subr.mxu0 0.0
  %2015 = vmatpush1.msra.mxu0 0.0
  %2016 = vmatprep.subr.mxu0 0.0
  %2017 = vmatpush1.msra.mxu0 0.0
  %2018 = vmatprep.subr.mxu0 0.0
  %2019 = vmatpush1.msra.mxu0 0.0
  %2020 = vmatprep.subr.mxu0 0.0
  %2021 = vmatpush1.msra.mxu0 0.0
  %2022 = vmatprep.subr.mxu0 0.0
  %2023 = vmatpush1.msra.mxu0 0.0
  %2024 = vmatprep.subr.mxu0 0.0
  %2025 = vmatpush1.msra.mxu0 0.0
  %2026 = vmatprep.subr.mxu0 0.0
  %2027 = vmatpush1.msra.mxu0 0.0
  %2028 = vmatprep.subr.mxu0 0.0
  %2029 = vmatpush1.msra.mxu0 0.0
  %2030 = vmatprep.subr.mxu0 0.0
  %2031 = vmatpush1.msra.mxu0 0.0
  %2032 = vmatprep.subr.mxu0 0.0
  %2033 = vmatpush1.msra.mxu0 0.0
  %2034 = vmatprep.subr.mxu0 0.0
  %2035 = vmatpush1.msra.mxu0 0.0
  %2036 = vmatprep.subr.mxu0 0.0
  %2037 = vmatpush1.msra.mxu0 0.0
  %2038 = vmatprep.subr.mxu0 0.0
  %2039 = vmatpush1.msra.mxu0 0.0
  %2040 = vmatprep.mubr.f32.mxu0 0.0
  %2041 = vmatmul.mubr.f32.gmra.mrb[0].mxu0 %v1761
  %v2042 = vpop.f32.mrb[0].mxu0
  %v2043 = vadd.f32 %v1758, %v2042
  %v2044 = vpop.f32.mrb[0].mxu0
  %v2045 = vadd.f32 %v1758, %v2044
  %2046 = vdwg.mxu0
  %v2047 = vmax.f32 %v1830, 0.0
  %v2048 = vmax.f32 %v1832, 0.0
  %v2049 = vmax.f32 %v1901, 0.0
  %v2050 = vmax.f32 %v1903, 0.0
  %v2051 = vmax.f32 %v1972, 0.0
  %v2052 = vmax.f32 %v1974, 0.0
  %v2053 = vmax.f32 %v2043, 0.0
  %v2054 = vmax.f32 %v2045, 0.0
  %s2055 = scalar_lea.vmem %s4, 80
  %v2056 = vld [vmem:[%s2055] sm:$0xff]
  %s2057 = scalar_lea.vmem %s5, 80
  %v2058 = vld [vmem:[%s2057] sm:$0xff]
  %2060 = vset.pattern.permute.xlu0 0
  %2061 = vperm.xlu0 %2060, %v2058
  %v2062 = vpop.permute.xlu0 %2061
  %v2065 = vsel %vm527, %v2056, 0
  %2067 = vmatprep.subr.mxu0 %v2048
  %2068 = vmatpush1.msra.mxu0 %v2047
  %2069 = vmatprep.subr.mxu0 0.0
  %2070 = vmatpush1.msra.mxu0 0.0
  %2071 = vmatprep.subr.mxu0 0.0
  %2072 = vmatpush1.msra.mxu0 0.0
  %2073 = vmatprep.subr.mxu0 0.0
  %2074 = vmatpush1.msra.mxu0 0.0
  %2075 = vmatprep.subr.mxu0 0.0
  %2076 = vmatpush1.msra.mxu0 0.0
  %2077 = vmatprep.subr.mxu0 0.0
  %2078 = vmatpush1.msra.mxu0 0.0
  %2079 = vmatprep.subr.mxu0 0.0
  %2080 = vmatpush1.msra.mxu0 0.0
  %2081 = vmatprep.subr.mxu0 0.0
  %2082 = vmatpush1.msra.mxu0 0.0
  %2083 = vmatprep.subr.mxu0 0.0
  %2084 = vmatpush1.msra.mxu0 0.0
  %2085 = vmatprep.subr.mxu0 0.0
  %2086 = vmatpush1.msra.mxu0 0.0
  %2087 = vmatprep.subr.mxu0 0.0
  %2088 = vmatpush1.msra.mxu0 0.0
  %2089 = vmatprep.subr.mxu0 0.0
  %2090 = vmatpush1.msra.mxu0 0.0
  %2091 = vmatprep.subr.mxu0 0.0
  %2092 = vmatpush1.msra.mxu0 0.0
  %2093 = vmatprep.subr.mxu0 0.0
  %2094 = vmatpush1.msra.mxu0 0.0
  %2095 = vmatprep.subr.mxu0 0.0
  %2096 = vmatpush1.msra.mxu0 0.0
  %2097 = vmatprep.subr.mxu0 0.0
  %2098 = vmatpush1.msra.mxu0 0.0
  %2099 = vmatprep.subr.mxu0 0.0
  %2100 = vmatpush1.msra.mxu0 0.0
  %2101 = vmatprep.subr.mxu0 0.0
  %2102 = vmatpush1.msra.mxu0 0.0
  %2103 = vmatprep.subr.mxu0 0.0
  %2104 = vmatpush1.msra.mxu0 0.0
  %2105 = vmatprep.subr.mxu0 0.0
  %2106 = vmatpush1.msra.mxu0 0.0
  %2107 = vmatprep.subr.mxu0 0.0
  %2108 = vmatpush1.msra.mxu0 0.0
  %2109 = vmatprep.subr.mxu0 0.0
  %2110 = vmatpush1.msra.mxu0 0.0
  %2111 = vmatprep.subr.mxu0 0.0
  %2112 = vmatpush1.msra.mxu0 0.0
  %2113 = vmatprep.subr.mxu0 0.0
  %2114 = vmatpush1.msra.mxu0 0.0
  %2115 = vmatprep.subr.mxu0 0.0
  %2116 = vmatpush1.msra.mxu0 0.0
  %2117 = vmatprep.subr.mxu0 0.0
  %2118 = vmatpush1.msra.mxu0 0.0
  %2119 = vmatprep.subr.mxu0 0.0
  %2120 = vmatpush1.msra.mxu0 0.0
  %2121 = vmatprep.subr.mxu0 0.0
  %2122 = vmatpush1.msra.mxu0 0.0
  %2123 = vmatprep.subr.mxu0 0.0
  %2124 = vmatpush1.msra.mxu0 0.0
  %2125 = vmatprep.subr.mxu0 0.0
  %2126 = vmatpush1.msra.mxu0 0.0
  %2127 = vmatprep.subr.mxu0 0.0
  %2128 = vmatpush1.msra.mxu0 0.0
  %2129 = vmatprep.subr.mxu0 0.0
  %2130 = vmatpush1.msra.mxu0 0.0
  %2131 = vmatprep.mubr.f32.mxu0 0.0
  %2132 = vmatmul.mubr.f32.gmra.mrb[0].mxu0 %v2065
  %v2133 = vpop.f32.mrb[0].mxu0
  %v2134 = vadd.f32 %v2062, %v2133
  %v2135 = vpop.f32.mrb[0].mxu0
  %v2136 = vadd.f32 %v2062, %v2135
  %2137 = vdwg.mxu0
  %2138 = vmatprep.subr.mxu0 %v2050
  %2139 = vmatpush1.msra.mxu0 %v2049
  %2140 = vmatprep.subr.mxu0 0.0
  %2141 = vmatpush1.msra.mxu0 0.0
  %2142 = vmatprep.subr.mxu0 0.0
  %2143 = vmatpush1.msra.mxu0 0.0
  %2144 = vmatprep.subr.mxu0 0.0
  %2145 = vmatpush1.msra.mxu0 0.0
  %2146 = vmatprep.subr.mxu0 0.0
  %2147 = vmatpush1.msra.mxu0 0.0
  %2148 = vmatprep.subr.mxu0 0.0
  %2149 = vmatpush1.msra.mxu0 0.0
  %2150 = vmatprep.subr.mxu0 0.0
  %2151 = vmatpush1.msra.mxu0 0.0
  %2152 = vmatprep.subr.mxu0 0.0
  %2153 = vmatpush1.msra.mxu0 0.0
  %2154 = vmatprep.subr.mxu0 0.0
  %2155 = vmatpush1.msra.mxu0 0.0
  %2156 = vmatprep.subr.mxu0 0.0
  %2157 = vmatpush1.msra.mxu0 0.0
  %2158 = vmatprep.subr.mxu0 0.0
  %2159 = vmatpush1.msra.mxu0 0.0
  %2160 = vmatprep.subr.mxu0 0.0
  %2161 = vmatpush1.msra.mxu0 0.0
  %2162 = vmatprep.subr.mxu0 0.0
  %2163 = vmatpush1.msra.mxu0 0.0
  %2164 = vmatprep.subr.mxu0 0.0
  %2165 = vmatpush1.msra.mxu0 0.0
  %2166 = vmatprep.subr.mxu0 0.0
  %2167 = vmatpush1.msra.mxu0 0.0
  %2168 = vmatprep.subr.mxu0 0.0
  %2169 = vmatpush1.msra.mxu0 0.0
  %2170 = vmatprep.subr.mxu0 0.0
  %2171 = vmatpush1.msra.mxu0 0.0
  %2172 = vmatprep.subr.mxu0 0.0
  %2173 = vmatpush1.msra.mxu0 0.0
  %2174 = vmatprep.subr.mxu0 0.0
  %2175 = vmatpush1.msra.mxu0 0.0
  %2176 = vmatprep.subr.mxu0 0.0
  %2177 = vmatpush1.msra.mxu0 0.0
  %2178 = vmatprep.subr.mxu0 0.0
  %2179 = vmatpush1.msra.mxu0 0.0
  %2180 = vmatprep.subr.mxu0 0.0
  %2181 = vmatpush1.msra.mxu0 0.0
  %2182 = vmatprep.subr.mxu0 0.0
  %2183 = vmatpush1.msra.mxu0 0.0
  %2184 = vmatprep.subr.mxu0 0.0
  %2185 = vmatpush1.msra.mxu0 0.0
  %2186 = vmatprep.subr.mxu0 0.0
  %2187 = vmatpush1.msra.mxu0 0.0
  %2188 = vmatprep.subr.mxu0 0.0
  %2189 = vmatpush1.msra.mxu0 0.0
  %2190 = vmatprep.subr.mxu0 0.0
  %2191 = vmatpush1.msra.mxu0 0.0
  %2192 = vmatprep.subr.mxu0 0.0
  %2193 = vmatpush1.msra.mxu0 0.0
  %2194 = vmatprep.subr.mxu0 0.0
  %2195 = vmatpush1.msra.mxu0 0.0
  %2196 = vmatprep.subr.mxu0 0.0
  %2197 = vmatpush1.msra.mxu0 0.0
  %2198 = vmatprep.subr.mxu0 0.0
  %2199 = vmatpush1.msra.mxu0 0.0
  %2200 = vmatprep.subr.mxu0 0.0
  %2201 = vmatpush1.msra.mxu0 0.0
  %2202 = vmatprep.mubr.f32.mxu0 0.0
  %2203 = vmatmul.mubr.f32.gmra.mrb[0].mxu0 %v2065
  %v2204 = vpop.f32.mrb[0].mxu0
  %v2205 = vadd.f32 %v2062, %v2204
  %v2206 = vpop.f32.mrb[0].mxu0
  %v2207 = vadd.f32 %v2062, %v2206
  %2208 = vdwg.mxu0
  %2209 = vmatprep.subr.mxu0 %v2052
  %2210 = vmatpush1.msra.mxu0 %v2051
  %2211 = vmatprep.subr.mxu0 0.0
  %2212 = vmatpush1.msra.mxu0 0.0
  %2213 = vmatprep.subr.mxu0 0.0
  %2214 = vmatpush1.msra.mxu0 0.0
  %2215 = vmatprep.subr.mxu0 0.0
  %2216 = vmatpush1.msra.mxu0 0.0
  %2217 = vmatprep.subr.mxu0 0.0
  %2218 = vmatpush1.msra.mxu0 0.0
  %2219 = vmatprep.subr.mxu0 0.0
  %2220 = vmatpush1.msra.mxu0 0.0
  %2221 = vmatprep.subr.mxu0 0.0
  %2222 = vmatpush1.msra.mxu0 0.0
  %2223 = vmatprep.subr.mxu0 0.0
  %2224 = vmatpush1.msra.mxu0 0.0
  %2225 = vmatprep.subr.mxu0 0.0
  %2226 = vmatpush1.msra.mxu0 0.0
  %2227 = vmatprep.subr.mxu0 0.0
  %2228 = vmatpush1.msra.mxu0 0.0
  %2229 = vmatprep.subr.mxu0 0.0
  %2230 = vmatpush1.msra.mxu0 0.0
  %2231 = vmatprep.subr.mxu0 0.0
  %2232 = vmatpush1.msra.mxu0 0.0
  %2233 = vmatprep.subr.mxu0 0.0
  %2234 = vmatpush1.msra.mxu0 0.0
  %2235 = vmatprep.subr.mxu0 0.0
  %2236 = vmatpush1.msra.mxu0 0.0
  %2237 = vmatprep.subr.mxu0 0.0
  %2238 = vmatpush1.msra.mxu0 0.0
  %2239 = vmatprep.subr.mxu0 0.0
  %2240 = vmatpush1.msra.mxu0 0.0
  %2241 = vmatprep.subr.mxu0 0.0
  %2242 = vmatpush1.msra.mxu0 0.0
  %2243 = vmatprep.subr.mxu0 0.0
  %2244 = vmatpush1.msra.mxu0 0.0
  %2245 = vmatprep.subr.mxu0 0.0
  %2246 = vmatpush1.msra.mxu0 0.0
  %2247 = vmatprep.subr.mxu0 0.0
  %2248 = vmatpush1.msra.mxu0 0.0
  %2249 = vmatprep.subr.mxu0 0.0
  %2250 = vmatpush1.msra.mxu0 0.0
  %2251 = vmatprep.subr.mxu0 0.0
  %2252 = vmatpush1.msra.mxu0 0.0
  %2253 = vmatprep.subr.mxu0 0.0
  %2254 = vmatpush1.msra.mxu0 0.0
  %2255 = vmatprep.subr.mxu0 0.0
  %2256 = vmatpush1.msra.mxu0 0.0
  %2257 = vmatprep.subr.mxu0 0.0
  %2258 = vmatpush1.msra.mxu0 0.0
  %2259 = vmatprep.subr.mxu0 0.0
  %2260 = vmatpush1.msra.mxu0 0.0
  %2261 = vmatprep.subr.mxu0 0.0
  %2262 = vmatpush1.msra.mxu0 0.0
  %2263 = vmatprep.subr.mxu0 0.0
  %2264 = vmatpush1.msra.mxu0 0.0
  %2265 = vmatprep.subr.mxu0 0.0
  %2266 = vmatpush1.msra.mxu0 0.0
  %2267 = vmatprep.subr.mxu0 0.0
  %2268 = vmatpush1.msra.mxu0 0.0
  %2269 = vmatprep.subr.mxu0 0.0
  %2270 = vmatpush1.msra.mxu0 0.0
  %2271 = vmatprep.subr.mxu0 0.0
  %2272 = vmatpush1.msra.mxu0 0.0
  %2273 = vmatprep.mubr.f32.mxu0 0.0
  %2274 = vmatmul.mubr.f32.gmra.mrb[0].mxu0 %v2065
  %v2275 = vpop.f32.mrb[0].mxu0
  %v2276 = vadd.f32 %v2062, %v2275
  %v2277 = vpop.f32.mrb[0].mxu0
  %v2278 = vadd.f32 %v2062, %v2277
  %2279 = vdwg.mxu0
  %2280 = vmatprep.subr.mxu0 %v2054
  %2281 = vmatpush1.msra.mxu0 %v2053
  %2282 = vmatprep.subr.mxu0 0.0
  %2283 = vmatpush1.msra.mxu0 0.0
  %2284 = vmatprep.subr.mxu0 0.0
  %2285 = vmatpush1.msra.mxu0 0.0
  %2286 = vmatprep.subr.mxu0 0.0
  %2287 = vmatpush1.msra.mxu0 0.0
  %2288 = vmatprep.subr.mxu0 0.0
  %2289 = vmatpush1.msra.mxu0 0.0
  %2290 = vmatprep.subr.mxu0 0.0
  %2291 = vmatpush1.msra.mxu0 0.0
  %2292 = vmatprep.subr.mxu0 0.0
  %2293 = vmatpush1.msra.mxu0 0.0
  %2294 = vmatprep.subr.mxu0 0.0
  %2295 = vmatpush1.msra.mxu0 0.0
  %2296 = vmatprep.subr.mxu0 0.0
  %2297 = vmatpush1.msra.mxu0 0.0
  %2298 = vmatprep.subr.mxu0 0.0
  %2299 = vmatpush1.msra.mxu0 0.0
  %2300 = vmatprep.subr.mxu0 0.0
  %2301 = vmatpush1.msra.mxu0 0.0
  %2302 = vmatprep.subr.mxu0 0.0
  %2303 = vmatpush1.msra.mxu0 0.0
  %2304 = vmatprep.subr.mxu0 0.0
  %2305 = vmatpush1.msra.mxu0 0.0
  %2306 = vmatprep.subr.mxu0 0.0
  %2307 = vmatpush1.msra.mxu0 0.0
  %2308 = vmatprep.subr.mxu0 0.0
  %2309 = vmatpush1.msra.mxu0 0.0
  %2310 = vmatprep.subr.mxu0 0.0
  %2311 = vmatpush1.msra.mxu0 0.0
  %2312 = vmatprep.subr.mxu0 0.0
  %2313 = vmatpush1.msra.mxu0 0.0
  %2314 = vmatprep.subr.mxu0 0.0
  %2315 = vmatpush1.msra.mxu0 0.0
  %2316 = vmatprep.subr.mxu0 0.0
  %2317 = vmatpush1.msra.mxu0 0.0
  %2318 = vmatprep.subr.mxu0 0.0
  %2319 = vmatpush1.msra.mxu0 0.0
  %2320 = vmatprep.subr.mxu0 0.0
  %2321 = vmatpush1.msra.mxu0 0.0
  %2322 = vmatprep.subr.mxu0 0.0
  %2323 = vmatpush1.msra.mxu0 0.0
  %2324 = vmatprep.subr.mxu0 0.0
  %2325 = vmatpush1.msra.mxu0 0.0
  %2326 = vmatprep.subr.mxu0 0.0
  %2327 = vmatpush1.msra.mxu0 0.0
  %2328 = vmatprep.subr.mxu0 0.0
  %2329 = vmatpush1.msra.mxu0 0.0
  %2330 = vmatprep.subr.mxu0 0.0
  %2331 = vmatpush1.msra.mxu0 0.0
  %2332 = vmatprep.subr.mxu0 0.0
  %2333 = vmatpush1.msra.mxu0 0.0
  %2334 = vmatprep.subr.mxu0 0.0
  %2335 = vmatpush1.msra.mxu0 0.0
  %2336 = vmatprep.subr.mxu0 0.0
  %2337 = vmatpush1.msra.mxu0 0.0
  %2338 = vmatprep.subr.mxu0 0.0
  %2339 = vmatpush1.msra.mxu0 0.0
  %2340 = vmatprep.subr.mxu0 0.0
  %2341 = vmatpush1.msra.mxu0 0.0
  %2342 = vmatprep.subr.mxu0 0.0
  %2343 = vmatpush1.msra.mxu0 0.0
  %2344 = vmatprep.mubr.f32.mxu0 0.0
  %2345 = vmatmul.mubr.f32.gmra.mrb[0].mxu0 %v2065
  %v2346 = vpop.f32.mrb[0].mxu0
  %v2347 = vadd.f32 %v2062, %v2346
  %v2348 = vpop.f32.mrb[0].mxu0
  %v2349 = vadd.f32 %v2062, %v2348
  %2350 = vdwg.mxu0
  %v2351 = vmax.f32 %v2134, 0.0
  %v2352 = vmax.f32 %v2136, 0.0
  %v2353 = vmax.f32 %v2205, 0.0
  %v2354 = vmax.f32 %v2207, 0.0
  %v2355 = vmax.f32 %v2276, 0.0
  %v2356 = vmax.f32 %v2278, 0.0
  %v2357 = vmax.f32 %v2347, 0.0
  %v2358 = vmax.f32 %v2349, 0.0
  %v2359 = vadd.f32 %v2351, %v193
  %v2360 = vadd.f32 %v2352, %v195
  %v2361 = vadd.f32 %v2353, %v294
  %v2362 = vadd.f32 %v2354, %v296
  %v2363 = vadd.f32 %v2355, %v395
  %v2364 = vadd.f32 %v2356, %v397
  %v2365 = vadd.f32 %v2357, %v496
  %v2366 = vadd.f32 %v2358, %v498
  %s2367 = scalar_lea.vmem %s4, 96
  %v2368 = vld [vmem:[%s2367] sm:$0xff]
  %s2369 = scalar_lea.vmem %s5, 96
  %v2370 = vld [vmem:[%s2369] sm:$0xff]
  %2372 = vset.pattern.permute.xlu0 0
  %2373 = vperm.xlu0 %2372, %v2370
  %v2374 = vpop.permute.xlu0 %2373
  %v2377 = vsel %vm527, %v2368, 0
  %2379 = vmatprep.subr.mxu0 %v2360
  %2380 = vmatpush1.msra.mxu0 %v2359
  %2381 = vmatprep.subr.mxu0 0.0
  %2382 = vmatpush1.msra.mxu0 0.0
  %2383 = vmatprep.subr.mxu0 0.0
  %2384 = vmatpush1.msra.mxu0 0.0
  %2385 = vmatprep.subr.mxu0 0.0
  %2386 = vmatpush1.msra.mxu0 0.0
  %2387 = vmatprep.subr.mxu0 0.0
  %2388 = vmatpush1.msra.mxu0 0.0
  %2389 = vmatprep.subr.mxu0 0.0
  %2390 = vmatpush1.msra.mxu0 0.0
  %2391 = vmatprep.subr.mxu0 0.0
  %2392 = vmatpush1.msra.mxu0 0.0
  %2393 = vmatprep.subr.mxu0 0.0
  %2394 = vmatpush1.msra.mxu0 0.0
  %2395 = vmatprep.subr.mxu0 0.0
  %2396 = vmatpush1.msra.mxu0 0.0
  %2397 = vmatprep.subr.mxu0 0.0
  %2398 = vmatpush1.msra.mxu0 0.0
  %2399 = vmatprep.subr.mxu0 0.0
  %2400 = vmatpush1.msra.mxu0 0.0
  %2401 = vmatprep.subr.mxu0 0.0
  %2402 = vmatpush1.msra.mxu0 0.0
  %2403 = vmatprep.subr.mxu0 0.0
  %2404 = vmatpush1.msra.mxu0 0.0
  %2405 = vmatprep.subr.mxu0 0.0
  %2406 = vmatpush1.msra.mxu0 0.0
  %2407 = vmatprep.subr.mxu0 0.0
  %2408 = vmatpush1.msra.mxu0 0.0
  %2409 = vmatprep.subr.mxu0 0.0
  %2410 = vmatpush1.msra.mxu0 0.0
  %2411 = vmatprep.subr.mxu0 0.0
  %2412 = vmatpush1.msra.mxu0 0.0
  %2413 = vmatprep.subr.mxu0 0.0
  %2414 = vmatpush1.msra.mxu0 0.0
  %2415 = vmatprep.subr.mxu0 0.0
  %2416 = vmatpush1.msra.mxu0 0.0
  %2417 = vmatprep.subr.mxu0 0.0
  %2418 = vmatpush1.msra.mxu0 0.0
  %2419 = vmatprep.subr.mxu0 0.0
  %2420 = vmatpush1.msra.mxu0 0.0
  %2421 = vmatprep.subr.mxu0 0.0
  %2422 = vmatpush1.msra.mxu0 0.0
  %2423 = vmatprep.subr.mxu0 0.0
  %2424 = vmatpush1.msra.mxu0 0.0
  %2425 = vmatprep.subr.mxu0 0.0
  %2426 = vmatpush1.msra.mxu0 0.0
  %2427 = vmatprep.subr.mxu0 0.0
  %2428 = vmatpush1.msra.mxu0 0.0
  %2429 = vmatprep.subr.mxu0 0.0
  %2430 = vmatpush1.msra.mxu0 0.0
  %2431 = vmatprep.subr.mxu0 0.0
  %2432 = vmatpush1.msra.mxu0 0.0
  %2433 = vmatprep.subr.mxu0 0.0
  %2434 = vmatpush1.msra.mxu0 0.0
  %2435 = vmatprep.subr.mxu0 0.0
  %2436 = vmatpush1.msra.mxu0 0.0
  %2437 = vmatprep.subr.mxu0 0.0
  %2438 = vmatpush1.msra.mxu0 0.0
  %2439 = vmatprep.subr.mxu0 0.0
  %2440 = vmatpush1.msra.mxu0 0.0
  %2441 = vmatprep.subr.mxu0 0.0
  %2442 = vmatpush1.msra.mxu0 0.0
  %2443 = vmatprep.mubr.f32.mxu0 0.0
  %2444 = vmatmul.mubr.f32.gmra.mrb[0].mxu0 %v2377
  %v2445 = vpop.f32.mrb[0].mxu0
  %v2446 = vadd.f32 %v2374, %v2445
  %v2447 = vpop.f32.mrb[0].mxu0
  %v2448 = vadd.f32 %v2374, %v2447
  %2449 = vdwg.mxu0
  %2450 = vmatprep.subr.mxu0 %v2362
  %2451 = vmatpush1.msra.mxu0 %v2361
  %2452 = vmatprep.subr.mxu0 0.0
  %2453 = vmatpush1.msra.mxu0 0.0
  %2454 = vmatprep.subr.mxu0 0.0
  %2455 = vmatpush1.msra.mxu0 0.0
  %2456 = vmatprep.subr.mxu0 0.0
  %2457 = vmatpush1.msra.mxu0 0.0
  %2458 = vmatprep.subr.mxu0 0.0
  %2459 = vmatpush1.msra.mxu0 0.0
  %2460 = vmatprep.subr.mxu0 0.0
  %2461 = vmatpush1.msra.mxu0 0.0
  %2462 = vmatprep.subr.mxu0 0.0
  %2463 = vmatpush1.msra.mxu0 0.0
  %2464 = vmatprep.subr.mxu0 0.0
  %2465 = vmatpush1.msra.mxu0 0.0
  %2466 = vmatprep.subr.mxu0 0.0
  %2467 = vmatpush1.msra.mxu0 0.0
  %2468 = vmatprep.subr.mxu0 0.0
  %2469 = vmatpush1.msra.mxu0 0.0
  %2470 = vmatprep.subr.mxu0 0.0
  %2471 = vmatpush1.msra.mxu0 0.0
  %2472 = vmatprep.subr.mxu0 0.0
  %2473 = vmatpush1.msra.mxu0 0.0
  %2474 = vmatprep.subr.mxu0 0.0
  %2475 = vmatpush1.msra.mxu0 0.0
  %2476 = vmatprep.subr.mxu0 0.0
  %2477 = vmatpush1.msra.mxu0 0.0
  %2478 = vmatprep.subr.mxu0 0.0
  %2479 = vmatpush1.msra.mxu0 0.0
  %2480 = vmatprep.subr.mxu0 0.0
  %2481 = vmatpush1.msra.mxu0 0.0
  %2482 = vmatprep.subr.mxu0 0.0
  %2483 = vmatpush1.msra.mxu0 0.0
  %2484 = vmatprep.subr.mxu0 0.0
  %2485 = vmatpush1.msra.mxu0 0.0
  %2486 = vmatprep.subr.mxu0 0.0
  %2487 = vmatpush1.msra.mxu0 0.0
  %2488 = vmatprep.subr.mxu0 0.0
  %2489 = vmatpush1.msra.mxu0 0.0
  %2490 = vmatprep.subr.mxu0 0.0
  %2491 = vmatpush1.msra.mxu0 0.0
  %2492 = vmatprep.subr.mxu0 0.0
  %2493 = vmatpush1.msra.mxu0 0.0
  %2494 = vmatprep.subr.mxu0 0.0
  %2495 = vmatpush1.msra.mxu0 0.0
  %2496 = vmatprep.subr.mxu0 0.0
  %2497 = vmatpush1.msra.mxu0 0.0
  %2498 = vmatprep.subr.mxu0 0.0
  %2499 = vmatpush1.msra.mxu0 0.0
  %2500 = vmatprep.subr.mxu0 0.0
  %2501 = vmatpush1.msra.mxu0 0.0
  %2502 = vmatprep.subr.mxu0 0.0
  %2503 = vmatpush1.msra.mxu0 0.0
  %2504 = vmatprep.subr.mxu0 0.0
  %2505 = vmatpush1.msra.mxu0 0.0
  %2506 = vmatprep.subr.mxu0 0.0
  %2507 = vmatpush1.msra.mxu0 0.0
  %2508 = vmatprep.subr.mxu0 0.0
  %2509 = vmatpush1.msra.mxu0 0.0
  %2510 = vmatprep.subr.mxu0 0.0
  %2511 = vmatpush1.msra.mxu0 0.0
  %2512 = vmatprep.subr.mxu0 0.0
  %2513 = vmatpush1.msra.mxu0 0.0
  %2514 = vmatprep.mubr.f32.mxu0 0.0
  %2515 = vmatmul.mubr.f32.gmra.mrb[0].mxu0 %v2377
  %v2516 = vpop.f32.mrb[0].mxu0
  %v2517 = vadd.f32 %v2374, %v2516
  %v2518 = vpop.f32.mrb[0].mxu0
  %v2519 = vadd.f32 %v2374, %v2518
  %2520 = vdwg.mxu0
  %2521 = vmatprep.subr.mxu0 %v2364
  %2522 = vmatpush1.msra.mxu0 %v2363
  %2523 = vmatprep.subr.mxu0 0.0
  %2524 = vmatpush1.msra.mxu0 0.0
  %2525 = vmatprep.subr.mxu0 0.0
  %2526 = vmatpush1.msra.mxu0 0.0
  %2527 = vmatprep.subr.mxu0 0.0
  %2528 = vmatpush1.msra.mxu0 0.0
  %2529 = vmatprep.subr.mxu0 0.0
  %2530 = vmatpush1.msra.mxu0 0.0
  %2531 = vmatprep.subr.mxu0 0.0
  %2532 = vmatpush1.msra.mxu0 0.0
  %2533 = vmatprep.subr.mxu0 0.0
  %2534 = vmatpush1.msra.mxu0 0.0
  %2535 = vmatprep.subr.mxu0 0.0
  %2536 = vmatpush1.msra.mxu0 0.0
  %2537 = vmatprep.subr.mxu0 0.0
  %2538 = vmatpush1.msra.mxu0 0.0
  %2539 = vmatprep.subr.mxu0 0.0
  %2540 = vmatpush1.msra.mxu0 0.0
  %2541 = vmatprep.subr.mxu0 0.0
  %2542 = vmatpush1.msra.mxu0 0.0
  %2543 = vmatprep.subr.mxu0 0.0
  %2544 = vmatpush1.msra.mxu0 0.0
  %2545 = vmatprep.subr.mxu0 0.0
  %2546 = vmatpush1.msra.mxu0 0.0
  %2547 = vmatprep.subr.mxu0 0.0
  %2548 = vmatpush1.msra.mxu0 0.0
  %2549 = vmatprep.subr.mxu0 0.0
  %2550 = vmatpush1.msra.mxu0 0.0
  %2551 = vmatprep.subr.mxu0 0.0
  %2552 = vmatpush1.msra.mxu0 0.0
  %2553 = vmatprep.subr.mxu0 0.0
  %2554 = vmatpush1.msra.mxu0 0.0
  %2555 = vmatprep.subr.mxu0 0.0
  %2556 = vmatpush1.msra.mxu0 0.0
  %2557 = vmatprep.subr.mxu0 0.0
  %2558 = vmatpush1.msra.mxu0 0.0
  %2559 = vmatprep.subr.mxu0 0.0
  %2560 = vmatpush1.msra.mxu0 0.0
  %2561 = vmatprep.subr.mxu0 0.0
  %2562 = vmatpush1.msra.mxu0 0.0
  %2563 = vmatprep.subr.mxu0 0.0
  %2564 = vmatpush1.msra.mxu0 0.0
  %2565 = vmatprep.subr.mxu0 0.0
  %2566 = vmatpush1.msra.mxu0 0.0
  %2567 = vmatprep.subr.mxu0 0.0
  %2568 = vmatpush1.msra.mxu0 0.0
  %2569 = vmatprep.subr.mxu0 0.0
  %2570 = vmatpush1.msra.mxu0 0.0
  %2571 = vmatprep.subr.mxu0 0.0
  %2572 = vmatpush1.msra.mxu0 0.0
  %2573 = vmatprep.subr.mxu0 0.0
  %2574 = vmatpush1.msra.mxu0 0.0
  %2575 = vmatprep.subr.mxu0 0.0
  %2576 = vmatpush1.msra.mxu0 0.0
  %2577 = vmatprep.subr.mxu0 0.0
  %2578 = vmatpush1.msra.mxu0 0.0
  %2579 = vmatprep.subr.mxu0 0.0
  %2580 = vmatpush1.msra.mxu0 0.0
  %2581 = vmatprep.subr.mxu0 0.0
  %2582 = vmatpush1.msra.mxu0 0.0
  %2583 = vmatprep.subr.mxu0 0.0
  %2584 = vmatpush1.msra.mxu0 0.0
  %2585 = vmatprep.mubr.f32.mxu0 0.0
  %2586 = vmatmul.mubr.f32.gmra.mrb[0].mxu0 %v2377
  %v2587 = vpop.f32.mrb[0].mxu0
  %v2588 = vadd.f32 %v2374, %v2587
  %v2589 = vpop.f32.mrb[0].mxu0
  %v2590 = vadd.f32 %v2374, %v2589
  %2591 = vdwg.mxu0
  %2592 = vmatprep.subr.mxu0 %v2366
  %2593 = vmatpush1.msra.mxu0 %v2365
  %2594 = vmatprep.subr.mxu0 0.0
  %2595 = vmatpush1.msra.mxu0 0.0
  %2596 = vmatprep.subr.mxu0 0.0
  %2597 = vmatpush1.msra.mxu0 0.0
  %2598 = vmatprep.subr.mxu0 0.0
  %2599 = vmatpush1.msra.mxu0 0.0
  %2600 = vmatprep.subr.mxu0 0.0
  %2601 = vmatpush1.msra.mxu0 0.0
  %2602 = vmatprep.subr.mxu0 0.0
  %2603 = vmatpush1.msra.mxu0 0.0
  %2604 = vmatprep.subr.mxu0 0.0
  %2605 = vmatpush1.msra.mxu0 0.0
  %2606 = vmatprep.subr.mxu0 0.0
  %2607 = vmatpush1.msra.mxu0 0.0
  %2608 = vmatprep.subr.mxu0 0.0
  %2609 = vmatpush1.msra.mxu0 0.0
  %2610 = vmatprep.subr.mxu0 0.0
  %2611 = vmatpush1.msra.mxu0 0.0
  %2612 = vmatprep.subr.mxu0 0.0
  %2613 = vmatpush1.msra.mxu0 0.0
  %2614 = vmatprep.subr.mxu0 0.0
  %2615 = vmatpush1.msra.mxu0 0.0
  %2616 = vmatprep.subr.mxu0 0.0
  %2617 = vmatpush1.msra.mxu0 0.0
  %2618 = vmatprep.subr.mxu0 0.0
  %2619 = vmatpush1.msra.mxu0 0.0
  %2620 = vmatprep.subr.mxu0 0.0
  %2621 = vmatpush1.msra.mxu0 0.0
  %2622 = vmatprep.subr.mxu0 0.0
  %2623 = vmatpush1.msra.mxu0 0.0
  %2624 = vmatprep.subr.mxu0 0.0
  %2625 = vmatpush1.msra.mxu0 0.0
  %2626 = vmatprep.subr.mxu0 0.0
  %2627 = vmatpush1.msra.mxu0 0.0
  %2628 = vmatprep.subr.mxu0 0.0
  %2629 = vmatpush1.msra.mxu0 0.0
  %2630 = vmatprep.subr.mxu0 0.0
  %2631 = vmatpush1.msra.mxu0 0.0
  %2632 = vmatprep.subr.mxu0 0.0
  %2633 = vmatpush1.msra.mxu0 0.0
  %2634 = vmatprep.subr.mxu0 0.0
  %2635 = vmatpush1.msra.mxu0 0.0
  %2636 = vmatprep.subr.mxu0 0.0
  %2637 = vmatpush1.msra.mxu0 0.0
  %2638 = vmatprep.subr.mxu0 0.0
  %2639 = vmatpush1.msra.mxu0 0.0
  %2640 = vmatprep.subr.mxu0 0.0
  %2641 = vmatpush1.msra.mxu0 0.0
  %2642 = vmatprep.subr.mxu0 0.0
  %2643 = vmatpush1.msra.mxu0 0.0
  %2644 = vmatprep.subr.mxu0 0.0
  %2645 = vmatpush1.msra.mxu0 0.0
  %2646 = vmatprep.subr.mxu0 0.0
  %2647 = vmatpush1.msra.mxu0 0.0
  %2648 = vmatprep.subr.mxu0 0.0
  %2649 = vmatpush1.msra.mxu0 0.0
  %2650 = vmatprep.subr.mxu0 0.0
  %2651 = vmatpush1.msra.mxu0 0.0
  %2652 = vmatprep.subr.mxu0 0.0
  %2653 = vmatpush1.msra.mxu0 0.0
  %2654 = vmatprep.subr.mxu0 0.0
  %2655 = vmatpush1.msra.mxu0 0.0
  %2656 = vmatprep.mubr.f32.mxu0 0.0
  %2657 = vmatmul.mubr.f32.gmra.mrb[0].mxu0 %v2377
  %v2658 = vpop.f32.mrb[0].mxu0
  %v2659 = vadd.f32 %v2374, %v2658
  %v2660 = vpop.f32.mrb[0].mxu0
  %v2661 = vadd.f32 %v2374, %v2660
  %2662 = vdwg.mxu0
  %v2663 = vmax.f32 %v2446, 0.0
  %v2664 = vmax.f32 %v2448, 0.0
  %v2665 = vmax.f32 %v2517, 0.0
  %v2666 = vmax.f32 %v2519, 0.0
  %v2667 = vmax.f32 %v2588, 0.0
  %v2668 = vmax.f32 %v2590, 0.0
  %v2669 = vmax.f32 %v2659, 0.0
  %v2670 = vmax.f32 %v2661, 0.0
  %s2671 = scalar_lea.vmem %s4, 112
  %v2672 = vld [vmem:[%s2671] sm:$0xff]
  %s2673 = scalar_lea.vmem %s5, 112
  %v2674 = vld [vmem:[%s2673] sm:$0xff]
  %2676 = vset.pattern.permute.xlu0 0
  %2677 = vperm.xlu0 %2676, %v2674
  %v2678 = vpop.permute.xlu0 %2677
  %v2681 = vsel %vm527, %v2672, 0
  %2683 = vmatprep.subr.mxu0 %v2664
  %2684 = vmatpush1.msra.mxu0 %v2663
  %2685 = vmatprep.subr.mxu0 0.0
  %2686 = vmatpush1.msra.mxu0 0.0
  %2687 = vmatprep.subr.mxu0 0.0
  %2688 = vmatpush1.msra.mxu0 0.0
  %2689 = vmatprep.subr.mxu0 0.0
  %2690 = vmatpush1.msra.mxu0 0.0
  %2691 = vmatprep.subr.mxu0 0.0
  %2692 = vmatpush1.msra.mxu0 0.0
  %2693 = vmatprep.subr.mxu0 0.0
  %2694 = vmatpush1.msra.mxu0 0.0
  %2695 = vmatprep.subr.mxu0 0.0
  %2696 = vmatpush1.msra.mxu0 0.0
  %2697 = vmatprep.subr.mxu0 0.0
  %2698 = vmatpush1.msra.mxu0 0.0
  %2699 = vmatprep.subr.mxu0 0.0
  %2700 = vmatpush1.msra.mxu0 0.0
  %2701 = vmatprep.subr.mxu0 0.0
  %2702 = vmatpush1.msra.mxu0 0.0
  %2703 = vmatprep.subr.mxu0 0.0
  %2704 = vmatpush1.msra.mxu0 0.0
  %2705 = vmatprep.subr.mxu0 0.0
  %2706 = vmatpush1.msra.mxu0 0.0
  %2707 = vmatprep.subr.mxu0 0.0
  %2708 = vmatpush1.msra.mxu0 0.0
  %2709 = vmatprep.subr.mxu0 0.0
  %2710 = vmatpush1.msra.mxu0 0.0
  %2711 = vmatprep.subr.mxu0 0.0
  %2712 = vmatpush1.msra.mxu0 0.0
  %2713 = vmatprep.subr.mxu0 0.0
  %2714 = vmatpush1.msra.mxu0 0.0
  %2715 = vmatprep.subr.mxu0 0.0
  %2716 = vmatpush1.msra.mxu0 0.0
  %2717 = vmatprep.subr.mxu0 0.0
  %2718 = vmatpush1.msra.mxu0 0.0
  %2719 = vmatprep.subr.mxu0 0.0
  %2720 = vmatpush1.msra.mxu0 0.0
  %2721 = vmatprep.subr.mxu0 0.0
  %2722 = vmatpush1.msra.mxu0 0.0
  %2723 = vmatprep.subr.mxu0 0.0
  %2724 = vmatpush1.msra.mxu0 0.0
  %2725 = vmatprep.subr.mxu0 0.0
  %2726 = vmatpush1.msra.mxu0 0.0
  %2727 = vmatprep.subr.mxu0 0.0
  %2728 = vmatpush1.msra.mxu0 0.0
  %2729 = vmatprep.subr.mxu0 0.0
  %2730 = vmatpush1.msra.mxu0 0.0
  %2731 = vmatprep.subr.mxu0 0.0
  %2732 = vmatpush1.msra.mxu0 0.0
  %2733 = vmatprep.subr.mxu0 0.0
  %2734 = vmatpush1.msra.mxu0 0.0
  %2735 = vmatprep.subr.mxu0 0.0
  %2736 = vmatpush1.msra.mxu0 0.0
  %2737 = vmatprep.subr.mxu0 0.0
  %2738 = vmatpush1.msra.mxu0 0.0
  %2739 = vmatprep.subr.mxu0 0.0
  %2740 = vmatpush1.msra.mxu0 0.0
  %2741 = vmatprep.subr.mxu0 0.0
  %2742 = vmatpush1.msra.mxu0 0.0
  %2743 = vmatprep.subr.mxu0 0.0
  %2744 = vmatpush1.msra.mxu0 0.0
  %2745 = vmatprep.subr.mxu0 0.0
  %2746 = vmatpush1.msra.mxu0 0.0
  %2747 = vmatprep.mubr.f32.mxu0 0.0
  %2748 = vmatmul.mubr.f32.gmra.mrb[0].mxu0 %v2681
  %v2749 = vpop.f32.mrb[0].mxu0
  %v2750 = vadd.f32 %v2678, %v2749
  %v2751 = vpop.f32.mrb[0].mxu0
  %v2752 = vadd.f32 %v2678, %v2751
  %2753 = vdwg.mxu0
  %2754 = vmatprep.subr.mxu0 %v2666
  %2755 = vmatpush1.msra.mxu0 %v2665
  %2756 = vmatprep.subr.mxu0 0.0
  %2757 = vmatpush1.msra.mxu0 0.0
  %2758 = vmatprep.subr.mxu0 0.0
  %2759 = vmatpush1.msra.mxu0 0.0
  %2760 = vmatprep.subr.mxu0 0.0
  %2761 = vmatpush1.msra.mxu0 0.0
  %2762 = vmatprep.subr.mxu0 0.0
  %2763 = vmatpush1.msra.mxu0 0.0
  %2764 = vmatprep.subr.mxu0 0.0
  %2765 = vmatpush1.msra.mxu0 0.0
  %2766 = vmatprep.subr.mxu0 0.0
  %2767 = vmatpush1.msra.mxu0 0.0
  %2768 = vmatprep.subr.mxu0 0.0
  %2769 = vmatpush1.msra.mxu0 0.0
  %2770 = vmatprep.subr.mxu0 0.0
  %2771 = vmatpush1.msra.mxu0 0.0
  %2772 = vmatprep.subr.mxu0 0.0
  %2773 = vmatpush1.msra.mxu0 0.0
  %2774 = vmatprep.subr.mxu0 0.0
  %2775 = vmatpush1.msra.mxu0 0.0
  %2776 = vmatprep.subr.mxu0 0.0
  %2777 = vmatpush1.msra.mxu0 0.0
  %2778 = vmatprep.subr.mxu0 0.0
  %2779 = vmatpush1.msra.mxu0 0.0
  %2780 = vmatprep.subr.mxu0 0.0
  %2781 = vmatpush1.msra.mxu0 0.0
  %2782 = vmatprep.subr.mxu0 0.0
  %2783 = vmatpush1.msra.mxu0 0.0
  %2784 = vmatprep.subr.mxu0 0.0
  %2785 = vmatpush1.msra.mxu0 0.0
  %2786 = vmatprep.subr.mxu0 0.0
  %2787 = vmatpush1.msra.mxu0 0.0
  %2788 = vmatprep.subr.mxu0 0.0
  %2789 = vmatpush1.msra.mxu0 0.0
  %2790 = vmatprep.subr.mxu0 0.0
  %2791 = vmatpush1.msra.mxu0 0.0
  %2792 = vmatprep.subr.mxu0 0.0
  %2793 = vmatpush1.msra.mxu0 0.0
  %2794 = vmatprep.subr.mxu0 0.0
  %2795 = vmatpush1.msra.mxu0 0.0
  %2796 = vmatprep.subr.mxu0 0.0
  %2797 = vmatpush1.msra.mxu0 0.0
  %2798 = vmatprep.subr.mxu0 0.0
  %2799 = vmatpush1.msra.mxu0 0.0
  %2800 = vmatprep.subr.mxu0 0.0
  %2801 = vmatpush1.msra.mxu0 0.0
  %2802 = vmatprep.subr.mxu0 0.0
  %2803 = vmatpush1.msra.mxu0 0.0
  %2804 = vmatprep.subr.mxu0 0.0
  %2805 = vmatpush1.msra.mxu0 0.0
  %2806 = vmatprep.subr.mxu0 0.0
  %2807 = vmatpush1.msra.mxu0 0.0
  %2808 = vmatprep.subr.mxu0 0.0
  %2809 = vmatpush1.msra.mxu0 0.0
  %2810 = vmatprep.subr.mxu0 0.0
  %2811 = vmatpush1.msra.mxu0 0.0
  %2812 = vmatprep.subr.mxu0 0.0
  %2813 = vmatpush1.msra.mxu0 0.0
  %2814 = vmatprep.subr.mxu0 0.0
  %2815 = vmatpush1.msra.mxu0 0.0
  %2816 = vmatprep.subr.mxu0 0.0
  %2817 = vmatpush1.msra.mxu0 0.0
  %2818 = vmatprep.mubr.f32.mxu0 0.0
  %2819 = vmatmul.mubr.f32.gmra.mrb[0].mxu0 %v2681
  %v2820 = vpop.f32.mrb[0].mxu0
  %v2821 = vadd.f32 %v2678, %v2820
  %v2822 = vpop.f32.mrb[0].mxu0
  %v2823 = vadd.f32 %v2678, %v2822
  %2824 = vdwg.mxu0
  %2825 = vmatprep.subr.mxu0 %v2668
  %2826 = vmatpush1.msra.mxu0 %v2667
  %2827 = vmatprep.subr.mxu0 0.0
  %2828 = vmatpush1.msra.mxu0 0.0
  %2829 = vmatprep.subr.mxu0 0.0
  %2830 = vmatpush1.msra.mxu0 0.0
  %2831 = vmatprep.subr.mxu0 0.0
  %2832 = vmatpush1.msra.mxu0 0.0
  %2833 = vmatprep.subr.mxu0 0.0
  %2834 = vmatpush1.msra.mxu0 0.0
  %2835 = vmatprep.subr.mxu0 0.0
  %2836 = vmatpush1.msra.mxu0 0.0
  %2837 = vmatprep.subr.mxu0 0.0
  %2838 = vmatpush1.msra.mxu0 0.0
  %2839 = vmatprep.subr.mxu0 0.0
  %2840 = vmatpush1.msra.mxu0 0.0
  %2841 = vmatprep.subr.mxu0 0.0
  %2842 = vmatpush1.msra.mxu0 0.0
  %2843 = vmatprep.subr.mxu0 0.0
  %2844 = vmatpush1.msra.mxu0 0.0
  %2845 = vmatprep.subr.mxu0 0.0
  %2846 = vmatpush1.msra.mxu0 0.0
  %2847 = vmatprep.subr.mxu0 0.0
  %2848 = vmatpush1.msra.mxu0 0.0
  %2849 = vmatprep.subr.mxu0 0.0
  %2850 = vmatpush1.msra.mxu0 0.0
  %2851 = vmatprep.subr.mxu0 0.0
  %2852 = vmatpush1.msra.mxu0 0.0
  %2853 = vmatprep.subr.mxu0 0.0
  %2854 = vmatpush1.msra.mxu0 0.0
  %2855 = vmatprep.subr.mxu0 0.0
  %2856 = vmatpush1.msra.mxu0 0.0
  %2857 = vmatprep.subr.mxu0 0.0
  %2858 = vmatpush1.msra.mxu0 0.0
  %2859 = vmatprep.subr.mxu0 0.0
  %2860 = vmatpush1.msra.mxu0 0.0
  %2861 = vmatprep.subr.mxu0 0.0
  %2862 = vmatpush1.msra.mxu0 0.0
  %2863 = vmatprep.subr.mxu0 0.0
  %2864 = vmatpush1.msra.mxu0 0.0
  %2865 = vmatprep.subr.mxu0 0.0
  %2866 = vmatpush1.msra.mxu0 0.0
  %2867 = vmatprep.subr.mxu0 0.0
  %2868 = vmatpush1.msra.mxu0 0.0
  %2869 = vmatprep.subr.mxu0 0.0
  %2870 = vmatpush1.msra.mxu0 0.0
  %2871 = vmatprep.subr.mxu0 0.0
  %2872 = vmatpush1.msra.mxu0 0.0
  %2873 = vmatprep.subr.mxu0 0.0
  %2874 = vmatpush1.msra.mxu0 0.0
  %2875 = vmatprep.subr.mxu0 0.0
  %2876 = vmatpush1.msra.mxu0 0.0
  %2877 = vmatprep.subr.mxu0 0.0
  %2878 = vmatpush1.msra.mxu0 0.0
  %2879 = vmatprep.subr.mxu0 0.0
  %2880 = vmatpush1.msra.mxu0 0.0
  %2881 = vmatprep.subr.mxu0 0.0
  %2882 = vmatpush1.msra.mxu0 0.0
  %2883 = vmatprep.subr.mxu0 0.0
  %2884 = vmatpush1.msra.mxu0 0.0
  %2885 = vmatprep.subr.mxu0 0.0
  %2886 = vmatpush1.msra.mxu0 0.0
  %2887 = vmatprep.subr.mxu0 0.0
  %2888 = vmatpush1.msra.mxu0 0.0
  %2889 = vmatprep.mubr.f32.mxu0 0.0
  %2890 = vmatmul.mubr.f32.gmra.mrb[0].mxu0 %v2681
  %v2891 = vpop.f32.mrb[0].mxu0
  %v2892 = vadd.f32 %v2678, %v2891
  %v2893 = vpop.f32.mrb[0].mxu0
  %v2894 = vadd.f32 %v2678, %v2893
  %2895 = vdwg.mxu0
  %2896 = vmatprep.subr.mxu0 %v2670
  %2897 = vmatpush1.msra.mxu0 %v2669
  %2898 = vmatprep.subr.mxu0 0.0
  %2899 = vmatpush1.msra.mxu0 0.0
  %2900 = vmatprep.subr.mxu0 0.0
  %2901 = vmatpush1.msra.mxu0 0.0
  %2902 = vmatprep.subr.mxu0 0.0
  %2903 = vmatpush1.msra.mxu0 0.0
  %2904 = vmatprep.subr.mxu0 0.0
  %2905 = vmatpush1.msra.mxu0 0.0
  %2906 = vmatprep.subr.mxu0 0.0
  %2907 = vmatpush1.msra.mxu0 0.0
  %2908 = vmatprep.subr.mxu0 0.0
  %2909 = vmatpush1.msra.mxu0 0.0
  %2910 = vmatprep.subr.mxu0 0.0
  %2911 = vmatpush1.msra.mxu0 0.0
  %2912 = vmatprep.subr.mxu0 0.0
  %2913 = vmatpush1.msra.mxu0 0.0
  %2914 = vmatprep.subr.mxu0 0.0
  %2915 = vmatpush1.msra.mxu0 0.0
  %2916 = vmatprep.subr.mxu0 0.0
  %2917 = vmatpush1.msra.mxu0 0.0
  %2918 = vmatprep.subr.mxu0 0.0
  %2919 = vmatpush1.msra.mxu0 0.0
  %2920 = vmatprep.subr.mxu0 0.0
  %2921 = vmatpush1.msra.mxu0 0.0
  %2922 = vmatprep.subr.mxu0 0.0
  %2923 = vmatpush1.msra.mxu0 0.0
  %2924 = vmatprep.subr.mxu0 0.0
  %2925 = vmatpush1.msra.mxu0 0.0
  %2926 = vmatprep.subr.mxu0 0.0
  %2927 = vmatpush1.msra.mxu0 0.0
  %2928 = vmatprep.subr.mxu0 0.0
  %2929 = vmatpush1.msra.mxu0 0.0
  %2930 = vmatprep.subr.mxu0 0.0
  %2931 = vmatpush1.msra.mxu0 0.0
  %2932 = vmatprep.subr.mxu0 0.0
  %2933 = vmatpush1.msra.mxu0 0.0
  %2934 = vmatprep.subr.mxu0 0.0
  %2935 = vmatpush1.msra.mxu0 0.0
  %2936 = vmatprep.subr.mxu0 0.0
  %2937 = vmatpush1.msra.mxu0 0.0
  %2938 = vmatprep.subr.mxu0 0.0
  %2939 = vmatpush1.msra.mxu0 0.0
  %2940 = vmatprep.subr.mxu0 0.0
  %2941 = vmatpush1.msra.mxu0 0.0
  %2942 = vmatprep.subr.mxu0 0.0
  %2943 = vmatpush1.msra.mxu0 0.0
  %2944 = vmatprep.subr.mxu0 0.0
  %2945 = vmatpush1.msra.mxu0 0.0
  %2946 = vmatprep.subr.mxu0 0.0
  %2947 = vmatpush1.msra.mxu0 0.0
  %2948 = vmatprep.subr.mxu0 0.0
  %2949 = vmatpush1.msra.mxu0 0.0
  %2950 = vmatprep.subr.mxu0 0.0
  %2951 = vmatpush1.msra.mxu0 0.0
  %2952 = vmatprep.subr.mxu0 0.0
  %2953 = vmatpush1.msra.mxu0 0.0
  %2954 = vmatprep.subr.mxu0 0.0
  %2955 = vmatpush1.msra.mxu0 0.0
  %2956 = vmatprep.subr.mxu0 0.0
  %2957 = vmatpush1.msra.mxu0 0.0
  %2958 = vmatprep.subr.mxu0 0.0
  %2959 = vmatpush1.msra.mxu0 0.0
  %2960 = vmatprep.mubr.f32.mxu0 0.0
  %2961 = vmatmul.mubr.f32.gmra.mrb[0].mxu0 %v2681
  %v2962 = vpop.f32.mrb[0].mxu0
  %v2963 = vadd.f32 %v2678, %v2962
  %v2964 = vpop.f32.mrb[0].mxu0
  %v2965 = vadd.f32 %v2678, %v2964
  %2966 = vdwg.mxu0
  %v2967 = vmax.f32 %v2750, 0.0
  %v2968 = vmax.f32 %v2752, 0.0
  %v2969 = vmax.f32 %v2821, 0.0
  %v2970 = vmax.f32 %v2823, 0.0
  %v2971 = vmax.f32 %v2892, 0.0
  %v2972 = vmax.f32 %v2894, 0.0
  %v2973 = vmax.f32 %v2963, 0.0
  %v2974 = vmax.f32 %v2965, 0.0
  %v2975 = vadd.f32 %v2967, %v199
  %v2976 = vadd.f32 %v2968, %v201
  %v2977 = vadd.f32 %v2969, %v300
  %v2978 = vadd.f32 %v2970, %v302
  %v2979 = vadd.f32 %v2971, %v401
  %v2980 = vadd.f32 %v2972, %v403
  %v2981 = vadd.f32 %v2973, %v502
  %v2982 = vadd.f32 %v2974, %v504
  %v2983 = vadd.f32 %v1735, %v199
  %v2984 = vadd.f32 %v1736, %v201
  %v2985 = vadd.f32 %v1737, %v300
  %v2986 = vadd.f32 %v1738, %v302
  %v2987 = vadd.f32 %v1739, %v401
  %v2988 = vadd.f32 %v1740, %v403
  %v2989 = vadd.f32 %v1741, %v502
  %v2990 = vadd.f32 %v1742, %v504
  %s2991 = scalar_lea.vmem %s4, 128
  %v2992 = vld [vmem:[%s2991] sm:$0xff]
  %v2993 = vld [vmem:[%s2991 + $0x8] sm:$0xff]
  %s2994 = scalar_lea.vmem %s5, 128
  %v2995 = vld [vmem:[%s2994] sm:$0xff]
  %v2996 = vld [vmem:[%s2994 + $0x8] sm:$0xff]
  %2998 = vset.pattern.permute.xlu0 0
  %2999 = vperm.xlu0 %2998, %v2995
  %v3000 = vpop.permute.xlu0 %2999
  %3003 = vset.pattern.permute.xlu0 0
  %3004 = vperm.xlu0 %3003, %v2996
  %v3005 = vpop.permute.xlu0 %3004
  %v3008 = vsel %vm89, %v2992, 0
  %v3011 = vsel %vm89, %v2993, 0
  %3013 = vmatprep.subr.mxu0 %v2976
  %3014 = vmatpush1.msra.mxu0 %v2975
  %3015 = vmatprep.subr.mxu0 %v2984
  %3016 = vmatpush1.msra.mxu0 %v2983
  %3017 = vmatprep.subr.mxu0 0.0
  %3018 = vmatpush1.msra.mxu0 0.0
  %3019 = vmatprep.subr.mxu0 0.0
  %3020 = vmatpush1.msra.mxu0 0.0
  %3021 = vmatprep.subr.mxu0 0.0
  %3022 = vmatpush1.msra.mxu0 0.0
  %3023 = vmatprep.subr.mxu0 0.0
  %3024 = vmatpush1.msra.mxu0 0.0
  %3025 = vmatprep.subr.mxu0 0.0
  %3026 = vmatpush1.msra.mxu0 0.0
  %3027 = vmatprep.subr.mxu0 0.0
  %3028 = vmatpush1.msra.mxu0 0.0
  %3029 = vmatprep.subr.mxu0 0.0
  %3030 = vmatpush1.msra.mxu0 0.0
  %3031 = vmatprep.subr.mxu0 0.0
  %3032 = vmatpush1.msra.mxu0 0.0
  %3033 = vmatprep.subr.mxu0 0.0
  %3034 = vmatpush1.msra.mxu0 0.0
  %3035 = vmatprep.subr.mxu0 0.0
  %3036 = vmatpush1.msra.mxu0 0.0
  %3037 = vmatprep.subr.mxu0 0.0
  %3038 = vmatpush1.msra.mxu0 0.0
  %3039 = vmatprep.subr.mxu0 0.0
  %3040 = vmatpush1.msra.mxu0 0.0
  %3041 = vmatprep.subr.mxu0 0.0
  %3042 = vmatpush1.msra.mxu0 0.0
  %3043 = vmatprep.subr.mxu0 0.0
  %3044 = vmatpush1.msra.mxu0 0.0
  %3045 = vmatprep.subr.mxu0 0.0
  %3046 = vmatpush1.msra.mxu0 0.0
  %3047 = vmatprep.subr.mxu0 0.0
  %3048 = vmatpush1.msra.mxu0 0.0
  %3049 = vmatprep.subr.mxu0 0.0
  %3050 = vmatpush1.msra.mxu0 0.0
  %3051 = vmatprep.subr.mxu0 0.0
  %3052 = vmatpush1.msra.mxu0 0.0
  %3053 = vmatprep.subr.mxu0 0.0
  %3054 = vmatpush1.msra.mxu0 0.0
  %3055 = vmatprep.subr.mxu0 0.0
  %3056 = vmatpush1.msra.mxu0 0.0
  %3057 = vmatprep.subr.mxu0 0.0
  %3058 = vmatpush1.msra.mxu0 0.0
  %3059 = vmatprep.subr.mxu0 0.0
  %3060 = vmatpush1.msra.mxu0 0.0
  %3061 = vmatprep.subr.mxu0 0.0
  %3062 = vmatpush1.msra.mxu0 0.0
  %3063 = vmatprep.subr.mxu0 0.0
  %3064 = vmatpush1.msra.mxu0 0.0
  %3065 = vmatprep.subr.mxu0 0.0
  %3066 = vmatpush1.msra.mxu0 0.0
  %3067 = vmatprep.subr.mxu0 0.0
  %3068 = vmatpush1.msra.mxu0 0.0
  %3069 = vmatprep.subr.mxu0 0.0
  %3070 = vmatpush1.msra.mxu0 0.0
  %3071 = vmatprep.subr.mxu0 0.0
  %3072 = vmatpush1.msra.mxu0 0.0
  %3073 = vmatprep.subr.mxu0 0.0
  %3074 = vmatpush1.msra.mxu0 0.0
  %3075 = vmatprep.subr.mxu0 0.0
  %3076 = vmatpush1.msra.mxu0 0.0
  %3077 = vmatprep.mubr.f32.mxu0 0.0
  %3078 = vmatmul.mubr.f32.gmra.mrb[0].mxu0 %v3008
  %v3079 = vpop.f32.mrb[0].mxu0
  %v3080 = vadd.f32 %v3000, %v3079
  %v3081 = vpop.f32.mrb[0].mxu0
  %v3082 = vadd.f32 %v3000, %v3081
  %3083 = vmatprep.mubr.f32.mxu0 0.0
  %3084 = vmatmul.mubr.f32.gmra.mrb[0].mxu0 %v3011
  %v3085 = vpop.f32.mrb[0].mxu0
  %v3086 = vadd.f32 %v3005, %v3085
  %v3087 = vpop.f32.mrb[0].mxu0
  %v3088 = vadd.f32 %v3005, %v3087
  %3089 = vdwg.mxu0
  %3090 = vmatprep.subr.mxu0 %v2978
  %3091 = vmatpush1.msra.mxu0 %v2977
  %3092 = vmatprep.subr.mxu0 %v2986
  %3093 = vmatpush1.msra.mxu0 %v2985
  %3094 = vmatprep.subr.mxu0 0.0
  %3095 = vmatpush1.msra.mxu0 0.0
  %3096 = vmatprep.subr.mxu0 0.0
  %3097 = vmatpush1.msra.mxu0 0.0
  %3098 = vmatprep.subr.mxu0 0.0
  %3099 = vmatpush1.msra.mxu0 0.0
  %3100 = vmatprep.subr.mxu0 0.0
  %3101 = vmatpush1.msra.mxu0 0.0
  %3102 = vmatprep.subr.mxu0 0.0
  %3103 = vmatpush1.msra.mxu0 0.0
  %3104 = vmatprep.subr.mxu0 0.0
  %3105 = vmatpush1.msra.mxu0 0.0
  %3106 = vmatprep.subr.mxu0 0.0
  %3107 = vmatpush1.msra.mxu0 0.0
  %3108 = vmatprep.subr.mxu0 0.0
  %3109 = vmatpush1.msra.mxu0 0.0
  %3110 = vmatprep.subr.mxu0 0.0
  %3111 = vmatpush1.msra.mxu0 0.0
  %3112 = vmatprep.subr.mxu0 0.0
  %3113 = vmatpush1.msra.mxu0 0.0
  %3114 = vmatprep.subr.mxu0 0.0
  %3115 = vmatpush1.msra.mxu0 0.0
  %3116 = vmatprep.subr.mxu0 0.0
  %3117 = vmatpush1.msra.mxu0 0.0
  %3118 = vmatprep.subr.mxu0 0.0
  %3119 = vmatpush1.msra.mxu0 0.0
  %3120 = vmatprep.subr.mxu0 0.0
  %3121 = vmatpush1.msra.mxu0 0.0
  %3122 = vmatprep.subr.mxu0 0.0
  %3123 = vmatpush1.msra.mxu0 0.0
  %3124 = vmatprep.subr.mxu0 0.0
  %3125 = vmatpush1.msra.mxu0 0.0
  %3126 = vmatprep.subr.mxu0 0.0
  %3127 = vmatpush1.msra.mxu0 0.0
  %3128 = vmatprep.subr.mxu0 0.0
  %3129 = vmatpush1.msra.mxu0 0.0
  %3130 = vmatprep.subr.mxu0 0.0
  %3131 = vmatpush1.msra.mxu0 0.0
  %3132 = vmatprep.subr.mxu0 0.0
  %3133 = vmatpush1.msra.mxu0 0.0
  %3134 = vmatprep.subr.mxu0 0.0
  %3135 = vmatpush1.msra.mxu0 0.0
  %3136 = vmatprep.subr.mxu0 0.0
  %3137 = vmatpush1.msra.mxu0 0.0
  %3138 = vmatprep.subr.mxu0 0.0
  %3139 = vmatpush1.msra.mxu0 0.0
  %3140 = vmatprep.subr.mxu0 0.0
  %3141 = vmatpush1.msra.mxu0 0.0
  %3142 = vmatprep.subr.mxu0 0.0
  %3143 = vmatpush1.msra.mxu0 0.0
  %3144 = vmatprep.subr.mxu0 0.0
  %3145 = vmatpush1.msra.mxu0 0.0
  %3146 = vmatprep.subr.mxu0 0.0
  %3147 = vmatpush1.msra.mxu0 0.0
  %3148 = vmatprep.subr.mxu0 0.0
  %3149 = vmatpush1.msra.mxu0 0.0
  %3150 = vmatprep.subr.mxu0 0.0
  %3151 = vmatpush1.msra.mxu0 0.0
  %3152 = vmatprep.subr.mxu0 0.0
  %3153 = vmatpush1.msra.mxu0 0.0
  %3154 = vmatprep.mubr.f32.mxu0 0.0
  %3155 = vmatmul.mubr.f32.gmra.mrb[0].mxu0 %v3008
  %v3156 = vpop.f32.mrb[0].mxu0
  %v3157 = vadd.f32 %v3000, %v3156
  %v3158 = vpop.f32.mrb[0].mxu0
  %v3159 = vadd.f32 %v3000, %v3158
  %3160 = vmatprep.mubr.f32.mxu0 0.0
  %3161 = vmatmul.mubr.f32.gmra.mrb[0].mxu0 %v3011
  %v3162 = vpop.f32.mrb[0].mxu0
  %v3163 = vadd.f32 %v3005, %v3162
  %v3164 = vpop.f32.mrb[0].mxu0
  %v3165 = vadd.f32 %v3005, %v3164
  %3166 = vdwg.mxu0
  %3167 = vmatprep.subr.mxu0 %v2980
  %3168 = vmatpush1.msra.mxu0 %v2979
  %3169 = vmatprep.subr.mxu0 %v2988
  %3170 = vmatpush1.msra.mxu0 %v2987
  %3171 = vmatprep.subr.mxu0 0.0
  %3172 = vmatpush1.msra.mxu0 0.0
  %3173 = vmatprep.subr.mxu0 0.0
  %3174 = vmatpush1.msra.mxu0 0.0
  %3175 = vmatprep.subr.mxu0 0.0
  %3176 = vmatpush1.msra.mxu0 0.0
  %3177 = vmatprep.subr.mxu0 0.0
  %3178 = vmatpush1.msra.mxu0 0.0
  %3179 = vmatprep.subr.mxu0 0.0
  %3180 = vmatpush1.msra.mxu0 0.0
  %3181 = vmatprep.subr.mxu0 0.0
  %3182 = vmatpush1.msra.mxu0 0.0
  %3183 = vmatprep.subr.mxu0 0.0
  %3184 = vmatpush1.msra.mxu0 0.0
  %3185 = vmatprep.subr.mxu0 0.0
  %3186 = vmatpush1.msra.mxu0 0.0
  %3187 = vmatprep.subr.mxu0 0.0
  %3188 = vmatpush1.msra.mxu0 0.0
  %3189 = vmatprep.subr.mxu0 0.0
  %3190 = vmatpush1.msra.mxu0 0.0
  %3191 = vmatprep.subr.mxu0 0.0
  %3192 = vmatpush1.msra.mxu0 0.0
  %3193 = vmatprep.subr.mxu0 0.0
  %3194 = vmatpush1.msra.mxu0 0.0
  %3195 = vmatprep.subr.mxu0 0.0
  %3196 = vmatpush1.msra.mxu0 0.0
  %3197 = vmatprep.subr.mxu0 0.0
  %3198 = vmatpush1.msra.mxu0 0.0
  %3199 = vmatprep.subr.mxu0 0.0
  %3200 = vmatpush1.msra.mxu0 0.0
  %3201 = vmatprep.subr.mxu0 0.0
  %3202 = vmatpush1.msra.mxu0 0.0
  %3203 = vmatprep.subr.mxu0 0.0
  %3204 = vmatpush1.msra.mxu0 0.0
  %3205 = vmatprep.subr.mxu0 0.0
  %3206 = vmatpush1.msra.mxu0 0.0
  %3207 = vmatprep.subr.mxu0 0.0
  %3208 = vmatpush1.msra.mxu0 0.0
  %3209 = vmatprep.subr.mxu0 0.0
  %3210 = vmatpush1.msra.mxu0 0.0
  %3211 = vmatprep.subr.mxu0 0.0
  %3212 = vmatpush1.msra.mxu0 0.0
  %3213 = vmatprep.subr.mxu0 0.0
  %3214 = vmatpush1.msra.mxu0 0.0
  %3215 = vmatprep.subr.mxu0 0.0
  %3216 = vmatpush1.msra.mxu0 0.0
  %3217 = vmatprep.subr.mxu0 0.0
  %3218 = vmatpush1.msra.mxu0 0.0
  %3219 = vmatprep.subr.mxu0 0.0
  %3220 = vmatpush1.msra.mxu0 0.0
  %3221 = vmatprep.subr.mxu0 0.0
  %3222 = vmatpush1.msra.mxu0 0.0
  %3223 = vmatprep.subr.mxu0 0.0
  %3224 = vmatpush1.msra.mxu0 0.0
  %3225 = vmatprep.subr.mxu0 0.0
  %3226 = vmatpush1.msra.mxu0 0.0
  %3227 = vmatprep.subr.mxu0 0.0
  %3228 = vmatpush1.msra.mxu0 0.0
  %3229 = vmatprep.subr.mxu0 0.0
  %3230 = vmatpush1.msra.mxu0 0.0
  %3231 = vmatprep.mubr.f32.mxu0 0.0
  %3232 = vmatmul.mubr.f32.gmra.mrb[0].mxu0 %v3008
  %v3233 = vpop.f32.mrb[0].mxu0
  %v3234 = vadd.f32 %v3000, %v3233
  %v3235 = vpop.f32.mrb[0].mxu0
  %v3236 = vadd.f32 %v3000, %v3235
  %3237 = vmatprep.mubr.f32.mxu0 0.0
  %3238 = vmatmul.mubr.f32.gmra.mrb[0].mxu0 %v3011
  %v3239 = vpop.f32.mrb[0].mxu0
  %v3240 = vadd.f32 %v3005, %v3239
  %v3241 = vpop.f32.mrb[0].mxu0
  %v3242 = vadd.f32 %v3005, %v3241
  %3243 = vdwg.mxu0
  %3244 = vmatprep.subr.mxu0 %v2982
  %3245 = vmatpush1.msra.mxu0 %v2981
  %3246 = vmatprep.subr.mxu0 %v2990
  %3247 = vmatpush1.msra.mxu0 %v2989
  %3248 = vmatprep.subr.mxu0 0.0
  %3249 = vmatpush1.msra.mxu0 0.0
  %3250 = vmatprep.subr.mxu0 0.0
  %3251 = vmatpush1.msra.mxu0 0.0
  %3252 = vmatprep.subr.mxu0 0.0
  %3253 = vmatpush1.msra.mxu0 0.0
  %3254 = vmatprep.subr.mxu0 0.0
  %3255 = vmatpush1.msra.mxu0 0.0
  %3256 = vmatprep.subr.mxu0 0.0
  %3257 = vmatpush1.msra.mxu0 0.0
  %3258 = vmatprep.subr.mxu0 0.0
  %3259 = vmatpush1.msra.mxu0 0.0
  %3260 = vmatprep.subr.mxu0 0.0
  %3261 = vmatpush1.msra.mxu0 0.0
  %3262 = vmatprep.subr.mxu0 0.0
  %3263 = vmatpush1.msra.mxu0 0.0
  %3264 = vmatprep.subr.mxu0 0.0
  %3265 = vmatpush1.msra.mxu0 0.0
  %3266 = vmatprep.subr.mxu0 0.0
  %3267 = vmatpush1.msra.mxu0 0.0
  %3268 = vmatprep.subr.mxu0 0.0
  %3269 = vmatpush1.msra.mxu0 0.0
  %3270 = vmatprep.subr.mxu0 0.0
  %3271 = vmatpush1.msra.mxu0 0.0
  %3272 = vmatprep.subr.mxu0 0.0
  %3273 = vmatpush1.msra.mxu0 0.0
  %3274 = vmatprep.subr.mxu0 0.0
  %3275 = vmatpush1.msra.mxu0 0.0
  %3276 = vmatprep.subr.mxu0 0.0
  %3277 = vmatpush1.msra.mxu0 0.0
  %3278 = vmatprep.subr.mxu0 0.0
  %3279 = vmatpush1.msra.mxu0 0.0
  %3280 = vmatprep.subr.mxu0 0.0
  %3281 = vmatpush1.msra.mxu0 0.0
  %3282 = vmatprep.subr.mxu0 0.0
  %3283 = vmatpush1.msra.mxu0 0.0
  %3284 = vmatprep.subr.mxu0 0.0
  %3285 = vmatpush1.msra.mxu0 0.0
  %3286 = vmatprep.subr.mxu0 0.0
  %3287 = vmatpush1.msra.mxu0 0.0
  %3288 = vmatprep.subr.mxu0 0.0
  %3289 = vmatpush1.msra.mxu0 0.0
  %3290 = vmatprep.subr.mxu0 0.0
  %3291 = vmatpush1.msra.mxu0 0.0
  %3292 = vmatprep.subr.mxu0 0.0
  %3293 = vmatpush1.msra.mxu0 0.0
  %3294 = vmatprep.subr.mxu0 0.0
  %3295 = vmatpush1.msra.mxu0 0.0
  %3296 = vmatprep.subr.mxu0 0.0
  %3297 = vmatpush1.msra.mxu0 0.0
  %3298 = vmatprep.subr.mxu0 0.0
  %3299 = vmatpush1.msra.mxu0 0.0
  %3300 = vmatprep.subr.mxu0 0.0
  %3301 = vmatpush1.msra.mxu0 0.0
  %3302 = vmatprep.subr.mxu0 0.0
  %3303 = vmatpush1.msra.mxu0 0.0
  %3304 = vmatprep.subr.mxu0 0.0
  %3305 = vmatpush1.msra.mxu0 0.0
  %3306 = vmatprep.subr.mxu0 0.0
  %3307 = vmatpush1.msra.mxu0 0.0
  %3308 = vmatprep.mubr.f32.mxu0 0.0
  %3309 = vmatmul.mubr.f32.gmra.mrb[0].mxu0 %v3008
  %v3310 = vpop.f32.mrb[0].mxu0
  %v3311 = vadd.f32 %v3000, %v3310
  %v3312 = vpop.f32.mrb[0].mxu0
  %v3313 = vadd.f32 %v3000, %v3312
  %3314 = vmatprep.mubr.f32.mxu0 0.0
  %3315 = vmatmul.mubr.f32.gmra.mrb[0].mxu0 %v3011
  %v3316 = vpop.f32.mrb[0].mxu0
  %v3317 = vadd.f32 %v3005, %v3316
  %v3318 = vpop.f32.mrb[0].mxu0
  %v3319 = vadd.f32 %v3005, %v3318
  %3320 = vdwg.mxu0
  %v3321 = vmax.f32 %v3080, 0.0
  %v3322 = vmax.f32 %v3082, 0.0
  %v3323 = vmax.f32 %v3157, 0.0
  %v3324 = vmax.f32 %v3159, 0.0
  %v3325 = vmax.f32 %v3234, 0.0
  %v3326 = vmax.f32 %v3236, 0.0
  %v3327 = vmax.f32 %v3311, 0.0
  %v3328 = vmax.f32 %v3313, 0.0
  %v3329 = vmax.f32 %v3086, 0.0
  %v3330 = vmax.f32 %v3088, 0.0
  %v3331 = vmax.f32 %v3163, 0.0
  %v3332 = vmax.f32 %v3165, 0.0
  %v3333 = vmax.f32 %v3240, 0.0
  %v3334 = vmax.f32 %v3242, 0.0
  %v3335 = vmax.f32 %v3317, 0.0
  %v3336 = vmax.f32 %v3319, 0.0
  %s3337 = scalar_lea.vmem %s4, 144
  %v3338 = vld [vmem:[%s3337] sm:$0xff]
  %s3339 = scalar_lea.vmem %s5, 144
  %v3340 = vld [vmem:[%s3339] sm:$0xff]
  %3342 = vset.pattern.permute.xlu0 0
  %3343 = vperm.xlu0 %3342, %v3340
  %v3344 = vpop.permute.xlu0 %3343
  %v3347 = vsel %vm89, %v3338, 0
  %3349 = vmatprep.subr.mxu0 %v3322
  %3350 = vmatpush1.msra.mxu0 %v3321
  %3351 = vmatprep.subr.mxu0 %v3330
  %3352 = vmatpush1.msra.mxu0 %v3329
  %3353 = vmatprep.subr.mxu0 0.0
  %3354 = vmatpush1.msra.mxu0 0.0
  %3355 = vmatprep.subr.mxu0 0.0
  %3356 = vmatpush1.msra.mxu0 0.0
  %3357 = vmatprep.subr.mxu0 0.0
  %3358 = vmatpush1.msra.mxu0 0.0
  %3359 = vmatprep.subr.mxu0 0.0
  %3360 = vmatpush1.msra.mxu0 0.0
  %3361 = vmatprep.subr.mxu0 0.0
  %3362 = vmatpush1.msra.mxu0 0.0
  %3363 = vmatprep.subr.mxu0 0.0
  %3364 = vmatpush1.msra.mxu0 0.0
  %3365 = vmatprep.subr.mxu0 0.0
  %3366 = vmatpush1.msra.mxu0 0.0
  %3367 = vmatprep.subr.mxu0 0.0
  %3368 = vmatpush1.msra.mxu0 0.0
  %3369 = vmatprep.subr.mxu0 0.0
  %3370 = vmatpush1.msra.mxu0 0.0
  %3371 = vmatprep.subr.mxu0 0.0
  %3372 = vmatpush1.msra.mxu0 0.0
  %3373 = vmatprep.subr.mxu0 0.0
  %3374 = vmatpush1.msra.mxu0 0.0
  %3375 = vmatprep.subr.mxu0 0.0
  %3376 = vmatpush1.msra.mxu0 0.0
  %3377 = vmatprep.subr.mxu0 0.0
  %3378 = vmatpush1.msra.mxu0 0.0
  %3379 = vmatprep.subr.mxu0 0.0
  %3380 = vmatpush1.msra.mxu0 0.0
  %3381 = vmatprep.subr.mxu0 0.0
  %3382 = vmatpush1.msra.mxu0 0.0
  %3383 = vmatprep.subr.mxu0 0.0
  %3384 = vmatpush1.msra.mxu0 0.0
  %3385 = vmatprep.subr.mxu0 0.0
  %3386 = vmatpush1.msra.mxu0 0.0
  %3387 = vmatprep.subr.mxu0 0.0
  %3388 = vmatpush1.msra.mxu0 0.0
  %3389 = vmatprep.subr.mxu0 0.0
  %3390 = vmatpush1.msra.mxu0 0.0
  %3391 = vmatprep.subr.mxu0 0.0
  %3392 = vmatpush1.msra.mxu0 0.0
  %3393 = vmatprep.subr.mxu0 0.0
  %3394 = vmatpush1.msra.mxu0 0.0
  %3395 = vmatprep.subr.mxu0 0.0
  %3396 = vmatpush1.msra.mxu0 0.0
  %3397 = vmatprep.subr.mxu0 0.0
  %3398 = vmatpush1.msra.mxu0 0.0
  %3399 = vmatprep.subr.mxu0 0.0
  %3400 = vmatpush1.msra.mxu0 0.0
  %3401 = vmatprep.subr.mxu0 0.0
  %3402 = vmatpush1.msra.mxu0 0.0
  %3403 = vmatprep.subr.mxu0 0.0
  %3404 = vmatpush1.msra.mxu0 0.0
  %3405 = vmatprep.subr.mxu0 0.0
  %3406 = vmatpush1.msra.mxu0 0.0
  %3407 = vmatprep.subr.mxu0 0.0
  %3408 = vmatpush1.msra.mxu0 0.0
  %3409 = vmatprep.subr.mxu0 0.0
  %3410 = vmatpush1.msra.mxu0 0.0
  %3411 = vmatprep.subr.mxu0 0.0
  %3412 = vmatpush1.msra.mxu0 0.0
  %3413 = vmatprep.mubr.f32.mxu0 0.0
  %3414 = vmatmul.mubr.f32.gmra.mrb[0].mxu0 %v3347
  %v3415 = vpop.f32.mrb[0].mxu0
  %v3416 = vadd.f32 %v3344, %v3415
  %v3417 = vpop.f32.mrb[0].mxu0
  %v3418 = vadd.f32 %v3344, %v3417
  %3419 = vdwg.mxu0
  %3420 = vmatprep.subr.mxu0 %v3324
  %3421 = vmatpush1.msra.mxu0 %v3323
  %3422 = vmatprep.subr.mxu0 %v3332
  %3423 = vmatpush1.msra.mxu0 %v3331
  %3424 = vmatprep.subr.mxu0 0.0
  %3425 = vmatpush1.msra.mxu0 0.0
  %3426 = vmatprep.subr.mxu0 0.0
  %3427 = vmatpush1.msra.mxu0 0.0
  %3428 = vmatprep.subr.mxu0 0.0
  %3429 = vmatpush1.msra.mxu0 0.0
  %3430 = vmatprep.subr.mxu0 0.0
  %3431 = vmatpush1.msra.mxu0 0.0
  %3432 = vmatprep.subr.mxu0 0.0
  %3433 = vmatpush1.msra.mxu0 0.0
  %3434 = vmatprep.subr.mxu0 0.0
  %3435 = vmatpush1.msra.mxu0 0.0
  %3436 = vmatprep.subr.mxu0 0.0
  %3437 = vmatpush1.msra.mxu0 0.0
  %3438 = vmatprep.subr.mxu0 0.0
  %3439 = vmatpush1.msra.mxu0 0.0
  %3440 = vmatprep.subr.mxu0 0.0
  %3441 = vmatpush1.msra.mxu0 0.0
  %3442 = vmatprep.subr.mxu0 0.0
  %3443 = vmatpush1.msra.mxu0 0.0
  %3444 = vmatprep.subr.mxu0 0.0
  %3445 = vmatpush1.msra.mxu0 0.0
  %3446 = vmatprep.subr.mxu0 0.0
  %3447 = vmatpush1.msra.mxu0 0.0
  %3448 = vmatprep.subr.mxu0 0.0
  %3449 = vmatpush1.msra.mxu0 0.0
  %3450 = vmatprep.subr.mxu0 0.0
  %3451 = vmatpush1.msra.mxu0 0.0
  %3452 = vmatprep.subr.mxu0 0.0
  %3453 = vmatpush1.msra.mxu0 0.0
  %3454 = vmatprep.subr.mxu0 0.0
  %3455 = vmatpush1.msra.mxu0 0.0
  %3456 = vmatprep.subr.mxu0 0.0
  %3457 = vmatpush1.msra.mxu0 0.0
  %3458 = vmatprep.subr.mxu0 0.0
  %3459 = vmatpush1.msra.mxu0 0.0
  %3460 = vmatprep.subr.mxu0 0.0
  %3461 = vmatpush1.msra.mxu0 0.0
  %3462 = vmatprep.subr.mxu0 0.0
  %3463 = vmatpush1.msra.mxu0 0.0
  %3464 = vmatprep.subr.mxu0 0.0
  %3465 = vmatpush1.msra.mxu0 0.0
  %3466 = vmatprep.subr.mxu0 0.0
  %3467 = vmatpush1.msra.mxu0 0.0
  %3468 = vmatprep.subr.mxu0 0.0
  %3469 = vmatpush1.msra.mxu0 0.0
  %3470 = vmatprep.subr.mxu0 0.0
  %3471 = vmatpush1.msra.mxu0 0.0
  %3472 = vmatprep.subr.mxu0 0.0
  %3473 = vmatpush1.msra.mxu0 0.0
  %3474 = vmatprep.subr.mxu0 0.0
  %3475 = vmatpush1.msra.mxu0 0.0
  %3476 = vmatprep.subr.mxu0 0.0
  %3477 = vmatpush1.msra.mxu0 0.0
  %3478 = vmatprep.subr.mxu0 0.0
  %3479 = vmatpush1.msra.mxu0 0.0
  %3480 = vmatprep.subr.mxu0 0.0
  %3481 = vmatpush1.msra.mxu0 0.0
  %3482 = vmatprep.subr.mxu0 0.0
  %3483 = vmatpush1.msra.mxu0 0.0
  %3484 = vmatprep.mubr.f32.mxu0 0.0
  %3485 = vmatmul.mubr.f32.gmra.mrb[0].mxu0 %v3347
  %v3486 = vpop.f32.mrb[0].mxu0
  %v3487 = vadd.f32 %v3344, %v3486
  %v3488 = vpop.f32.mrb[0].mxu0
  %v3489 = vadd.f32 %v3344, %v3488
  %3490 = vdwg.mxu0
  %3491 = vmatprep.subr.mxu0 %v3326
  %3492 = vmatpush1.msra.mxu0 %v3325
  %3493 = vmatprep.subr.mxu0 %v3334
  %3494 = vmatpush1.msra.mxu0 %v3333
  %3495 = vmatprep.subr.mxu0 0.0
  %3496 = vmatpush1.msra.mxu0 0.0
  %3497 = vmatprep.subr.mxu0 0.0
  %3498 = vmatpush1.msra.mxu0 0.0
  %3499 = vmatprep.subr.mxu0 0.0
  %3500 = vmatpush1.msra.mxu0 0.0
  %3501 = vmatprep.subr.mxu0 0.0
  %3502 = vmatpush1.msra.mxu0 0.0
  %3503 = vmatprep.subr.mxu0 0.0
  %3504 = vmatpush1.msra.mxu0 0.0
  %3505 = vmatprep.subr.mxu0 0.0
  %3506 = vmatpush1.msra.mxu0 0.0
  %3507 = vmatprep.subr.mxu0 0.0
  %3508 = vmatpush1.msra.mxu0 0.0
  %3509 = vmatprep.subr.mxu0 0.0
  %3510 = vmatpush1.msra.mxu0 0.0
  %3511 = vmatprep.subr.mxu0 0.0
  %3512 = vmatpush1.msra.mxu0 0.0
  %3513 = vmatprep.subr.mxu0 0.0
  %3514 = vmatpush1.msra.mxu0 0.0
  %3515 = vmatprep.subr.mxu0 0.0
  %3516 = vmatpush1.msra.mxu0 0.0
  %3517 = vmatprep.subr.mxu0 0.0
  %3518 = vmatpush1.msra.mxu0 0.0
  %3519 = vmatprep.subr.mxu0 0.0
  %3520 = vmatpush1.msra.mxu0 0.0
  %3521 = vmatprep.subr.mxu0 0.0
  %3522 = vmatpush1.msra.mxu0 0.0
  %3523 = vmatprep.subr.mxu0 0.0
  %3524 = vmatpush1.msra.mxu0 0.0
  %3525 = vmatprep.subr.mxu0 0.0
  %3526 = vmatpush1.msra.mxu0 0.0
  %3527 = vmatprep.subr.mxu0 0.0
  %3528 = vmatpush1.msra.mxu0 0.0
  %3529 = vmatprep.subr.mxu0 0.0
  %3530 = vmatpush1.msra.mxu0 0.0
  %3531 = vmatprep.subr.mxu0 0.0
  %3532 = vmatpush1.msra.mxu0 0.0
  %3533 = vmatprep.subr.mxu0 0.0
  %3534 = vmatpush1.msra.mxu0 0.0
  %3535 = vmatprep.subr.mxu0 0.0
  %3536 = vmatpush1.msra.mxu0 0.0
  %3537 = vmatprep.subr.mxu0 0.0
  %3538 = vmatpush1.msra.mxu0 0.0
  %3539 = vmatprep.subr.mxu0 0.0
  %3540 = vmatpush1.msra.mxu0 0.0
  %3541 = vmatprep.subr.mxu0 0.0
  %3542 = vmatpush1.msra.mxu0 0.0
  %3543 = vmatprep.subr.mxu0 0.0
  %3544 = vmatpush1.msra.mxu0 0.0
  %3545 = vmatprep.subr.mxu0 0.0
  %3546 = vmatpush1.msra.mxu0 0.0
  %3547 = vmatprep.subr.mxu0 0.0
  %3548 = vmatpush1.msra.mxu0 0.0
  %3549 = vmatprep.subr.mxu0 0.0
  %3550 = vmatpush1.msra.mxu0 0.0
  %3551 = vmatprep.subr.mxu0 0.0
  %3552 = vmatpush1.msra.mxu0 0.0
  %3553 = vmatprep.subr.mxu0 0.0
  %3554 = vmatpush1.msra.mxu0 0.0
  %3555 = vmatprep.mubr.f32.mxu0 0.0
  %3556 = vmatmul.mubr.f32.gmra.mrb[0].mxu0 %v3347
  %v3557 = vpop.f32.mrb[0].mxu0
  %v3558 = vadd.f32 %v3344, %v3557
  %v3559 = vpop.f32.mrb[0].mxu0
  %v3560 = vadd.f32 %v3344, %v3559
  %3561 = vdwg.mxu0
  %3562 = vmatprep.subr.mxu0 %v3328
  %3563 = vmatpush1.msra.mxu0 %v3327
  %3564 = vmatprep.subr.mxu0 %v3336
  %3565 = vmatpush1.msra.mxu0 %v3335
  %3566 = vmatprep.subr.mxu0 0.0
  %3567 = vmatpush1.msra.mxu0 0.0
  %3568 = vmatprep.subr.mxu0 0.0
  %3569 = vmatpush1.msra.mxu0 0.0
  %3570 = vmatprep.subr.mxu0 0.0
  %3571 = vmatpush1.msra.mxu0 0.0
  %3572 = vmatprep.subr.mxu0 0.0
  %3573 = vmatpush1.msra.mxu0 0.0
  %3574 = vmatprep.subr.mxu0 0.0
  %3575 = vmatpush1.msra.mxu0 0.0
  %3576 = vmatprep.subr.mxu0 0.0
  %3577 = vmatpush1.msra.mxu0 0.0
  %3578 = vmatprep.subr.mxu0 0.0
  %3579 = vmatpush1.msra.mxu0 0.0
  %3580 = vmatprep.subr.mxu0 0.0
  %3581 = vmatpush1.msra.mxu0 0.0
  %3582 = vmatprep.subr.mxu0 0.0
  %3583 = vmatpush1.msra.mxu0 0.0
  %3584 = vmatprep.subr.mxu0 0.0
  %3585 = vmatpush1.msra.mxu0 0.0
  %3586 = vmatprep.subr.mxu0 0.0
  %3587 = vmatpush1.msra.mxu0 0.0
  %3588 = vmatprep.subr.mxu0 0.0
  %3589 = vmatpush1.msra.mxu0 0.0
  %3590 = vmatprep.subr.mxu0 0.0
  %3591 = vmatpush1.msra.mxu0 0.0
  %3592 = vmatprep.subr.mxu0 0.0
  %3593 = vmatpush1.msra.mxu0 0.0
  %3594 = vmatprep.subr.mxu0 0.0
  %3595 = vmatpush1.msra.mxu0 0.0
  %3596 = vmatprep.subr.mxu0 0.0
  %3597 = vmatpush1.msra.mxu0 0.0
  %3598 = vmatprep.subr.mxu0 0.0
  %3599 = vmatpush1.msra.mxu0 0.0
  %3600 = vmatprep.subr.mxu0 0.0
  %3601 = vmatpush1.msra.mxu0 0.0
  %3602 = vmatprep.subr.mxu0 0.0
  %3603 = vmatpush1.msra.mxu0 0.0
  %3604 = vmatprep.subr.mxu0 0.0
  %3605 = vmatpush1.msra.mxu0 0.0
  %3606 = vmatprep.subr.mxu0 0.0
  %3607 = vmatpush1.msra.mxu0 0.0
  %3608 = vmatprep.subr.mxu0 0.0
  %3609 = vmatpush1.msra.mxu0 0.0
  %3610 = vmatprep.subr.mxu0 0.0
  %3611 = vmatpush1.msra.mxu0 0.0
  %3612 = vmatprep.subr.mxu0 0.0
  %3613 = vmatpush1.msra.mxu0 0.0
  %3614 = vmatprep.subr.mxu0 0.0
  %3615 = vmatpush1.msra.mxu0 0.0
  %3616 = vmatprep.subr.mxu0 0.0
  %3617 = vmatpush1.msra.mxu0 0.0
  %3618 = vmatprep.subr.mxu0 0.0
  %3619 = vmatpush1.msra.mxu0 0.0
  %3620 = vmatprep.subr.mxu0 0.0
  %3621 = vmatpush1.msra.mxu0 0.0
  %3622 = vmatprep.subr.mxu0 0.0
  %3623 = vmatpush1.msra.mxu0 0.0
  %3624 = vmatprep.subr.mxu0 0.0
  %3625 = vmatpush1.msra.mxu0 0.0
  %3626 = vmatprep.mubr.f32.mxu0 0.0
  %3627 = vmatmul.mubr.f32.gmra.mrb[0].mxu0 %v3347
  %v3628 = vpop.f32.mrb[0].mxu0
  %v3629 = vadd.f32 %v3344, %v3628
  %v3630 = vpop.f32.mrb[0].mxu0
  %v3631 = vadd.f32 %v3344, %v3630
  %3632 = vdwg.mxu0
  %v3633 = vmax.f32 %v3416, 0.0
  %v3634 = vmax.f32 %v3418, 0.0
  %v3635 = vmax.f32 %v3487, 0.0
  %v3636 = vmax.f32 %v3489, 0.0
  %v3637 = vmax.f32 %v3558, 0.0
  %v3638 = vmax.f32 %v3560, 0.0
  %v3639 = vmax.f32 %v3629, 0.0
  %v3640 = vmax.f32 %v3631, 0.0
  %s3641 = scalar_lea.vmem %s4, 160
  %v3642 = vld [vmem:[%s3641] sm:$0xff]
  %s3643 = scalar_lea.vmem %s5, 160
  %v3644 = vld [vmem:[%s3643] sm:$0xff]
  %3646 = vset.pattern.permute.xlu0 0
  %3647 = vperm.xlu0 %3646, %v3644
  %v3648 = vpop.permute.xlu0 %3647
  %v3651 = vsel %vm527, %v3642, 0
  %3653 = vmatprep.subr.mxu0 %v3634
  %3654 = vmatpush1.msra.mxu0 %v3633
  %3655 = vmatprep.subr.mxu0 0.0
  %3656 = vmatpush1.msra.mxu0 0.0
  %3657 = vmatprep.subr.mxu0 0.0
  %3658 = vmatpush1.msra.mxu0 0.0
  %3659 = vmatprep.subr.mxu0 0.0
  %3660 = vmatpush1.msra.mxu0 0.0
  %3661 = vmatprep.subr.mxu0 0.0
  %3662 = vmatpush1.msra.mxu0 0.0
  %3663 = vmatprep.subr.mxu0 0.0
  %3664 = vmatpush1.msra.mxu0 0.0
  %3665 = vmatprep.subr.mxu0 0.0
  %3666 = vmatpush1.msra.mxu0 0.0
  %3667 = vmatprep.subr.mxu0 0.0
  %3668 = vmatpush1.msra.mxu0 0.0
  %3669 = vmatprep.subr.mxu0 0.0
  %3670 = vmatpush1.msra.mxu0 0.0
  %3671 = vmatprep.subr.mxu0 0.0
  %3672 = vmatpush1.msra.mxu0 0.0
  %3673 = vmatprep.subr.mxu0 0.0
  %3674 = vmatpush1.msra.mxu0 0.0
  %3675 = vmatprep.subr.mxu0 0.0
  %3676 = vmatpush1.msra.mxu0 0.0
  %3677 = vmatprep.subr.mxu0 0.0
  %3678 = vmatpush1.msra.mxu0 0.0
  %3679 = vmatprep.subr.mxu0 0.0
  %3680 = vmatpush1.msra.mxu0 0.0
  %3681 = vmatprep.subr.mxu0 0.0
  %3682 = vmatpush1.msra.mxu0 0.0
  %3683 = vmatprep.subr.mxu0 0.0
  %3684 = vmatpush1.msra.mxu0 0.0
  %3685 = vmatprep.subr.mxu0 0.0
  %3686 = vmatpush1.msra.mxu0 0.0
  %3687 = vmatprep.subr.mxu0 0.0
  %3688 = vmatpush1.msra.mxu0 0.0
  %3689 = vmatprep.subr.mxu0 0.0
  %3690 = vmatpush1.msra.mxu0 0.0
  %3691 = vmatprep.subr.mxu0 0.0
  %3692 = vmatpush1.msra.mxu0 0.0
  %3693 = vmatprep.subr.mxu0 0.0
  %3694 = vmatpush1.msra.mxu0 0.0
  %3695 = vmatprep.subr.mxu0 0.0
  %3696 = vmatpush1.msra.mxu0 0.0
  %3697 = vmatprep.subr.mxu0 0.0
  %3698 = vmatpush1.msra.mxu0 0.0
  %3699 = vmatprep.subr.mxu0 0.0
  %3700 = vmatpush1.msra.mxu0 0.0
  %3701 = vmatprep.subr.mxu0 0.0
  %3702 = vmatpush1.msra.mxu0 0.0
  %3703 = vmatprep.subr.mxu0 0.0
  %3704 = vmatpush1.msra.mxu0 0.0
  %3705 = vmatprep.subr.mxu0 0.0
  %3706 = vmatpush1.msra.mxu0 0.0
  %3707 = vmatprep.subr.mxu0 0.0
  %3708 = vmatpush1.msra.mxu0 0.0
  %3709 = vmatprep.subr.mxu0 0.0
  %3710 = vmatpush1.msra.mxu0 0.0
  %3711 = vmatprep.subr.mxu0 0.0
  %3712 = vmatpush1.msra.mxu0 0.0
  %3713 = vmatprep.subr.mxu0 0.0
  %3714 = vmatpush1.msra.mxu0 0.0
  %3715 = vmatprep.subr.mxu0 0.0
  %3716 = vmatpush1.msra.mxu0 0.0
  %3717 = vmatprep.mubr.f32.mxu0 0.0
  %3718 = vmatmul.mubr.f32.gmra.mrb[0].mxu0 %v3651
  %v3719 = vpop.f32.mrb[0].mxu0
  %v3720 = vadd.f32 %v3648, %v3719
  %v3721 = vpop.f32.mrb[0].mxu0
  %v3722 = vadd.f32 %v3648, %v3721
  %3723 = vdwg.mxu0
  %3724 = vmatprep.subr.mxu0 %v3636
  %3725 = vmatpush1.msra.mxu0 %v3635
  %3726 = vmatprep.subr.mxu0 0.0
  %3727 = vmatpush1.msra.mxu0 0.0
  %3728 = vmatprep.subr.mxu0 0.0
  %3729 = vmatpush1.msra.mxu0 0.0
  %3730 = vmatprep.subr.mxu0 0.0
  %3731 = vmatpush1.msra.mxu0 0.0
  %3732 = vmatprep.subr.mxu0 0.0
  %3733 = vmatpush1.msra.mxu0 0.0
  %3734 = vmatprep.subr.mxu0 0.0
  %3735 = vmatpush1.msra.mxu0 0.0
  %3736 = vmatprep.subr.mxu0 0.0
  %3737 = vmatpush1.msra.mxu0 0.0
  %3738 = vmatprep.subr.mxu0 0.0
  %3739 = vmatpush1.msra.mxu0 0.0
  %3740 = vmatprep.subr.mxu0 0.0
  %3741 = vmatpush1.msra.mxu0 0.0
  %3742 = vmatprep.subr.mxu0 0.0
  %3743 = vmatpush1.msra.mxu0 0.0
  %3744 = vmatprep.subr.mxu0 0.0
  %3745 = vmatpush1.msra.mxu0 0.0
  %3746 = vmatprep.subr.mxu0 0.0
  %3747 = vmatpush1.msra.mxu0 0.0
  %3748 = vmatprep.subr.mxu0 0.0
  %3749 = vmatpush1.msra.mxu0 0.0
  %3750 = vmatprep.subr.mxu0 0.0
  %3751 = vmatpush1.msra.mxu0 0.0
  %3752 = vmatprep.subr.mxu0 0.0
  %3753 = vmatpush1.msra.mxu0 0.0
  %3754 = vmatprep.subr.mxu0 0.0
  %3755 = vmatpush1.msra.mxu0 0.0
  %3756 = vmatprep.subr.mxu0 0.0
  %3757 = vmatpush1.msra.mxu0 0.0
  %3758 = vmatprep.subr.mxu0 0.0
  %3759 = vmatpush1.msra.mxu0 0.0
  %3760 = vmatprep.subr.mxu0 0.0
  %3761 = vmatpush1.msra.mxu0 0.0
  %3762 = vmatprep.subr.mxu0 0.0
  %3763 = vmatpush1.msra.mxu0 0.0
  %3764 = vmatprep.subr.mxu0 0.0
  %3765 = vmatpush1.msra.mxu0 0.0
  %3766 = vmatprep.subr.mxu0 0.0
  %3767 = vmatpush1.msra.mxu0 0.0
  %3768 = vmatprep.subr.mxu0 0.0
  %3769 = vmatpush1.msra.mxu0 0.0
  %3770 = vmatprep.subr.mxu0 0.0
  %3771 = vmatpush1.msra.mxu0 0.0
  %3772 = vmatprep.subr.mxu0 0.0
  %3773 = vmatpush1.msra.mxu0 0.0
  %3774 = vmatprep.subr.mxu0 0.0
  %3775 = vmatpush1.msra.mxu0 0.0
  %3776 = vmatprep.subr.mxu0 0.0
  %3777 = vmatpush1.msra.mxu0 0.0
  %3778 = vmatprep.subr.mxu0 0.0
  %3779 = vmatpush1.msra.mxu0 0.0
  %3780 = vmatprep.subr.mxu0 0.0
  %3781 = vmatpush1.msra.mxu0 0.0
  %3782 = vmatprep.subr.mxu0 0.0
  %3783 = vmatpush1.msra.mxu0 0.0
  %3784 = vmatprep.subr.mxu0 0.0
  %3785 = vmatpush1.msra.mxu0 0.0
  %3786 = vmatprep.subr.mxu0 0.0
  %3787 = vmatpush1.msra.mxu0 0.0
  %3788 = vmatprep.mubr.f32.mxu0 0.0
  %3789 = vmatmul.mubr.f32.gmra.mrb[0].mxu0 %v3651
  %v3790 = vpop.f32.mrb[0].mxu0
  %v3791 = vadd.f32 %v3648, %v3790
  %v3792 = vpop.f32.mrb[0].mxu0
  %v3793 = vadd.f32 %v3648, %v3792
  %3794 = vdwg.mxu0
  %3795 = vmatprep.subr.mxu0 %v3638
  %3796 = vmatpush1.msra.mxu0 %v3637
  %3797 = vmatprep.subr.mxu0 0.0
  %3798 = vmatpush1.msra.mxu0 0.0
  %3799 = vmatprep.subr.mxu0 0.0
  %3800 = vmatpush1.msra.mxu0 0.0
  %3801 = vmatprep.subr.mxu0 0.0
  %3802 = vmatpush1.msra.mxu0 0.0
  %3803 = vmatprep.subr.mxu0 0.0
  %3804 = vmatpush1.msra.mxu0 0.0
  %3805 = vmatprep.subr.mxu0 0.0
  %3806 = vmatpush1.msra.mxu0 0.0
  %3807 = vmatprep.subr.mxu0 0.0
  %3808 = vmatpush1.msra.mxu0 0.0
  %3809 = vmatprep.subr.mxu0 0.0
  %3810 = vmatpush1.msra.mxu0 0.0
  %3811 = vmatprep.subr.mxu0 0.0
  %3812 = vmatpush1.msra.mxu0 0.0
  %3813 = vmatprep.subr.mxu0 0.0
  %3814 = vmatpush1.msra.mxu0 0.0
  %3815 = vmatprep.subr.mxu0 0.0
  %3816 = vmatpush1.msra.mxu0 0.0
  %3817 = vmatprep.subr.mxu0 0.0
  %3818 = vmatpush1.msra.mxu0 0.0
  %3819 = vmatprep.subr.mxu0 0.0
  %3820 = vmatpush1.msra.mxu0 0.0
  %3821 = vmatprep.subr.mxu0 0.0
  %3822 = vmatpush1.msra.mxu0 0.0
  %3823 = vmatprep.subr.mxu0 0.0
  %3824 = vmatpush1.msra.mxu0 0.0
  %3825 = vmatprep.subr.mxu0 0.0
  %3826 = vmatpush1.msra.mxu0 0.0
  %3827 = vmatprep.subr.mxu0 0.0
  %3828 = vmatpush1.msra.mxu0 0.0
  %3829 = vmatprep.subr.mxu0 0.0
  %3830 = vmatpush1.msra.mxu0 0.0
  %3831 = vmatprep.subr.mxu0 0.0
  %3832 = vmatpush1.msra.mxu0 0.0
  %3833 = vmatprep.subr.mxu0 0.0
  %3834 = vmatpush1.msra.mxu0 0.0
  %3835 = vmatprep.subr.mxu0 0.0
  %3836 = vmatpush1.msra.mxu0 0.0
  %3837 = vmatprep.subr.mxu0 0.0
  %3838 = vmatpush1.msra.mxu0 0.0
  %3839 = vmatprep.subr.mxu0 0.0
  %3840 = vmatpush1.msra.mxu0 0.0
  %3841 = vmatprep.subr.mxu0 0.0
  %3842 = vmatpush1.msra.mxu0 0.0
  %3843 = vmatprep.subr.mxu0 0.0
  %3844 = vmatpush1.msra.mxu0 0.0
  %3845 = vmatprep.subr.mxu0 0.0
  %3846 = vmatpush1.msra.mxu0 0.0
  %3847 = vmatprep.subr.mxu0 0.0
  %3848 = vmatpush1.msra.mxu0 0.0
  %3849 = vmatprep.subr.mxu0 0.0
  %3850 = vmatpush1.msra.mxu0 0.0
  %3851 = vmatprep.subr.mxu0 0.0
  %3852 = vmatpush1.msra.mxu0 0.0
  %3853 = vmatprep.subr.mxu0 0.0
  %3854 = vmatpush1.msra.mxu0 0.0
  %3855 = vmatprep.subr.mxu0 0.0
  %3856 = vmatpush1.msra.mxu0 0.0
  %3857 = vmatprep.subr.mxu0 0.0
  %3858 = vmatpush1.msra.mxu0 0.0
  %3859 = vmatprep.mubr.f32.mxu0 0.0
  %3860 = vmatmul.mubr.f32.gmra.mrb[0].mxu0 %v3651
  %v3861 = vpop.f32.mrb[0].mxu0
  %v3862 = vadd.f32 %v3648, %v3861
  %v3863 = vpop.f32.mrb[0].mxu0
  %v3864 = vadd.f32 %v3648, %v3863
  %3865 = vdwg.mxu0
  %3866 = vmatprep.subr.mxu0 %v3640
  %3867 = vmatpush1.msra.mxu0 %v3639
  %3868 = vmatprep.subr.mxu0 0.0
  %3869 = vmatpush1.msra.mxu0 0.0
  %3870 = vmatprep.subr.mxu0 0.0
  %3871 = vmatpush1.msra.mxu0 0.0
  %3872 = vmatprep.subr.mxu0 0.0
  %3873 = vmatpush1.msra.mxu0 0.0
  %3874 = vmatprep.subr.mxu0 0.0
  %3875 = vmatpush1.msra.mxu0 0.0
  %3876 = vmatprep.subr.mxu0 0.0
  %3877 = vmatpush1.msra.mxu0 0.0
  %3878 = vmatprep.subr.mxu0 0.0
  %3879 = vmatpush1.msra.mxu0 0.0
  %3880 = vmatprep.subr.mxu0 0.0
  %3881 = vmatpush1.msra.mxu0 0.0
  %3882 = vmatprep.subr.mxu0 0.0
  %3883 = vmatpush1.msra.mxu0 0.0
  %3884 = vmatprep.subr.mxu0 0.0
  %3885 = vmatpush1.msra.mxu0 0.0
  %3886 = vmatprep.subr.mxu0 0.0
  %3887 = vmatpush1.msra.mxu0 0.0
  %3888 = vmatprep.subr.mxu0 0.0
  %3889 = vmatpush1.msra.mxu0 0.0
  %3890 = vmatprep.subr.mxu0 0.0
  %3891 = vmatpush1.msra.mxu0 0.0
  %3892 = vmatprep.subr.mxu0 0.0
  %3893 = vmatpush1.msra.mxu0 0.0
  %3894 = vmatprep.subr.mxu0 0.0
  %3895 = vmatpush1.msra.mxu0 0.0
  %3896 = vmatprep.subr.mxu0 0.0
  %3897 = vmatpush1.msra.mxu0 0.0
  %3898 = vmatprep.subr.mxu0 0.0
  %3899 = vmatpush1.msra.mxu0 0.0
  %3900 = vmatprep.subr.mxu0 0.0
  %3901 = vmatpush1.msra.mxu0 0.0
  %3902 = vmatprep.subr.mxu0 0.0
  %3903 = vmatpush1.msra.mxu0 0.0
  %3904 = vmatprep.subr.mxu0 0.0
  %3905 = vmatpush1.msra.mxu0 0.0
  %3906 = vmatprep.subr.mxu0 0.0
  %3907 = vmatpush1.msra.mxu0 0.0
  %3908 = vmatprep.subr.mxu0 0.0
  %3909 = vmatpush1.msra.mxu0 0.0
  %3910 = vmatprep.subr.mxu0 0.0
  %3911 = vmatpush1.msra.mxu0 0.0
  %3912 = vmatprep.subr.mxu0 0.0
  %3913 = vmatpush1.msra.mxu0 0.0
  %3914 = vmatprep.subr.mxu0 0.0
  %3915 = vmatpush1.msra.mxu0 0.0
  %3916 = vmatprep.subr.mxu0 0.0
  %3917 = vmatpush1.msra.mxu0 0.0
  %3918 = vmatprep.subr.mxu0 0.0
  %3919 = vmatpush1.msra.mxu0 0.0
  %3920 = vmatprep.subr.mxu0 0.0
  %3921 = vmatpush1.msra.mxu0 0.0
  %3922 = vmatprep.subr.mxu0 0.0
  %3923 = vmatpush1.msra.mxu0 0.0
  %3924 = vmatprep.subr.mxu0 0.0
  %3925 = vmatpush1.msra.mxu0 0.0
  %3926 = vmatprep.subr.mxu0 0.0
  %3927 = vmatpush1.msra.mxu0 0.0
  %3928 = vmatprep.subr.mxu0 0.0
  %3929 = vmatpush1.msra.mxu0 0.0
  %3930 = vmatprep.mubr.f32.mxu0 0.0
  %3931 = vmatmul.mubr.f32.gmra.mrb[0].mxu0 %v3651
  %v3932 = vpop.f32.mrb[0].mxu0
  %v3933 = vadd.f32 %v3648, %v3932
  %v3934 = vpop.f32.mrb[0].mxu0
  %v3935 = vadd.f32 %v3648, %v3934
  %3936 = vdwg.mxu0
  %v3937 = vmax.f32 %v3720, 0.0
  %v3938 = vmax.f32 %v3722, 0.0
  %v3939 = vmax.f32 %v3791, 0.0
  %v3940 = vmax.f32 %v3793, 0.0
  %v3941 = vmax.f32 %v3862, 0.0
  %v3942 = vmax.f32 %v3864, 0.0
  %v3943 = vmax.f32 %v3933, 0.0
  %v3944 = vmax.f32 %v3935, 0.0
  %v3945 = vadd.f32 %v3937, %v205
  %v3946 = vadd.f32 %v3938, %v207
  %v3947 = vadd.f32 %v3939, %v306
  %v3948 = vadd.f32 %v3940, %v308
  %v3949 = vadd.f32 %v3941, %v407
  %v3950 = vadd.f32 %v3942, %v409
  %v3951 = vadd.f32 %v3943, %v508
  %v3952 = vadd.f32 %v3944, %v510
  %v3953 = vadd.f32 %v1119, %v205
  %v3954 = vadd.f32 %v1120, %v207
  %v3955 = vadd.f32 %v1121, %v306
  %v3956 = vadd.f32 %v1122, %v308
  %v3957 = vadd.f32 %v1123, %v407
  %v3958 = vadd.f32 %v1124, %v409
  %v3959 = vadd.f32 %v1125, %v508
  %v3960 = vadd.f32 %v1126, %v510
  %s3961 = scalar_lea.vmem %s4, 176
  %v3962 = vld [vmem:[%s3961] sm:$0xff]
  %v3963 = vld [vmem:[%s3961 + $0x8] sm:$0xff]
  %s3964 = scalar_lea.vmem %s5, 176
  %v3965 = vld [vmem:[%s3964] sm:$0xff]
  %v3966 = vld [vmem:[%s3964 + $0x8] sm:$0xff]
  %3968 = vset.pattern.permute.xlu0 0
  %3969 = vperm.xlu0 %3968, %v3965
  %v3970 = vpop.permute.xlu0 %3969
  %3973 = vset.pattern.permute.xlu0 0
  %3974 = vperm.xlu0 %3973, %v3966
  %v3975 = vpop.permute.xlu0 %3974
  %v3978 = vsel %vm89, %v3962, 0
  %v3981 = vsel %vm89, %v3963, 0
  %3983 = vmatprep.subr.mxu0 %v3946
  %3984 = vmatpush1.msra.mxu0 %v3945
  %3985 = vmatprep.subr.mxu0 %v3954
  %3986 = vmatpush1.msra.mxu0 %v3953
  %3987 = vmatprep.subr.mxu0 0.0
  %3988 = vmatpush1.msra.mxu0 0.0
  %3989 = vmatprep.subr.mxu0 0.0
  %3990 = vmatpush1.msra.mxu0 0.0
  %3991 = vmatprep.subr.mxu0 0.0
  %3992 = vmatpush1.msra.mxu0 0.0
  %3993 = vmatprep.subr.mxu0 0.0
  %3994 = vmatpush1.msra.mxu0 0.0
  %3995 = vmatprep.subr.mxu0 0.0
  %3996 = vmatpush1.msra.mxu0 0.0
  %3997 = vmatprep.subr.mxu0 0.0
  %3998 = vmatpush1.msra.mxu0 0.0
  %3999 = vmatprep.subr.mxu0 0.0
  %4000 = vmatpush1.msra.mxu0 0.0
  %4001 = vmatprep.subr.mxu0 0.0
  %4002 = vmatpush1.msra.mxu0 0.0
  %4003 = vmatprep.subr.mxu0 0.0
  %4004 = vmatpush1.msra.mxu0 0.0
  %4005 = vmatprep.subr.mxu0 0.0
  %4006 = vmatpush1.msra.mxu0 0.0
  %4007 = vmatprep.subr.mxu0 0.0
  %4008 = vmatpush1.msra.mxu0 0.0
  %4009 = vmatprep.subr.mxu0 0.0
  %4010 = vmatpush1.msra.mxu0 0.0
  %4011 = vmatprep.subr.mxu0 0.0
  %4012 = vmatpush1.msra.mxu0 0.0
  %4013 = vmatprep.subr.mxu0 0.0
  %4014 = vmatpush1.msra.mxu0 0.0
  %4015 = vmatprep.subr.mxu0 0.0
  %4016 = vmatpush1.msra.mxu0 0.0
  %4017 = vmatprep.subr.mxu0 0.0
  %4018 = vmatpush1.msra.mxu0 0.0
  %4019 = vmatprep.subr.mxu0 0.0
  %4020 = vmatpush1.msra.mxu0 0.0
  %4021 = vmatprep.subr.mxu0 0.0
  %4022 = vmatpush1.msra.mxu0 0.0
  %4023 = vmatprep.subr.mxu0 0.0
  %4024 = vmatpush1.msra.mxu0 0.0
  %4025 = vmatprep.subr.mxu0 0.0
  %4026 = vmatpush1.msra.mxu0 0.0
  %4027 = vmatprep.subr.mxu0 0.0
  %4028 = vmatpush1.msra.mxu0 0.0
  %4029 = vmatprep.subr.mxu0 0.0
  %4030 = vmatpush1.msra.mxu0 0.0
  %4031 = vmatprep.subr.mxu0 0.0
  %4032 = vmatpush1.msra.mxu0 0.0
  %4033 = vmatprep.subr.mxu0 0.0
  %4034 = vmatpush1.msra.mxu0 0.0
  %4035 = vmatprep.subr.mxu0 0.0
  %4036 = vmatpush1.msra.mxu0 0.0
  %4037 = vmatprep.subr.mxu0 0.0
  %4038 = vmatpush1.msra.mxu0 0.0
  %4039 = vmatprep.subr.mxu0 0.0
  %4040 = vmatpush1.msra.mxu0 0.0
  %4041 = vmatprep.subr.mxu0 0.0
  %4042 = vmatpush1.msra.mxu0 0.0
  %4043 = vmatprep.subr.mxu0 0.0
  %4044 = vmatpush1.msra.mxu0 0.0
  %4045 = vmatprep.subr.mxu0 0.0
  %4046 = vmatpush1.msra.mxu0 0.0
  %4047 = vmatprep.mubr.f32.mxu0 0.0
  %4048 = vmatmul.mubr.f32.gmra.mrb[0].mxu0 %v3978
  %v4049 = vpop.f32.mrb[0].mxu0
  %v4050 = vadd.f32 %v3970, %v4049
  %v4051 = vpop.f32.mrb[0].mxu0
  %v4052 = vadd.f32 %v3970, %v4051
  %4053 = vmatprep.mubr.f32.mxu0 0.0
  %4054 = vmatmul.mubr.f32.gmra.mrb[0].mxu0 %v3981
  %v4055 = vpop.f32.mrb[0].mxu0
  %v4056 = vadd.f32 %v3975, %v4055
  %v4057 = vpop.f32.mrb[0].mxu0
  %v4058 = vadd.f32 %v3975, %v4057
  %4059 = vdwg.mxu0
  %4060 = vmatprep.subr.mxu0 %v3948
  %4061 = vmatpush1.msra.mxu0 %v3947
  %4062 = vmatprep.subr.mxu0 %v3956
  %4063 = vmatpush1.msra.mxu0 %v3955
  %4064 = vmatprep.subr.mxu0 0.0
  %4065 = vmatpush1.msra.mxu0 0.0
  %4066 = vmatprep.subr.mxu0 0.0
  %4067 = vmatpush1.msra.mxu0 0.0
  %4068 = vmatprep.subr.mxu0 0.0
  %4069 = vmatpush1.msra.mxu0 0.0
  %4070 = vmatprep.subr.mxu0 0.0
  %4071 = vmatpush1.msra.mxu0 0.0
  %4072 = vmatprep.subr.mxu0 0.0
  %4073 = vmatpush1.msra.mxu0 0.0
  %4074 = vmatprep.subr.mxu0 0.0
  %4075 = vmatpush1.msra.mxu0 0.0
  %4076 = vmatprep.subr.mxu0 0.0
  %4077 = vmatpush1.msra.mxu0 0.0
  %4078 = vmatprep.subr.mxu0 0.0
  %4079 = vmatpush1.msra.mxu0 0.0
  %4080 = vmatprep.subr.mxu0 0.0
  %4081 = vmatpush1.msra.mxu0 0.0
  %4082 = vmatprep.subr.mxu0 0.0
  %4083 = vmatpush1.msra.mxu0 0.0
  %4084 = vmatprep.subr.mxu0 0.0
  %4085 = vmatpush1.msra.mxu0 0.0
  %4086 = vmatprep.subr.mxu0 0.0
  %4087 = vmatpush1.msra.mxu0 0.0
  %4088 = vmatprep.subr.mxu0 0.0
  %4089 = vmatpush1.msra.mxu0 0.0
  %4090 = vmatprep.subr.mxu0 0.0
  %4091 = vmatpush1.msra.mxu0 0.0
  %4092 = vmatprep.subr.mxu0 0.0
  %4093 = vmatpush1.msra.mxu0 0.0
  %4094 = vmatprep.subr.mxu0 0.0
  %4095 = vmatpush1.msra.mxu0 0.0
  %4096 = vmatprep.subr.mxu0 0.0
  %4097 = vmatpush1.msra.mxu0 0.0
  %4098 = vmatprep.subr.mxu0 0.0
  %4099 = vmatpush1.msra.mxu0 0.0
  %4100 = vmatprep.subr.mxu0 0.0
  %4101 = vmatpush1.msra.mxu0 0.0
  %4102 = vmatprep.subr.mxu0 0.0
  %4103 = vmatpush1.msra.mxu0 0.0
  %4104 = vmatprep.subr.mxu0 0.0
  %4105 = vmatpush1.msra.mxu0 0.0
  %4106 = vmatprep.subr.mxu0 0.0
  %4107 = vmatpush1.msra.mxu0 0.0
  %4108 = vmatprep.subr.mxu0 0.0
  %4109 = vmatpush1.msra.mxu0 0.0
  %4110 = vmatprep.subr.mxu0 0.0
  %4111 = vmatpush1.msra.mxu0 0.0
  %4112 = vmatprep.subr.mxu0 0.0
  %4113 = vmatpush1.msra.mxu0 0.0
  %4114 = vmatprep.subr.mxu0 0.0
  %4115 = vmatpush1.msra.mxu0 0.0
  %4116 = vmatprep.subr.mxu0 0.0
  %4117 = vmatpush1.msra.mxu0 0.0
  %4118 = vmatprep.subr.mxu0 0.0
  %4119 = vmatpush1.msra.mxu0 0.0
  %4120 = vmatprep.subr.mxu0 0.0
  %4121 = vmatpush1.msra.mxu0 0.0
  %4122 = vmatprep.subr.mxu0 0.0
  %4123 = vmatpush1.msra.mxu0 0.0
  %4124 = vmatprep.mubr.f32.mxu0 0.0
  %4125 = vmatmul.mubr.f32.gmra.mrb[0].mxu0 %v3978
  %v4126 = vpop.f32.mrb[0].mxu0
  %v4127 = vadd.f32 %v3970, %v4126
  %v4128 = vpop.f32.mrb[0].mxu0
  %v4129 = vadd.f32 %v3970, %v4128
  %4130 = vmatprep.mubr.f32.mxu0 0.0
  %4131 = vmatmul.mubr.f32.gmra.mrb[0].mxu0 %v3981
  %v4132 = vpop.f32.mrb[0].mxu0
  %v4133 = vadd.f32 %v3975, %v4132
  %v4134 = vpop.f32.mrb[0].mxu0
  %v4135 = vadd.f32 %v3975, %v4134
  %4136 = vdwg.mxu0
  %4137 = vmatprep.subr.mxu0 %v3950
  %4138 = vmatpush1.msra.mxu0 %v3949
  %4139 = vmatprep.subr.mxu0 %v3958
  %4140 = vmatpush1.msra.mxu0 %v3957
  %4141 = vmatprep.subr.mxu0 0.0
  %4142 = vmatpush1.msra.mxu0 0.0
  %4143 = vmatprep.subr.mxu0 0.0
  %4144 = vmatpush1.msra.mxu0 0.0
  %4145 = vmatprep.subr.mxu0 0.0
  %4146 = vmatpush1.msra.mxu0 0.0
  %4147 = vmatprep.subr.mxu0 0.0
  %4148 = vmatpush1.msra.mxu0 0.0
  %4149 = vmatprep.subr.mxu0 0.0
  %4150 = vmatpush1.msra.mxu0 0.0
  %4151 = vmatprep.subr.mxu0 0.0
  %4152 = vmatpush1.msra.mxu0 0.0
  %4153 = vmatprep.subr.mxu0 0.0
  %4154 = vmatpush1.msra.mxu0 0.0
  %4155 = vmatprep.subr.mxu0 0.0
  %4156 = vmatpush1.msra.mxu0 0.0
  %4157 = vmatprep.subr.mxu0 0.0
  %4158 = vmatpush1.msra.mxu0 0.0
  %4159 = vmatprep.subr.mxu0 0.0
  %4160 = vmatpush1.msra.mxu0 0.0
  %4161 = vmatprep.subr.mxu0 0.0
  %4162 = vmatpush1.msra.mxu0 0.0
  %4163 = vmatprep.subr.mxu0 0.0
  %4164 = vmatpush1.msra.mxu0 0.0
  %4165 = vmatprep.subr.mxu0 0.0
  %4166 = vmatpush1.msra.mxu0 0.0
  %4167 = vmatprep.subr.mxu0 0.0
  %4168 = vmatpush1.msra.mxu0 0.0
  %4169 = vmatprep.subr.mxu0 0.0
  %4170 = vmatpush1.msra.mxu0 0.0
  %4171 = vmatprep.subr.mxu0 0.0
  %4172 = vmatpush1.msra.mxu0 0.0
  %4173 = vmatprep.subr.mxu0 0.0
  %4174 = vmatpush1.msra.mxu0 0.0
  %4175 = vmatprep.subr.mxu0 0.0
  %4176 = vmatpush1.msra.mxu0 0.0
  %4177 = vmatprep.subr.mxu0 0.0
  %4178 = vmatpush1.msra.mxu0 0.0
  %4179 = vmatprep.subr.mxu0 0.0
  %4180 = vmatpush1.msra.mxu0 0.0
  %4181 = vmatprep.subr.mxu0 0.0
  %4182 = vmatpush1.msra.mxu0 0.0
  %4183 = vmatprep.subr.mxu0 0.0
  %4184 = vmatpush1.msra.mxu0 0.0
  %4185 = vmatprep.subr.mxu0 0.0
  %4186 = vmatpush1.msra.mxu0 0.0
  %4187 = vmatprep.subr.mxu0 0.0
  %4188 = vmatpush1.msra.mxu0 0.0
  %4189 = vmatprep.subr.mxu0 0.0
  %4190 = vmatpush1.msra.mxu0 0.0
  %4191 = vmatprep.subr.mxu0 0.0
  %4192 = vmatpush1.msra.mxu0 0.0
  %4193 = vmatprep.subr.mxu0 0.0
  %4194 = vmatpush1.msra.mxu0 0.0
  %4195 = vmatprep.subr.mxu0 0.0
  %4196 = vmatpush1.msra.mxu0 0.0
  %4197 = vmatprep.subr.mxu0 0.0
  %4198 = vmatpush1.msra.mxu0 0.0
  %4199 = vmatprep.subr.mxu0 0.0
  %4200 = vmatpush1.msra.mxu0 0.0
  %4201 = vmatprep.mubr.f32.mxu0 0.0
  %4202 = vmatmul.mubr.f32.gmra.mrb[0].mxu0 %v3978
  %v4203 = vpop.f32.mrb[0].mxu0
  %v4204 = vadd.f32 %v3970, %v4203
  %v4205 = vpop.f32.mrb[0].mxu0
  %v4206 = vadd.f32 %v3970, %v4205
  %4207 = vmatprep.mubr.f32.mxu0 0.0
  %4208 = vmatmul.mubr.f32.gmra.mrb[0].mxu0 %v3981
  %v4209 = vpop.f32.mrb[0].mxu0
  %v4210 = vadd.f32 %v3975, %v4209
  %v4211 = vpop.f32.mrb[0].mxu0
  %v4212 = vadd.f32 %v3975, %v4211
  %4213 = vdwg.mxu0
  %4214 = vmatprep.subr.mxu0 %v3952
  %4215 = vmatpush1.msra.mxu0 %v3951
  %4216 = vmatprep.subr.mxu0 %v3960
  %4217 = vmatpush1.msra.mxu0 %v3959
  %4218 = vmatprep.subr.mxu0 0.0
  %4219 = vmatpush1.msra.mxu0 0.0
  %4220 = vmatprep.subr.mxu0 0.0
  %4221 = vmatpush1.msra.mxu0 0.0
  %4222 = vmatprep.subr.mxu0 0.0
  %4223 = vmatpush1.msra.mxu0 0.0
  %4224 = vmatprep.subr.mxu0 0.0
  %4225 = vmatpush1.msra.mxu0 0.0
  %4226 = vmatprep.subr.mxu0 0.0
  %4227 = vmatpush1.msra.mxu0 0.0
  %4228 = vmatprep.subr.mxu0 0.0
  %4229 = vmatpush1.msra.mxu0 0.0
  %4230 = vmatprep.subr.mxu0 0.0
  %4231 = vmatpush1.msra.mxu0 0.0
  %4232 = vmatprep.subr.mxu0 0.0
  %4233 = vmatpush1.msra.mxu0 0.0
  %4234 = vmatprep.subr.mxu0 0.0
  %4235 = vmatpush1.msra.mxu0 0.0
  %4236 = vmatprep.subr.mxu0 0.0
  %4237 = vmatpush1.msra.mxu0 0.0
  %4238 = vmatprep.subr.mxu0 0.0
  %4239 = vmatpush1.msra.mxu0 0.0
  %4240 = vmatprep.subr.mxu0 0.0
  %4241 = vmatpush1.msra.mxu0 0.0
  %4242 = vmatprep.subr.mxu0 0.0
  %4243 = vmatpush1.msra.mxu0 0.0
  %4244 = vmatprep.subr.mxu0 0.0
  %4245 = vmatpush1.msra.mxu0 0.0
  %4246 = vmatprep.subr.mxu0 0.0
  %4247 = vmatpush1.msra.mxu0 0.0
  %4248 = vmatprep.subr.mxu0 0.0
  %4249 = vmatpush1.msra.mxu0 0.0
  %4250 = vmatprep.subr.mxu0 0.0
  %4251 = vmatpush1.msra.mxu0 0.0
  %4252 = vmatprep.subr.mxu0 0.0
  %4253 = vmatpush1.msra.mxu0 0.0
  %4254 = vmatprep.subr.mxu0 0.0
  %4255 = vmatpush1.msra.mxu0 0.0
  %4256 = vmatprep.subr.mxu0 0.0
  %4257 = vmatpush1.msra.mxu0 0.0
  %4258 = vmatprep.subr.mxu0 0.0
  %4259 = vmatpush1.msra.mxu0 0.0
  %4260 = vmatprep.subr.mxu0 0.0
  %4261 = vmatpush1.msra.mxu0 0.0
  %4262 = vmatprep.subr.mxu0 0.0
  %4263 = vmatpush1.msra.mxu0 0.0
  %4264 = vmatprep.subr.mxu0 0.0
  %4265 = vmatpush1.msra.mxu0 0.0
  %4266 = vmatprep.subr.mxu0 0.0
  %4267 = vmatpush1.msra.mxu0 0.0
  %4268 = vmatprep.subr.mxu0 0.0
  %4269 = vmatpush1.msra.mxu0 0.0
  %4270 = vmatprep.subr.mxu0 0.0
  %4271 = vmatpush1.msra.mxu0 0.0
  %4272 = vmatprep.subr.mxu0 0.0
  %4273 = vmatpush1.msra.mxu0 0.0
  %4274 = vmatprep.subr.mxu0 0.0
  %4275 = vmatpush1.msra.mxu0 0.0
  %4276 = vmatprep.subr.mxu0 0.0
  %4277 = vmatpush1.msra.mxu0 0.0
  %4278 = vmatprep.mubr.f32.mxu0 0.0
  %4279 = vmatmul.mubr.f32.gmra.mrb[0].mxu0 %v3978
  %v4280 = vpop.f32.mrb[0].mxu0
  %v4281 = vadd.f32 %v3970, %v4280
  %v4282 = vpop.f32.mrb[0].mxu0
  %v4283 = vadd.f32 %v3970, %v4282
  %4284 = vmatprep.mubr.f32.mxu0 0.0
  %4285 = vmatmul.mubr.f32.gmra.mrb[0].mxu0 %v3981
  %v4286 = vpop.f32.mrb[0].mxu0
  %v4287 = vadd.f32 %v3975, %v4286
  %v4288 = vpop.f32.mrb[0].mxu0
  %v4289 = vadd.f32 %v3975, %v4288
  %4290 = vdwg.mxu0
  %v4291 = vmax.f32 %v4050, 0.0
  %v4292 = vmax.f32 %v4052, 0.0
  %v4293 = vmax.f32 %v4127, 0.0
  %v4294 = vmax.f32 %v4129, 0.0
  %v4295 = vmax.f32 %v4204, 0.0
  %v4296 = vmax.f32 %v4206, 0.0
  %v4297 = vmax.f32 %v4281, 0.0
  %v4298 = vmax.f32 %v4283, 0.0
  %v4299 = vmax.f32 %v4056, 0.0
  %v4300 = vmax.f32 %v4058, 0.0
  %v4301 = vmax.f32 %v4133, 0.0
  %v4302 = vmax.f32 %v4135, 0.0
  %v4303 = vmax.f32 %v4210, 0.0
  %v4304 = vmax.f32 %v4212, 0.0
  %v4305 = vmax.f32 %v4287, 0.0
  %v4306 = vmax.f32 %v4289, 0.0
  %s4307 = scalar_lea.vmem %s4, 192
  %v4308 = vld [vmem:[%s4307] sm:$0xff]
  %s4309 = scalar_lea.vmem %s5, 192
  %v4310 = vld [vmem:[%s4309] sm:$0xff]
  %4312 = vset.pattern.permute.xlu0 0
  %4313 = vperm.xlu0 %4312, %v4310
  %v4314 = vpop.permute.xlu0 %4313
  %v4317 = vsel %vm89, %v4308, 0
  %4319 = vmatprep.subr.mxu0 %v4292
  %4320 = vmatpush1.msra.mxu0 %v4291
  %4321 = vmatprep.subr.mxu0 %v4300
  %4322 = vmatpush1.msra.mxu0 %v4299
  %4323 = vmatprep.subr.mxu0 0.0
  %4324 = vmatpush1.msra.mxu0 0.0
  %4325 = vmatprep.subr.mxu0 0.0
  %4326 = vmatpush1.msra.mxu0 0.0
  %4327 = vmatprep.subr.mxu0 0.0
  %4328 = vmatpush1.msra.mxu0 0.0
  %4329 = vmatprep.subr.mxu0 0.0
  %4330 = vmatpush1.msra.mxu0 0.0
  %4331 = vmatprep.subr.mxu0 0.0
  %4332 = vmatpush1.msra.mxu0 0.0
  %4333 = vmatprep.subr.mxu0 0.0
  %4334 = vmatpush1.msra.mxu0 0.0
  %4335 = vmatprep.subr.mxu0 0.0
  %4336 = vmatpush1.msra.mxu0 0.0
  %4337 = vmatprep.subr.mxu0 0.0
  %4338 = vmatpush1.msra.mxu0 0.0
  %4339 = vmatprep.subr.mxu0 0.0
  %4340 = vmatpush1.msra.mxu0 0.0
  %4341 = vmatprep.subr.mxu0 0.0
  %4342 = vmatpush1.msra.mxu0 0.0
  %4343 = vmatprep.subr.mxu0 0.0
  %4344 = vmatpush1.msra.mxu0 0.0
  %4345 = vmatprep.subr.mxu0 0.0
  %4346 = vmatpush1.msra.mxu0 0.0
  %4347 = vmatprep.subr.mxu0 0.0
  %4348 = vmatpush1.msra.mxu0 0.0
  %4349 = vmatprep.subr.mxu0 0.0
  %4350 = vmatpush1.msra.mxu0 0.0
  %4351 = vmatprep.subr.mxu0 0.0
  %4352 = vmatpush1.msra.mxu0 0.0
  %4353 = vmatprep.subr.mxu0 0.0
  %4354 = vmatpush1.msra.mxu0 0.0
  %4355 = vmatprep.subr.mxu0 0.0
  %4356 = vmatpush1.msra.mxu0 0.0
  %4357 = vmatprep.subr.mxu0 0.0
  %4358 = vmatpush1.msra.mxu0 0.0
  %4359 = vmatprep.subr.mxu0 0.0
  %4360 = vmatpush1.msra.mxu0 0.0
  %4361 = vmatprep.subr.mxu0 0.0
  %4362 = vmatpush1.msra.mxu0 0.0
  %4363 = vmatprep.subr.mxu0 0.0
  %4364 = vmatpush1.msra.mxu0 0.0
  %4365 = vmatprep.subr.mxu0 0.0
  %4366 = vmatpush1.msra.mxu0 0.0
  %4367 = vmatprep.subr.mxu0 0.0
  %4368 = vmatpush1.msra.mxu0 0.0
  %4369 = vmatprep.subr.mxu0 0.0
  %4370 = vmatpush1.msra.mxu0 0.0
  %4371 = vmatprep.subr.mxu0 0.0
  %4372 = vmatpush1.msra.mxu0 0.0
  %4373 = vmatprep.subr.mxu0 0.0
  %4374 = vmatpush1.msra.mxu0 0.0
  %4375 = vmatprep.subr.mxu0 0.0
  %4376 = vmatpush1.msra.mxu0 0.0
  %4377 = vmatprep.subr.mxu0 0.0
  %4378 = vmatpush1.msra.mxu0 0.0
  %4379 = vmatprep.subr.mxu0 0.0
  %4380 = vmatpush1.msra.mxu0 0.0
  %4381 = vmatprep.subr.mxu0 0.0
  %4382 = vmatpush1.msra.mxu0 0.0
  %4383 = vmatprep.mubr.f32.mxu0 0.0
  %4384 = vmatmul.mubr.f32.gmra.mrb[0].mxu0 %v4317
  %v4385 = vpop.f32.mrb[0].mxu0
  %v4386 = vadd.f32 %v4314, %v4385
  %v4387 = vpop.f32.mrb[0].mxu0
  %v4388 = vadd.f32 %v4314, %v4387
  %4389 = vdwg.mxu0
  %4390 = vmatprep.subr.mxu0 %v4294
  %4391 = vmatpush1.msra.mxu0 %v4293
  %4392 = vmatprep.subr.mxu0 %v4302
  %4393 = vmatpush1.msra.mxu0 %v4301
  %4394 = vmatprep.subr.mxu0 0.0
  %4395 = vmatpush1.msra.mxu0 0.0
  %4396 = vmatprep.subr.mxu0 0.0
  %4397 = vmatpush1.msra.mxu0 0.0
  %4398 = vmatprep.subr.mxu0 0.0
  %4399 = vmatpush1.msra.mxu0 0.0
  %4400 = vmatprep.subr.mxu0 0.0
  %4401 = vmatpush1.msra.mxu0 0.0
  %4402 = vmatprep.subr.mxu0 0.0
  %4403 = vmatpush1.msra.mxu0 0.0
  %4404 = vmatprep.subr.mxu0 0.0
  %4405 = vmatpush1.msra.mxu0 0.0
  %4406 = vmatprep.subr.mxu0 0.0
  %4407 = vmatpush1.msra.mxu0 0.0
  %4408 = vmatprep.subr.mxu0 0.0
  %4409 = vmatpush1.msra.mxu0 0.0
  %4410 = vmatprep.subr.mxu0 0.0
  %4411 = vmatpush1.msra.mxu0 0.0
  %4412 = vmatprep.subr.mxu0 0.0
  %4413 = vmatpush1.msra.mxu0 0.0
  %4414 = vmatprep.subr.mxu0 0.0
  %4415 = vmatpush1.msra.mxu0 0.0
  %4416 = vmatprep.subr.mxu0 0.0
  %4417 = vmatpush1.msra.mxu0 0.0
  %4418 = vmatprep.subr.mxu0 0.0
  %4419 = vmatpush1.msra.mxu0 0.0
  %4420 = vmatprep.subr.mxu0 0.0
  %4421 = vmatpush1.msra.mxu0 0.0
  %4422 = vmatprep.subr.mxu0 0.0
  %4423 = vmatpush1.msra.mxu0 0.0
  %4424 = vmatprep.subr.mxu0 0.0
  %4425 = vmatpush1.msra.mxu0 0.0
  %4426 = vmatprep.subr.mxu0 0.0
  %4427 = vmatpush1.msra.mxu0 0.0
  %4428 = vmatprep.subr.mxu0 0.0
  %4429 = vmatpush1.msra.mxu0 0.0
  %4430 = vmatprep.subr.mxu0 0.0
  %4431 = vmatpush1.msra.mxu0 0.0
  %4432 = vmatprep.subr.mxu0 0.0
  %4433 = vmatpush1.msra.mxu0 0.0
  %4434 = vmatprep.subr.mxu0 0.0
  %4435 = vmatpush1.msra.mxu0 0.0
  %4436 = vmatprep.subr.mxu0 0.0
  %4437 = vmatpush1.msra.mxu0 0.0
  %4438 = vmatprep.subr.mxu0 0.0
  %4439 = vmatpush1.msra.mxu0 0.0
  %4440 = vmatprep.subr.mxu0 0.0
  %4441 = vmatpush1.msra.mxu0 0.0
  %4442 = vmatprep.subr.mxu0 0.0
  %4443 = vmatpush1.msra.mxu0 0.0
  %4444 = vmatprep.subr.mxu0 0.0
  %4445 = vmatpush1.msra.mxu0 0.0
  %4446 = vmatprep.subr.mxu0 0.0
  %4447 = vmatpush1.msra.mxu0 0.0
  %4448 = vmatprep.subr.mxu0 0.0
  %4449 = vmatpush1.msra.mxu0 0.0
  %4450 = vmatprep.subr.mxu0 0.0
  %4451 = vmatpush1.msra.mxu0 0.0
  %4452 = vmatprep.subr.mxu0 0.0
  %4453 = vmatpush1.msra.mxu0 0.0
  %4454 = vmatprep.mubr.f32.mxu0 0.0
  %4455 = vmatmul.mubr.f32.gmra.mrb[0].mxu0 %v4317
  %v4456 = vpop.f32.mrb[0].mxu0
  %v4457 = vadd.f32 %v4314, %v4456
  %v4458 = vpop.f32.mrb[0].mxu0
  %v4459 = vadd.f32 %v4314, %v4458
  %4460 = vdwg.mxu0
  %4461 = vmatprep.subr.mxu0 %v4296
  %4462 = vmatpush1.msra.mxu0 %v4295
  %4463 = vmatprep.subr.mxu0 %v4304
  %4464 = vmatpush1.msra.mxu0 %v4303
  %4465 = vmatprep.subr.mxu0 0.0
  %4466 = vmatpush1.msra.mxu0 0.0
  %4467 = vmatprep.subr.mxu0 0.0
  %4468 = vmatpush1.msra.mxu0 0.0
  %4469 = vmatprep.subr.mxu0 0.0
  %4470 = vmatpush1.msra.mxu0 0.0
  %4471 = vmatprep.subr.mxu0 0.0
  %4472 = vmatpush1.msra.mxu0 0.0
  %4473 = vmatprep.subr.mxu0 0.0
  %4474 = vmatpush1.msra.mxu0 0.0
  %4475 = vmatprep.subr.mxu0 0.0
  %4476 = vmatpush1.msra.mxu0 0.0
  %4477 = vmatprep.subr.mxu0 0.0
  %4478 = vmatpush1.msra.mxu0 0.0
  %4479 = vmatprep.subr.mxu0 0.0
  %4480 = vmatpush1.msra.mxu0 0.0
  %4481 = vmatprep.subr.mxu0 0.0
  %4482 = vmatpush1.msra.mxu0 0.0
  %4483 = vmatprep.subr.mxu0 0.0
  %4484 = vmatpush1.msra.mxu0 0.0
  %4485 = vmatprep.subr.mxu0 0.0
  %4486 = vmatpush1.msra.mxu0 0.0
  %4487 = vmatprep.subr.mxu0 0.0
  %4488 = vmatpush1.msra.mxu0 0.0
  %4489 = vmatprep.subr.mxu0 0.0
  %4490 = vmatpush1.msra.mxu0 0.0
  %4491 = vmatprep.subr.mxu0 0.0
  %4492 = vmatpush1.msra.mxu0 0.0
  %4493 = vmatprep.subr.mxu0 0.0
  %4494 = vmatpush1.msra.mxu0 0.0
  %4495 = vmatprep.subr.mxu0 0.0
  %4496 = vmatpush1.msra.mxu0 0.0
  %4497 = vmatprep.subr.mxu0 0.0
  %4498 = vmatpush1.msra.mxu0 0.0
  %4499 = vmatprep.subr.mxu0 0.0
  %4500 = vmatpush1.msra.mxu0 0.0
  %4501 = vmatprep.subr.mxu0 0.0
  %4502 = vmatpush1.msra.mxu0 0.0
  %4503 = vmatprep.subr.mxu0 0.0
  %4504 = vmatpush1.msra.mxu0 0.0
  %4505 = vmatprep.subr.mxu0 0.0
  %4506 = vmatpush1.msra.mxu0 0.0
  %4507 = vmatprep.subr.mxu0 0.0
  %4508 = vmatpush1.msra.mxu0 0.0
  %4509 = vmatprep.subr.mxu0 0.0
  %4510 = vmatpush1.msra.mxu0 0.0
  %4511 = vmatprep.subr.mxu0 0.0
  %4512 = vmatpush1.msra.mxu0 0.0
  %4513 = vmatprep.subr.mxu0 0.0
  %4514 = vmatpush1.msra.mxu0 0.0
  %4515 = vmatprep.subr.mxu0 0.0
  %4516 = vmatpush1.msra.mxu0 0.0
  %4517 = vmatprep.subr.mxu0 0.0
  %4518 = vmatpush1.msra.mxu0 0.0
  %4519 = vmatprep.subr.mxu0 0.0
  %4520 = vmatpush1.msra.mxu0 0.0
  %4521 = vmatprep.subr.mxu0 0.0
  %4522 = vmatpush1.msra.mxu0 0.0
  %4523 = vmatprep.subr.mxu0 0.0
  %4524 = vmatpush1.msra.mxu0 0.0
  %4525 = vmatprep.mubr.f32.mxu0 0.0
  %4526 = vmatmul.mubr.f32.gmra.mrb[0].mxu0 %v4317
  %v4527 = vpop.f32.mrb[0].mxu0
  %v4528 = vadd.f32 %v4314, %v4527
  %v4529 = vpop.f32.mrb[0].mxu0
  %v4530 = vadd.f32 %v4314, %v4529
  %4531 = vdwg.mxu0
  %4532 = vmatprep.subr.mxu0 %v4298
  %4533 = vmatpush1.msra.mxu0 %v4297
  %4534 = vmatprep.subr.mxu0 %v4306
  %4535 = vmatpush1.msra.mxu0 %v4305
  %4536 = vmatprep.subr.mxu0 0.0
  %4537 = vmatpush1.msra.mxu0 0.0
  %4538 = vmatprep.subr.mxu0 0.0
  %4539 = vmatpush1.msra.mxu0 0.0
  %4540 = vmatprep.subr.mxu0 0.0
  %4541 = vmatpush1.msra.mxu0 0.0
  %4542 = vmatprep.subr.mxu0 0.0
  %4543 = vmatpush1.msra.mxu0 0.0
  %4544 = vmatprep.subr.mxu0 0.0
  %4545 = vmatpush1.msra.mxu0 0.0
  %4546 = vmatprep.subr.mxu0 0.0
  %4547 = vmatpush1.msra.mxu0 0.0
  %4548 = vmatprep.subr.mxu0 0.0
  %4549 = vmatpush1.msra.mxu0 0.0
  %4550 = vmatprep.subr.mxu0 0.0
  %4551 = vmatpush1.msra.mxu0 0.0
  %4552 = vmatprep.subr.mxu0 0.0
  %4553 = vmatpush1.msra.mxu0 0.0
  %4554 = vmatprep.subr.mxu0 0.0
  %4555 = vmatpush1.msra.mxu0 0.0
  %4556 = vmatprep.subr.mxu0 0.0
  %4557 = vmatpush1.msra.mxu0 0.0
  %4558 = vmatprep.subr.mxu0 0.0
  %4559 = vmatpush1.msra.mxu0 0.0
  %4560 = vmatprep.subr.mxu0 0.0
  %4561 = vmatpush1.msra.mxu0 0.0
  %4562 = vmatprep.subr.mxu0 0.0
  %4563 = vmatpush1.msra.mxu0 0.0
  %4564 = vmatprep.subr.mxu0 0.0
  %4565 = vmatpush1.msra.mxu0 0.0
  %4566 = vmatprep.subr.mxu0 0.0
  %4567 = vmatpush1.msra.mxu0 0.0
  %4568 = vmatprep.subr.mxu0 0.0
  %4569 = vmatpush1.msra.mxu0 0.0
  %4570 = vmatprep.subr.mxu0 0.0
  %4571 = vmatpush1.msra.mxu0 0.0
  %4572 = vmatprep.subr.mxu0 0.0
  %4573 = vmatpush1.msra.mxu0 0.0
  %4574 = vmatprep.subr.mxu0 0.0
  %4575 = vmatpush1.msra.mxu0 0.0
  %4576 = vmatprep.subr.mxu0 0.0
  %4577 = vmatpush1.msra.mxu0 0.0
  %4578 = vmatprep.subr.mxu0 0.0
  %4579 = vmatpush1.msra.mxu0 0.0
  %4580 = vmatprep.subr.mxu0 0.0
  %4581 = vmatpush1.msra.mxu0 0.0
  %4582 = vmatprep.subr.mxu0 0.0
  %4583 = vmatpush1.msra.mxu0 0.0
  %4584 = vmatprep.subr.mxu0 0.0
  %4585 = vmatpush1.msra.mxu0 0.0
  %4586 = vmatprep.subr.mxu0 0.0
  %4587 = vmatpush1.msra.mxu0 0.0
  %4588 = vmatprep.subr.mxu0 0.0
  %4589 = vmatpush1.msra.mxu0 0.0
  %4590 = vmatprep.subr.mxu0 0.0
  %4591 = vmatpush1.msra.mxu0 0.0
  %4592 = vmatprep.subr.mxu0 0.0
  %4593 = vmatpush1.msra.mxu0 0.0
  %4594 = vmatprep.subr.mxu0 0.0
  %4595 = vmatpush1.msra.mxu0 0.0
  %4596 = vmatprep.mubr.f32.mxu0 0.0
  %4597 = vmatmul.mubr.f32.gmra.mrb[0].mxu0 %v4317
  %v4598 = vpop.f32.mrb[0].mxu0
  %v4599 = vadd.f32 %v4314, %v4598
  %v4600 = vpop.f32.mrb[0].mxu0
  %v4601 = vadd.f32 %v4314, %v4600
  %4602 = vdwg.mxu0
  %v4603 = vmax.f32 %v4386, 0.0
  %v4604 = vmax.f32 %v4388, 0.0
  %v4605 = vmax.f32 %v4457, 0.0
  %v4606 = vmax.f32 %v4459, 0.0
  %v4607 = vmax.f32 %v4528, 0.0
  %v4608 = vmax.f32 %v4530, 0.0
  %v4609 = vmax.f32 %v4599, 0.0
  %v4610 = vmax.f32 %v4601, 0.0
  %s4611 = scalar_lea.vmem %s4, 208
  %v4612 = vld [vmem:[%s4611] sm:$0xff]
  %s4613 = scalar_lea.vmem %s5, 208
  %v4614 = vld [vmem:[%s4613] sm:$0xff]
  %4616 = vset.pattern.permute.xlu0 0
  %4617 = vperm.xlu0 %4616, %v4614
  %v4618 = vpop.permute.xlu0 %4617
  %v4621 = vsel %vm527, %v4612, 0
  %4623 = vmatprep.subr.mxu0 %v4604
  %4624 = vmatpush1.msra.mxu0 %v4603
  %4625 = vmatprep.subr.mxu0 0.0
  %4626 = vmatpush1.msra.mxu0 0.0
  %4627 = vmatprep.subr.mxu0 0.0
  %4628 = vmatpush1.msra.mxu0 0.0
  %4629 = vmatprep.subr.mxu0 0.0
  %4630 = vmatpush1.msra.mxu0 0.0
  %4631 = vmatprep.subr.mxu0 0.0
  %4632 = vmatpush1.msra.mxu0 0.0
  %4633 = vmatprep.subr.mxu0 0.0
  %4634 = vmatpush1.msra.mxu0 0.0
  %4635 = vmatprep.subr.mxu0 0.0
  %4636 = vmatpush1.msra.mxu0 0.0
  %4637 = vmatprep.subr.mxu0 0.0
  %4638 = vmatpush1.msra.mxu0 0.0
  %4639 = vmatprep.subr.mxu0 0.0
  %4640 = vmatpush1.msra.mxu0 0.0
  %4641 = vmatprep.subr.mxu0 0.0
  %4642 = vmatpush1.msra.mxu0 0.0
  %4643 = vmatprep.subr.mxu0 0.0
  %4644 = vmatpush1.msra.mxu0 0.0
  %4645 = vmatprep.subr.mxu0 0.0
  %4646 = vmatpush1.msra.mxu0 0.0
  %4647 = vmatprep.subr.mxu0 0.0
  %4648 = vmatpush1.msra.mxu0 0.0
  %4649 = vmatprep.subr.mxu0 0.0
  %4650 = vmatpush1.msra.mxu0 0.0
  %4651 = vmatprep.subr.mxu0 0.0
  %4652 = vmatpush1.msra.mxu0 0.0
  %4653 = vmatprep.subr.mxu0 0.0
  %4654 = vmatpush1.msra.mxu0 0.0
  %4655 = vmatprep.subr.mxu0 0.0
  %4656 = vmatpush1.msra.mxu0 0.0
  %4657 = vmatprep.subr.mxu0 0.0
  %4658 = vmatpush1.msra.mxu0 0.0
  %4659 = vmatprep.subr.mxu0 0.0
  %4660 = vmatpush1.msra.mxu0 0.0
  %4661 = vmatprep.subr.mxu0 0.0
  %4662 = vmatpush1.msra.mxu0 0.0
  %4663 = vmatprep.subr.mxu0 0.0
  %4664 = vmatpush1.msra.mxu0 0.0
  %4665 = vmatprep.subr.mxu0 0.0
  %4666 = vmatpush1.msra.mxu0 0.0
  %4667 = vmatprep.subr.mxu0 0.0
  %4668 = vmatpush1.msra.mxu0 0.0
  %4669 = vmatprep.subr.mxu0 0.0
  %4670 = vmatpush1.msra.mxu0 0.0
  %4671 = vmatprep.subr.mxu0 0.0
  %4672 = vmatpush1.msra.mxu0 0.0
  %4673 = vmatprep.subr.mxu0 0.0
  %4674 = vmatpush1.msra.mxu0 0.0
  %4675 = vmatprep.subr.mxu0 0.0
  %4676 = vmatpush1.msra.mxu0 0.0
  %4677 = vmatprep.subr.mxu0 0.0
  %4678 = vmatpush1.msra.mxu0 0.0
  %4679 = vmatprep.subr.mxu0 0.0
  %4680 = vmatpush1.msra.mxu0 0.0
  %4681 = vmatprep.subr.mxu0 0.0
  %4682 = vmatpush1.msra.mxu0 0.0
  %4683 = vmatprep.subr.mxu0 0.0
  %4684 = vmatpush1.msra.mxu0 0.0
  %4685 = vmatprep.subr.mxu0 0.0
  %4686 = vmatpush1.msra.mxu0 0.0
  %4687 = vmatprep.mubr.f32.mxu0 0.0
  %4688 = vmatmul.mubr.f32.gmra.mrb[0].mxu0 %v4621
  %v4689 = vpop.f32.mrb[0].mxu0
  %v4690 = vadd.f32 %v4618, %v4689
  %v4691 = vpop.f32.mrb[0].mxu0
  %v4692 = vadd.f32 %v4618, %v4691
  %4693 = vdwg.mxu0
  %4694 = vmatprep.subr.mxu0 %v4606
  %4695 = vmatpush1.msra.mxu0 %v4605
  %4696 = vmatprep.subr.mxu0 0.0
  %4697 = vmatpush1.msra.mxu0 0.0
  %4698 = vmatprep.subr.mxu0 0.0
  %4699 = vmatpush1.msra.mxu0 0.0
  %4700 = vmatprep.subr.mxu0 0.0
  %4701 = vmatpush1.msra.mxu0 0.0
  %4702 = vmatprep.subr.mxu0 0.0
  %4703 = vmatpush1.msra.mxu0 0.0
  %4704 = vmatprep.subr.mxu0 0.0
  %4705 = vmatpush1.msra.mxu0 0.0
  %4706 = vmatprep.subr.mxu0 0.0
  %4707 = vmatpush1.msra.mxu0 0.0
  %4708 = vmatprep.subr.mxu0 0.0
  %4709 = vmatpush1.msra.mxu0 0.0
  %4710 = vmatprep.subr.mxu0 0.0
  %4711 = vmatpush1.msra.mxu0 0.0
  %4712 = vmatprep.subr.mxu0 0.0
  %4713 = vmatpush1.msra.mxu0 0.0
  %4714 = vmatprep.subr.mxu0 0.0
  %4715 = vmatpush1.msra.mxu0 0.0
  %4716 = vmatprep.subr.mxu0 0.0
  %4717 = vmatpush1.msra.mxu0 0.0
  %4718 = vmatprep.subr.mxu0 0.0
  %4719 = vmatpush1.msra.mxu0 0.0
  %4720 = vmatprep.subr.mxu0 0.0
  %4721 = vmatpush1.msra.mxu0 0.0
  %4722 = vmatprep.subr.mxu0 0.0
  %4723 = vmatpush1.msra.mxu0 0.0
  %4724 = vmatprep.subr.mxu0 0.0
  %4725 = vmatpush1.msra.mxu0 0.0
  %4726 = vmatprep.subr.mxu0 0.0
  %4727 = vmatpush1.msra.mxu0 0.0
  %4728 = vmatprep.subr.mxu0 0.0
  %4729 = vmatpush1.msra.mxu0 0.0
  %4730 = vmatprep.subr.mxu0 0.0
  %4731 = vmatpush1.msra.mxu0 0.0
  %4732 = vmatprep.subr.mxu0 0.0
  %4733 = vmatpush1.msra.mxu0 0.0
  %4734 = vmatprep.subr.mxu0 0.0
  %4735 = vmatpush1.msra.mxu0 0.0
  %4736 = vmatprep.subr.mxu0 0.0
  %4737 = vmatpush1.msra.mxu0 0.0
  %4738 = vmatprep.subr.mxu0 0.0
  %4739 = vmatpush1.msra.mxu0 0.0
  %4740 = vmatprep.subr.mxu0 0.0
  %4741 = vmatpush1.msra.mxu0 0.0
  %4742 = vmatprep.subr.mxu0 0.0
  %4743 = vmatpush1.msra.mxu0 0.0
  %4744 = vmatprep.subr.mxu0 0.0
  %4745 = vmatpush1.msra.mxu0 0.0
  %4746 = vmatprep.subr.mxu0 0.0
  %4747 = vmatpush1.msra.mxu0 0.0
  %4748 = vmatprep.subr.mxu0 0.0
  %4749 = vmatpush1.msra.mxu0 0.0
  %4750 = vmatprep.subr.mxu0 0.0
  %4751 = vmatpush1.msra.mxu0 0.0
  %4752 = vmatprep.subr.mxu0 0.0
  %4753 = vmatpush1.msra.mxu0 0.0
  %4754 = vmatprep.subr.mxu0 0.0
  %4755 = vmatpush1.msra.mxu0 0.0
  %4756 = vmatprep.subr.mxu0 0.0
  %4757 = vmatpush1.msra.mxu0 0.0
  %4758 = vmatprep.mubr.f32.mxu0 0.0
  %4759 = vmatmul.mubr.f32.gmra.mrb[0].mxu0 %v4621
  %v4760 = vpop.f32.mrb[0].mxu0
  %v4761 = vadd.f32 %v4618, %v4760
  %v4762 = vpop.f32.mrb[0].mxu0
  %v4763 = vadd.f32 %v4618, %v4762
  %4764 = vdwg.mxu0
  %4765 = vmatprep.subr.mxu0 %v4608
  %4766 = vmatpush1.msra.mxu0 %v4607
  %4767 = vmatprep.subr.mxu0 0.0
  %4768 = vmatpush1.msra.mxu0 0.0
  %4769 = vmatprep.subr.mxu0 0.0
  %4770 = vmatpush1.msra.mxu0 0.0
  %4771 = vmatprep.subr.mxu0 0.0
  %4772 = vmatpush1.msra.mxu0 0.0
  %4773 = vmatprep.subr.mxu0 0.0
  %4774 = vmatpush1.msra.mxu0 0.0
  %4775 = vmatprep.subr.mxu0 0.0
  %4776 = vmatpush1.msra.mxu0 0.0
  %4777 = vmatprep.subr.mxu0 0.0
  %4778 = vmatpush1.msra.mxu0 0.0
  %4779 = vmatprep.subr.mxu0 0.0
  %4780 = vmatpush1.msra.mxu0 0.0
  %4781 = vmatprep.subr.mxu0 0.0
  %4782 = vmatpush1.msra.mxu0 0.0
  %4783 = vmatprep.subr.mxu0 0.0
  %4784 = vmatpush1.msra.mxu0 0.0
  %4785 = vmatprep.subr.mxu0 0.0
  %4786 = vmatpush1.msra.mxu0 0.0
  %4787 = vmatprep.subr.mxu0 0.0
  %4788 = vmatpush1.msra.mxu0 0.0
  %4789 = vmatprep.subr.mxu0 0.0
  %4790 = vmatpush1.msra.mxu0 0.0
  %4791 = vmatprep.subr.mxu0 0.0
  %4792 = vmatpush1.msra.mxu0 0.0
  %4793 = vmatprep.subr.mxu0 0.0
  %4794 = vmatpush1.msra.mxu0 0.0
  %4795 = vmatprep.subr.mxu0 0.0
  %4796 = vmatpush1.msra.mxu0 0.0
  %4797 = vmatprep.subr.mxu0 0.0
  %4798 = vmatpush1.msra.mxu0 0.0
  %4799 = vmatprep.subr.mxu0 0.0
  %4800 = vmatpush1.msra.mxu0 0.0
  %4801 = vmatprep.subr.mxu0 0.0
  %4802 = vmatpush1.msra.mxu0 0.0
  %4803 = vmatprep.subr.mxu0 0.0
  %4804 = vmatpush1.msra.mxu0 0.0
  %4805 = vmatprep.subr.mxu0 0.0
  %4806 = vmatpush1.msra.mxu0 0.0
  %4807 = vmatprep.subr.mxu0 0.0
  %4808 = vmatpush1.msra.mxu0 0.0
  %4809 = vmatprep.subr.mxu0 0.0
  %4810 = vmatpush1.msra.mxu0 0.0
  %4811 = vmatprep.subr.mxu0 0.0
  %4812 = vmatpush1.msra.mxu0 0.0
  %4813 = vmatprep.subr.mxu0 0.0
  %4814 = vmatpush1.msra.mxu0 0.0
  %4815 = vmatprep.subr.mxu0 0.0
  %4816 = vmatpush1.msra.mxu0 0.0
  %4817 = vmatprep.subr.mxu0 0.0
  %4818 = vmatpush1.msra.mxu0 0.0
  %4819 = vmatprep.subr.mxu0 0.0
  %4820 = vmatpush1.msra.mxu0 0.0
  %4821 = vmatprep.subr.mxu0 0.0
  %4822 = vmatpush1.msra.mxu0 0.0
  %4823 = vmatprep.subr.mxu0 0.0
  %4824 = vmatpush1.msra.mxu0 0.0
  %4825 = vmatprep.subr.mxu0 0.0
  %4826 = vmatpush1.msra.mxu0 0.0
  %4827 = vmatprep.subr.mxu0 0.0
  %4828 = vmatpush1.msra.mxu0 0.0
  %4829 = vmatprep.mubr.f32.mxu0 0.0
  %4830 = vmatmul.mubr.f32.gmra.mrb[0].mxu0 %v4621
  %v4831 = vpop.f32.mrb[0].mxu0
  %v4832 = vadd.f32 %v4618, %v4831
  %v4833 = vpop.f32.mrb[0].mxu0
  %v4834 = vadd.f32 %v4618, %v4833
  %4835 = vdwg.mxu0
  %4836 = vmatprep.subr.mxu0 %v4610
  %4837 = vmatpush1.msra.mxu0 %v4609
  %4838 = vmatprep.subr.mxu0 0.0
  %4839 = vmatpush1.msra.mxu0 0.0
  %4840 = vmatprep.subr.mxu0 0.0
  %4841 = vmatpush1.msra.mxu0 0.0
  %4842 = vmatprep.subr.mxu0 0.0
  %4843 = vmatpush1.msra.mxu0 0.0
  %4844 = vmatprep.subr.mxu0 0.0
  %4845 = vmatpush1.msra.mxu0 0.0
  %4846 = vmatprep.subr.mxu0 0.0
  %4847 = vmatpush1.msra.mxu0 0.0
  %4848 = vmatprep.subr.mxu0 0.0
  %4849 = vmatpush1.msra.mxu0 0.0
  %4850 = vmatprep.subr.mxu0 0.0
  %4851 = vmatpush1.msra.mxu0 0.0
  %4852 = vmatprep.subr.mxu0 0.0
  %4853 = vmatpush1.msra.mxu0 0.0
  %4854 = vmatprep.subr.mxu0 0.0
  %4855 = vmatpush1.msra.mxu0 0.0
  %4856 = vmatprep.subr.mxu0 0.0
  %4857 = vmatpush1.msra.mxu0 0.0
  %4858 = vmatprep.subr.mxu0 0.0
  %4859 = vmatpush1.msra.mxu0 0.0
  %4860 = vmatprep.subr.mxu0 0.0
  %4861 = vmatpush1.msra.mxu0 0.0
  %4862 = vmatprep.subr.mxu0 0.0
  %4863 = vmatpush1.msra.mxu0 0.0
  %4864 = vmatprep.subr.mxu0 0.0
  %4865 = vmatpush1.msra.mxu0 0.0
  %4866 = vmatprep.subr.mxu0 0.0
  %4867 = vmatpush1.msra.mxu0 0.0
  %4868 = vmatprep.subr.mxu0 0.0
  %4869 = vmatpush1.msra.mxu0 0.0
  %4870 = vmatprep.subr.mxu0 0.0
  %4871 = vmatpush1.msra.mxu0 0.0
  %4872 = vmatprep.subr.mxu0 0.0
  %4873 = vmatpush1.msra.mxu0 0.0
  %4874 = vmatprep.subr.mxu0 0.0
  %4875 = vmatpush1.msra.mxu0 0.0
  %4876 = vmatprep.subr.mxu0 0.0
  %4877 = vmatpush1.msra.mxu0 0.0
  %4878 = vmatprep.subr.mxu0 0.0
  %4879 = vmatpush1.msra.mxu0 0.0
  %4880 = vmatprep.subr.mxu0 0.0
  %4881 = vmatpush1.msra.mxu0 0.0
  %4882 = vmatprep.subr.mxu0 0.0
  %4883 = vmatpush1.msra.mxu0 0.0
  %4884 = vmatprep.subr.mxu0 0.0
  %4885 = vmatpush1.msra.mxu0 0.0
  %4886 = vmatprep.subr.mxu0 0.0
  %4887 = vmatpush1.msra.mxu0 0.0
  %4888 = vmatprep.subr.mxu0 0.0
  %4889 = vmatpush1.msra.mxu0 0.0
  %4890 = vmatprep.subr.mxu0 0.0
  %4891 = vmatpush1.msra.mxu0 0.0
  %4892 = vmatprep.subr.mxu0 0.0
  %4893 = vmatpush1.msra.mxu0 0.0
  %4894 = vmatprep.subr.mxu0 0.0
  %4895 = vmatpush1.msra.mxu0 0.0
  %4896 = vmatprep.subr.mxu0 0.0
  %4897 = vmatpush1.msra.mxu0 0.0
  %4898 = vmatprep.subr.mxu0 0.0
  %4899 = vmatpush1.msra.mxu0 0.0
  %4900 = vmatprep.mubr.f32.mxu0 0.0
  %4901 = vmatmul.mubr.f32.gmra.mrb[0].mxu0 %v4621
  %v4902 = vpop.f32.mrb[0].mxu0
  %v4903 = vadd.f32 %v4618, %v4902
  %v4904 = vpop.f32.mrb[0].mxu0
  %v4905 = vadd.f32 %v4618, %v4904
  %4906 = vdwg.mxu0
  %4907 = vst [vmem:[%s6] sm:$0xff] %v4690
  %4908 = vst [vmem:[%s6 + $0x8] sm:$0xff] %v4692
  %4909 = vst [vmem:[%s6 + $0x10] sm:$0xff] %v4761
  %4910 = vst [vmem:[%s6 + $0x18] sm:$0xff] %v4763
  %4911 = vst [vmem:[%s6 + $0x20] sm:$0xff] %v4832
  %4912 = vst [vmem:[%s6 + $0x28] sm:$0xff] %v4834
  %4913 = vst [vmem:[%s6 + $0x30] sm:$0xff] %v4903
  %4914 = vst [vmem:[%s6 + $0x38] sm:$0xff] %v4905
  // Predicated region
  $region26: #{net_forward.1} parent=0 // pred_check
    _
  $region27: #{net_forward.1} parent=0 // pred_check_branch
    %4916 = sbr.rel (0) target = $region29
  $region28: #{net_forward.1} parent=0 // pred_region
    _
  $region29: #{net_forward.1} parent=0 // pred_fallthru
    _
  // Predicated region
  $region30: #{net_forward.1} parent=0 // pred_check
    _
  $region31: #{net_forward.1} parent=0 // pred_check_branch
    %4918 = sbr.rel (0) target = $region33
  $region32: #{net_forward.1} parent=0 // pred_region
    _
  $region33: #{net_forward.1} parent=0 // pred_fallthru
    _

</llo_original>
